<compile_context>
chip_gen: v5e
topology: v5e:2x2
jax: 0.10.0
libtpu: 0.0.40
codegen_flags: <defaults>
</compile_context>

<pallas_src>
import numpy as np
import jax
import jax.numpy as jnp
from jax import lax
from jax.experimental import pallas as pl
from jax.experimental.pallas import tpu as pltpu


# --------------------------------------------------------------------------
# Fused Pallas kernel
# --------------------------------------------------------------------------
def _shuffle_unit_kernel(x_ref, a_ref, m_oo_ref, m_xx_ref,
                         p_xx1_ref, b_xx1_ref,
                         p_oo_ref, p_xx2_ref, b_fin_ref,
                         o_ref):
    """ShuffleUnitV2S2 on a (b_blk, H, C*W) lane-packed input slab.

    x_ref:     (b_blk, H, C*W)        VMEM  lane-packed input (channel-major lanes)
    a_ref:     (3*Ho, H)              VMEM  constant 0/1 row-selection [A_0; A_1; A_2]
    m_*_ref:   (3, C*W, C*Wo)         VMEM  block-diag dw taps * col-select * dw-BN scale
    p_xx1_ref: (C*W, C*W)             VMEM  kron(w_1x1 * bn_scale, I_W)
    b_xx1_ref: (1, C*W)               VMEM  bn bias, lane-repeated per channel block
    p_oo_ref:  (C*Wo, Cout*Wo)        VMEM  final oo 1x1 (shuffled into even channels)
    p_xx2_ref: (C*Wo, Cout*Wo)        VMEM  final xx 1x1 (shuffled into odd channels)
    b_fin_ref: (1, Cout*Wo)           VMEM  combined final bias (incl. folded dw-BN bias)
    o_ref:     (b_blk, Ho, Cout*Wo)   VMEM  lane-dense, channel-shuffled output slab
    """
    Ho = o_ref.shape[1]
    hi = lax.Precision.HIGHEST

    # Constants loaded once, reused by every image in the batch block.
    a = a_ref[...]                                   # (3*Ho, H)
    m_oo = (m_oo_ref[0], m_oo_ref[1], m_oo_ref[2])   # leading-dim index: free views
    m_xx = (m_xx_ref[0], m_xx_ref[1], m_xx_ref[2])
    p_xx1 = p_xx1_ref[...]
    b_xx1 = b_xx1_ref[...]
    p_oo = p_oo_ref[...]
    p_xx2 = p_xx2_ref[...]
    b_fin = b_fin_ref[...]

    def dot32(u, v):
        return jnp.dot(u, v, precision=hi, preferred_element_type=jnp.float32)

    def dwconv_s2(slab, m):
        """3x3 depthwise conv, stride 2, pad 1, dw-BN scale folded (4 MXU issues)."""
        y = dot32(a, slab)                           # (3*Ho, C*W) row taps
        # Ho is a multiple of 8 here, so these f32 row slices are sublane-tile
        # aligned free views.
        acc = dot32(y[0:Ho], m[0])
        acc = acc + dot32(y[Ho:2 * Ho], m[1])
        acc = acc + dot32(y[2 * Ho:3 * Ho], m[2])
        return acc                                   # (Ho, C*Wo)

    # Static unroll over the batch block: the LLO scheduler interleaves the images'
    # tiny matmuls to hide MXU/MRF latency (single grid step on single-TC chips).
    for b in range(x_ref.shape[0]):
        x = x_ref[b]                                              # (H, C*W)

        # oo branch: dw3x3(s2) + BN
        oo = dwconv_s2(x, m_oo)                                   # (Ho, C*Wo)

        # xx branch: 1x1 + BN + ReLU -> dw3x3(s2) + BN
        t = jnp.maximum(dot32(x, p_xx1) + b_xx1, 0.0)             # (H, C*W)
        xx = dwconv_s2(t, m_xx)                                   # (Ho, C*Wo)

        # Final 1x1 + BN + ReLU for both branches, with channel_shuffle(groups=2)
        # folded into disjoint output-column supports (even <- oo, odd <- xx).
        out = dot32(oo, p_oo) + dot32(xx, p_xx2) + b_fin          # (Ho, Cout*Wo)
        o_ref[b] = jnp.maximum(out, 0.0)


# --------------------------------------------------------------------------
# Constant selection matrices for the stride-2 depthwise conv
# --------------------------------------------------------------------------
def _row_select_matrix(H, Ho):
    """A[di*Ho + i, r] = 1 iff r == 2*i + di - 1 (zero-padded boundary)."""
    A = np.zeros((3, Ho, H), np.float32)
    for di in range(3):
        for i in range(Ho):
            r = 2 * i + di - 1
            if 0 <= r < H:
                A[di, i, r] = 1.0
    return A.reshape(3 * Ho, H)


def _col_select_tensor(W, Wo):
    """S[dj, s, j] = 1 iff s == 2*j + dj - 1 (zero-padded boundary)."""
    S = np.zeros((3, W, Wo), np.float32)
    for dj in range(3):
        for j in range(Wo):
            s = 2 * j + dj - 1
            if 0 <= s < W:
                S[dj, s, j] = 1.0
    return S


def _tensorcores_per_chip():
    """Best-effort TC count per chip: 2 on v7x, 1 on v5e/v6e (and on any failure)."""
    try:
        kind = jax.devices()[0].device_kind.lower()
        if "7x" in kind or "v7" in kind:
            return 2
    except Exception:
        pass
    return 1


# --------------------------------------------------------------------------
# Forward pass (single fused pallas_call)
# --------------------------------------------------------------------------
def shuffle_unit_v2_s2(x_nchw, params):
    """ShuffleUnitV2S2.forward: (B, C_in, H, W) -> (B, out_channels, H//2, W//2), NCHW."""
    B, C, H, W = x_nchw.shape
    assert H % 2 == 0 and W % 2 == 0
    Ho, Wo = H // 2, W // 2
    half = params["oo_pw_w"].shape[1]
    Cout = 2 * half
    CW, CWo, CoutWo = C * W, C * Wo, Cout * Wo
    f32 = jnp.float32

    # Constant selection matrices (host-side numpy).
    a_mat = jnp.asarray(_row_select_matrix(H, Ho))               # (3*Ho, H)
    colsel = jnp.asarray(_col_select_tensor(W, Wo))              # (3, W, Wo)
    eye_c = jnp.eye(C, dtype=f32)
    eye_w = jnp.eye(W, dtype=f32)
    eye_wo = jnp.eye(Wo, dtype=f32)

    # ---- dw conv + BN scale -> block-diagonal tap matrices, lane-dense layout ----
    def fold_dw(w_dw, sb):
        s, _ = sb
        # m[c, di, s_, j] = sum_dj w_dw[di, dj, c] * colsel[dj, s_, j] * bn_scale[c]
        m = jnp.einsum("ijc,jsw->cisw", w_dw, colsel) * s[:, None, None, None]
        # Embed per-channel blocks on the diagonal: (3, C*W, C*Wo)
        m_blk = jnp.einsum("cisw,cd->icsdw", m, eye_c)
        return m_blk.reshape(3, CW, CWo)

    m_oo = fold_dw(params["oo_dw_w"], params["oo_dw_sb"])
    m_xx = fold_dw(params["xx_dw_w"], params["xx_dw_sb"])

    # ---- xx first 1x1 + BN (ReLU in kernel), as kron(W*scale, I_W) on the slab ----
    s1, beta1 = params["xx_pw1_sb"]
    w1 = params["xx_pw1_w"] * s1[None, :]                        # (C, C)
    p_xx1 = jnp.kron(w1, eye_w)                                  # (C*W, C*W)
    b_xx1 = jnp.repeat(beta1, W)[None, :]                        # (1, C*W)

    # ---- final 1x1s + BN, dw-BN bias folded in, channel shuffle folded into columns ----
    s_oo, beta_oo = params["oo_pw_sb"]
    w_oo = params["oo_pw_w"] * s_oo[None, :]                     # (C, half)
    b_oo = beta_oo + jnp.dot(params["oo_dw_sb"][1], w_oo)        # (half,)
    s_x2, beta_x2 = params["xx_pw2_sb"]
    w_x2 = params["xx_pw2_w"] * s_x2[None, :]                    # (C, half)
    b_x2 = beta_x2 + jnp.dot(params["xx_dw_sb"][1], w_x2)        # (half,)

    # channel_shuffle(groups=2): shuffled channel 2k <- oo_k, 2k+1 <- xx_k
    w_oo_wide = jnp.zeros((C, Cout), f32).at[:, 0::2].set(w_oo)
    w_x2_wide = jnp.zeros((C, Cout), f32).at[:, 1::2].set(w_x2)
    p_fin_oo = jnp.kron(w_oo_wide, eye_wo)                       # (C*Wo, Cout*Wo)
    p_fin_xx = jnp.kron(w_x2_wide, eye_wo)                       # (C*Wo, Cout*Wo)
    b_fin = jnp.zeros((Cout,), f32).at[0::2].set(b_oo).at[1::2].set(b_x2)
    b_fin = jnp.repeat(b_fin, Wo)[None, :]                       # (1, Cout*Wo)

    # ---- lane-packed input slab: NCHW -> (B, H, C*W)  (tiny wrapper-side transpose) ----
    x_slab = jnp.transpose(x_nchw, (0, 2, 1, 3)).reshape(B, H, CW)

    # ---- grid: whole batch in one step on single-TC chips; split across TCs on v7x ----
    n_tc = _tensorcores_per_chip()
    if n_tc > 1 and B > 1 and B % n_tc == 0:
        b_blk, dim_sem = 1, ("parallel",)
    else:
        b_blk, dim_sem = B, ("arbitrary",)

    # Advisory cost estimate (MXU work actually issued; all Python ints).
    flops_per_b = (2 * (3 * Ho) * H * CW * 2          # two row-select dots
                   + 2 * 3 * Ho * CW * CWo * 2        # six block-diag tap dots
                   + H * CW * CW * 2                  # xx 1x1 #1 (kron form)
                   + 2 * Ho * CWo * CoutWo * 2)       # final combined 1x1s
    bytes_accessed = 4 * (B * H * CW + B * Ho * CoutWo
                          + a_mat.size + m_oo.size + m_xx.size + p_xx1.size
                          + b_xx1.size + p_fin_oo.size + p_fin_xx.size + b_fin.size)
    cost = pl.CostEstimate(flops=B * flops_per_b, transcendentals=0,
                           bytes_accessed=bytes_accessed)

    kernel_out = pl.pallas_call(
        _shuffle_unit_kernel,
        out_shape=jax.ShapeDtypeStruct((B, Ho, CoutWo), jnp.float32),
        grid=(B // b_blk,),
        in_specs=[
            pl.BlockSpec((b_blk, H, CW), lambda b: (b, 0, 0)),    # x slab
            pl.BlockSpec((3 * Ho, H), lambda b: (0, 0)),          # A        (resident)
            pl.BlockSpec((3, CW, CWo), lambda b: (0, 0, 0)),      # M_oo     (resident)
            pl.BlockSpec((3, CW, CWo), lambda b: (0, 0, 0)),      # M_xx     (resident)
            pl.BlockSpec((CW, CW), lambda b: (0, 0)),             # P_xx1    (resident)
            pl.BlockSpec((1, CW), lambda b: (0, 0)),              # b_xx1    (resident)
            pl.BlockSpec((CWo, CoutWo), lambda b: (0, 0)),        # P_fin_oo (resident)
            pl.BlockSpec((CWo, CoutWo), lambda b: (0, 0)),        # P_fin_xx (resident)
            pl.BlockSpec((1, CoutWo), lambda b: (0, 0)),          # b_fin    (resident)
        ],
        out_specs=pl.BlockSpec((b_blk, Ho, CoutWo), lambda b: (b, 0, 0)),
        compiler_params=pltpu.CompilerParams(
            dimension_semantics=dim_sem,
            vmem_limit_bytes=4 * 1024 * 1024),
        cost_estimate=cost,
    )(x_slab, a_mat, m_oo, m_xx, p_xx1, b_xx1, p_fin_oo, p_fin_xx, b_fin)

    # Lane-packed (B, Ho, Cout*Wo) -> NCHW: tiny wrapper-side layout glue.
    return kernel_out.reshape(B, Ho, Cout, Wo).transpose(0, 2, 1, 3)


# --------------------------------------------------------------------------
# Parameters (deterministic, synthetic) + BN folding
# --------------------------------------------------------------------------
def bn_fold(gamma, beta, mean, var, eps=1e-5):
    scale = gamma / jnp.sqrt(var + eps)
    bias = beta - mean * scale
    return scale, bias


def init_params(key, inp, oup_half):
    keys = jax.random.split(key, 10)

    def conv_w(k, cin, cout):
        return 0.3 * jax.random.normal(k, (cin, cout), jnp.float32)

    def dw_w(k, c):
        return 0.3 * jax.random.normal(k, (3, 3, c), jnp.float32)

    def bn(k, c):
        k1, k2, k3, k4 = jax.random.split(k, 4)
        gamma = 1.0 + 0.1 * jax.random.normal(k1, (c,), jnp.float32)
        beta = 0.1 * jax.random.normal(k2, (c,), jnp.float32)
        mean = 0.1 * jax.random.normal(k3, (c,), jnp.float32)
        var = jnp.abs(1.0 + 0.1 * jax.random.normal(k4, (c,), jnp.float32))
        return bn_fold(gamma, beta, mean, var)

    return {
        # xx branch: conv1x1(inp->inp)+BN+ReLU -> dw3x3(s2)+BN -> conv1x1(inp->oup)+BN+ReLU
        "xx_pw1_w": conv_w(keys[0], inp, inp),
        "xx_pw1_sb": bn(keys[1], inp),
        "xx_dw_w": dw_w(keys[2], inp),
        "xx_dw_sb": bn(keys[3], inp),
        "xx_pw2_w": conv_w(keys[4], inp, oup_half),
        "xx_pw2_sb": bn(keys[5], oup_half),
        # oo branch: dw3x3(s2)+BN -> conv1x1(inp->oup)+BN+ReLU
        "oo_dw_w": dw_w(keys[6], inp),
        "oo_dw_sb": bn(keys[7], inp),
        "oo_pw_w": conv_w(keys[8], inp, oup_half),
        "oo_pw_sb": bn(keys[9], oup_half),
    }


# --------------------------------------------------------------------------
# Pure-JAX (XLA conv) reference mirroring the PyTorch module
# --------------------------------------------------------------------------
def ref_forward(x_nchw, params):
    def pw_ref(t, w, sb, relu):
        scale, bias = sb
        w_oihw = jnp.transpose(w, (1, 0))[:, :, None, None]
        y = lax.conv_general_dilated(t, w_oihw, (1, 1), "VALID",
                                     dimension_numbers=("NCHW", "OIHW", "NCHW"),
                                     precision=lax.Precision.HIGHEST)
        y = y * scale[None, :, None, None] + bias[None, :, None, None]
        return jnp.maximum(y, 0.0) if relu else y

    def dw_ref(t, w, sb):
        scale, bias = sb
        C = t.shape[1]
        w_oihw = jnp.transpose(w, (2, 0, 1))[:, None, :, :]  # (C, 1, 3, 3)
        y = lax.conv_general_dilated(t, w_oihw, (2, 2), ((1, 1), (1, 1)),
                                     dimension_numbers=("NCHW", "OIHW", "NCHW"),
                                     feature_group_count=C,
                                     precision=lax.Precision.HIGHEST)
        return y * scale[None, :, None, None] + bias[None, :, None, None]

    out1 = pw_ref(dw_ref(x_nchw, params["oo_dw_w"], params["oo_dw_sb"]),
                  params["oo_pw_w"], params["oo_pw_sb"], True)
    t = pw_ref(x_nchw, params["xx_pw1_w"], params["xx_pw1_sb"], True)
    t = dw_ref(t, params["xx_dw_w"], params["xx_dw_sb"])
    out2 = pw_ref(t, params["xx_pw2_w"], params["xx_pw2_sb"], True)

    out = jnp.concatenate([out1, out2], axis=1)
    B, Cc, Hh, Ww = out.shape
    out = out.reshape(B, 2, Cc // 2, Hh, Ww).transpose(0, 2, 1, 3, 4).reshape(B, Cc, Hh, Ww)
    return out


# --------------------------------------------------------------------------
if __name__ == "__main__":
    key = jax.random.PRNGKey(0)
    k_x, k_p = jax.random.split(key)

    B, C_in, H, W = 2, 4, 16, 16
    out_channels = 8
    oup_half = out_channels // 2

    x = jax.random.normal(k_x, (B, C_in, H, W), jnp.float32)  # NCHW, like PyTorch
    params = init_params(k_p, C_in, oup_half)

    out = jax.jit(shuffle_unit_v2_s2)(x, params)
    out = jax.block_until_ready(out)

    assert out.shape == (B, out_channels, H // 2, W // 2), out.shape
    ref = ref_forward(x, params)
    # All in-kernel dots use f32 HIGHEST precision (MXU is essentially idle at these
    # shapes), so the comparison against the XLA HIGHEST reference is tight.
    np.testing.assert_allclose(np.asarray(out), np.asarray(ref), rtol=1e-4, atol=1e-4)

    print("KERNEL_OK")
</pallas_src>

<mosaic_0001>
module attributes {stable_mosaic.version = 11 : i64} {
  func.func @_shuffle_unit_kernel(%arg0: i32, %arg1: memref<2x16x64xf32, #tpu.memory_space<vmem>>, %arg2: memref<24x16xf32, #tpu.memory_space<vmem>>, %arg3: memref<3x64x32xf32, #tpu.memory_space<vmem>>, %arg4: memref<3x64x32xf32, #tpu.memory_space<vmem>>, %arg5: memref<64x64xf32, #tpu.memory_space<vmem>>, %arg6: memref<1x64xf32, #tpu.memory_space<vmem>>, %arg7: memref<32x64xf32, #tpu.memory_space<vmem>>, %arg8: memref<32x64xf32, #tpu.memory_space<vmem>>, %arg9: memref<1x64xf32, #tpu.memory_space<vmem>>, %arg10: memref<2x8x64xf32, #tpu.memory_space<vmem>>) attributes {dimension_semantics = [#tpu.dimension_semantics<arbitrary>], iteration_bounds = array<i64: 1>, scalar_prefetch = 0 : i64, scratch_operands = 0 : i64, tpu.core_type = #tpu.core_type<tc>, window_params = [{transform_indices = @transform_0, window_bounds = array<i64: 2, 16, 64>}, {pipeline_mode = #tpu.pipeline_mode<synchronous>, transform_indices = @transform_1, window_bounds = array<i64: 24, 16>}, {pipeline_mode = #tpu.pipeline_mode<synchronous>, transform_indices = @transform_2, window_bounds = array<i64: 3, 64, 32>}, {pipeline_mode = #tpu.pipeline_mode<synchronous>, transform_indices = @transform_3, window_bounds = array<i64: 3, 64, 32>}, {pipeline_mode = #tpu.pipeline_mode<synchronous>, transform_indices = @transform_4, window_bounds = array<i64: 64, 64>}, {pipeline_mode = #tpu.pipeline_mode<synchronous>, transform_indices = @transform_5, window_bounds = array<i64: 1, 64>}, {pipeline_mode = #tpu.pipeline_mode<synchronous>, transform_indices = @transform_6, window_bounds = array<i64: 32, 64>}, {pipeline_mode = #tpu.pipeline_mode<synchronous>, transform_indices = @transform_7, window_bounds = array<i64: 32, 64>}, {pipeline_mode = #tpu.pipeline_mode<synchronous>, transform_indices = @transform_8, window_bounds = array<i64: 1, 64>}, {transform_indices = @transform_9, window_bounds = array<i64: 2, 8, 64>}]} {
    %c0 = arith.constant 0 : index
    %c0_0 = arith.constant 0 : index
    %0 = vector.load %arg2[%c0, %c0_0] : memref<24x16xf32, #tpu.memory_space<vmem>>, vector<24x16xf32>
    %c0_1 = arith.constant 0 : index
    %c0_2 = arith.constant 0 : index
    %c0_3 = arith.constant 0 : index
    %1 = vector.load %arg3[%c0_1, %c0_2, %c0_3] : memref<3x64x32xf32, #tpu.memory_space<vmem>>, vector<1x64x32xf32>
    %2 = vector.shape_cast %1 : vector<1x64x32xf32> to vector<64x32xf32>
    %c1 = arith.constant 1 : index
    %c0_4 = arith.constant 0 : index
    %c0_5 = arith.constant 0 : index
    %3 = vector.load %arg3[%c1, %c0_4, %c0_5] : memref<3x64x32xf32, #tpu.memory_space<vmem>>, vector<1x64x32xf32>
    %4 = vector.shape_cast %3 : vector<1x64x32xf32> to vector<64x32xf32>
    %c2 = arith.constant 2 : index
    %c0_6 = arith.constant 0 : index
    %c0_7 = arith.constant 0 : index
    %5 = vector.load %arg3[%c2, %c0_6, %c0_7] : memref<3x64x32xf32, #tpu.memory_space<vmem>>, vector<1x64x32xf32>
    %6 = vector.shape_cast %5 : vector<1x64x32xf32> to vector<64x32xf32>
    %c0_8 = arith.constant 0 : index
    %c0_9 = arith.constant 0 : index
    %c0_10 = arith.constant 0 : index
    %7 = vector.load %arg4[%c0_8, %c0_9, %c0_10] : memref<3x64x32xf32, #tpu.memory_space<vmem>>, vector<1x64x32xf32>
    %8 = vector.shape_cast %7 : vector<1x64x32xf32> to vector<64x32xf32>
    %c1_11 = arith.constant 1 : index
    %c0_12 = arith.constant 0 : index
    %c0_13 = arith.constant 0 : index
    %9 = vector.load %arg4[%c1_11, %c0_12, %c0_13] : memref<3x64x32xf32, #tpu.memory_space<vmem>>, vector<1x64x32xf32>
    %10 = vector.shape_cast %9 : vector<1x64x32xf32> to vector<64x32xf32>
    %c2_14 = arith.constant 2 : index
    %c0_15 = arith.constant 0 : index
    %c0_16 = arith.constant 0 : index
    %11 = vector.load %arg4[%c2_14, %c0_15, %c0_16] : memref<3x64x32xf32, #tpu.memory_space<vmem>>, vector<1x64x32xf32>
    %12 = vector.shape_cast %11 : vector<1x64x32xf32> to vector<64x32xf32>
    %c0_17 = arith.constant 0 : index
    %c0_18 = arith.constant 0 : index
    %13 = vector.load %arg5[%c0_17, %c0_18] : memref<64x64xf32, #tpu.memory_space<vmem>>, vector<64x64xf32>
    %c0_19 = arith.constant 0 : index
    %c0_20 = arith.constant 0 : index
    %14 = vector.load %arg6[%c0_19, %c0_20] : memref<1x64xf32, #tpu.memory_space<vmem>>, vector<1x64xf32>
    %c0_21 = arith.constant 0 : index
    %c0_22 = arith.constant 0 : index
    %15 = vector.load %arg7[%c0_21, %c0_22] : memref<32x64xf32, #tpu.memory_space<vmem>>, vector<32x64xf32>
    %c0_23 = arith.constant 0 : index
    %c0_24 = arith.constant 0 : index
    %16 = vector.load %arg8[%c0_23, %c0_24] : memref<32x64xf32, #tpu.memory_space<vmem>>, vector<32x64xf32>
    %c0_25 = arith.constant 0 : index
    %c0_26 = arith.constant 0 : index
    %17 = vector.load %arg9[%c0_25, %c0_26] : memref<1x64xf32, #tpu.memory_space<vmem>>, vector<1x64xf32>
    %c0_27 = arith.constant 0 : index
    %c0_28 = arith.constant 0 : index
    %c0_29 = arith.constant 0 : index
    %18 = vector.load %arg1[%c0_27, %c0_28, %c0_29] : memref<2x16x64xf32, #tpu.memory_space<vmem>>, vector<1x16x64xf32>
    %19 = vector.shape_cast %18 : vector<1x16x64xf32> to vector<16x64xf32>
    %cst = arith.constant dense<0.000000e+00> : vector<24x64xf32>
    %20 = tpu.matmul %0, %19, %cst {dimension_numbers = #tpu.dot_dimension_numbers<[1], [0], [0], [1], [0, 0, 1, 1], [], []>, precision = #tpu.contract_precision<fp32>} : vector<24x16xf32>, vector<16x64xf32>, vector<24x64xf32> -> vector<24x64xf32>
    %21 = vector.extract_strided_slice %20 {offsets = [0, 0], sizes = [8, 64], strides = [1, 1]} : vector<24x64xf32> to vector<8x64xf32>
    %cst_30 = arith.constant dense<0.000000e+00> : vector<8x32xf32>
    %22 = tpu.matmul %21, %2, %cst_30 {dimension_numbers = #tpu.dot_dimension_numbers<[1], [0], [0], [1], [0, 0, 1, 1], [], []>, precision = #tpu.contract_precision<fp32>} : vector<8x64xf32>, vector<64x32xf32>, vector<8x32xf32> -> vector<8x32xf32>
    %23 = vector.extract_strided_slice %20 {offsets = [8, 0], sizes = [8, 64], strides = [1, 1]} : vector<24x64xf32> to vector<8x64xf32>
    %cst_31 = arith.constant dense<0.000000e+00> : vector<8x32xf32>
    %24 = tpu.matmul %23, %4, %cst_31 {dimension_numbers = #tpu.dot_dimension_numbers<[1], [0], [0], [1], [0, 0, 1, 1], [], []>, precision = #tpu.contract_precision<fp32>} : vector<8x64xf32>, vector<64x32xf32>, vector<8x32xf32> -> vector<8x32xf32>
    %25 = arith.addf %22, %24 : vector<8x32xf32>
    %26 = vector.extract_strided_slice %20 {offsets = [16, 0], sizes = [8, 64], strides = [1, 1]} : vector<24x64xf32> to vector<8x64xf32>
    %cst_32 = arith.constant dense<0.000000e+00> : vector<8x32xf32>
    %27 = tpu.matmul %26, %6, %cst_32 {dimension_numbers = #tpu.dot_dimension_numbers<[1], [0], [0], [1], [0, 0, 1, 1], [], []>, precision = #tpu.contract_precision<fp32>} : vector<8x64xf32>, vector<64x32xf32>, vector<8x32xf32> -> vector<8x32xf32>
    %28 = arith.addf %25, %27 : vector<8x32xf32>
    %cst_33 = arith.constant dense<0.000000e+00> : vector<16x64xf32>
    %29 = tpu.matmul %19, %13, %cst_33 {dimension_numbers = #tpu.dot_dimension_numbers<[1], [0], [0], [1], [0, 0, 1, 1], [], []>, precision = #tpu.contract_precision<fp32>} : vector<16x64xf32>, vector<64x64xf32>, vector<16x64xf32> -> vector<16x64xf32>
    %30 = vector.broadcast %14 : vector<1x64xf32> to vector<16x64xf32>
    %31 = arith.addf %29, %30 : vector<16x64xf32>
    %cst_34 = arith.constant 0.000000e+00 : f32
    %32 = vector.broadcast %cst_34 : f32 to vector<16x64xf32>
    %33 = arith.maximumf %31, %32 : vector<16x64xf32>
    %cst_35 = arith.constant dense<0.000000e+00> : vector<24x64xf32>
    %34 = tpu.matmul %0, %33, %cst_35 {dimension_numbers = #tpu.dot_dimension_numbers<[1], [0], [0], [1], [0, 0, 1, 1], [], []>, precision = #tpu.contract_precision<fp32>} : vector<24x16xf32>, vector<16x64xf32>, vector<24x64xf32> -> vector<24x64xf32>
    %35 = vector.extract_strided_slice %34 {offsets = [0, 0], sizes = [8, 64], strides = [1, 1]} : vector<24x64xf32> to vector<8x64xf32>
    %cst_36 = arith.constant dense<0.000000e+00> : vector<8x32xf32>
    %36 = tpu.matmul %35, %8, %cst_36 {dimension_numbers = #tpu.dot_dimension_numbers<[1], [0], [0], [1], [0, 0, 1, 1], [], []>, precision = #tpu.contract_precision<fp32>} : vector<8x64xf32>, vector<64x32xf32>, vector<8x32xf32> -> vector<8x32xf32>
    %37 = vector.extract_strided_slice %34 {offsets = [8, 0], sizes = [8, 64], strides = [1, 1]} : vector<24x64xf32> to vector<8x64xf32>
    %cst_37 = arith.constant dense<0.000000e+00> : vector<8x32xf32>
    %38 = tpu.matmul %37, %10, %cst_37 {dimension_numbers = #tpu.dot_dimension_numbers<[1], [0], [0], [1], [0, 0, 1, 1], [], []>, precision = #tpu.contract_precision<fp32>} : vector<8x64xf32>, vector<64x32xf32>, vector<8x32xf32> -> vector<8x32xf32>
    %39 = arith.addf %36, %38 : vector<8x32xf32>
    %40 = vector.extract_strided_slice %34 {offsets = [16, 0], sizes = [8, 64], strides = [1, 1]} : vector<24x64xf32> to vector<8x64xf32>
    %cst_38 = arith.constant dense<0.000000e+00> : vector<8x32xf32>
    %41 = tpu.matmul %40, %12, %cst_38 {dimension_numbers = #tpu.dot_dimension_numbers<[1], [0], [0], [1], [0, 0, 1, 1], [], []>, precision = #tpu.contract_precision<fp32>} : vector<8x64xf32>, vector<64x32xf32>, vector<8x32xf32> -> vector<8x32xf32>
    %42 = arith.addf %39, %41 : vector<8x32xf32>
    %cst_39 = arith.constant dense<0.000000e+00> : vector<8x64xf32>
    %43 = tpu.matmul %28, %15, %cst_39 {dimension_numbers = #tpu.dot_dimension_numbers<[1], [0], [0], [1], [0, 0, 1, 1], [], []>, precision = #tpu.contract_precision<fp32>} : vector<8x32xf32>, vector<32x64xf32>, vector<8x64xf32> -> vector<8x64xf32>
    %cst_40 = arith.constant dense<0.000000e+00> : vector<8x64xf32>
    %44 = tpu.matmul %42, %16, %cst_40 {dimension_numbers = #tpu.dot_dimension_numbers<[1], [0], [0], [1], [0, 0, 1, 1], [], []>, precision = #tpu.contract_precision<fp32>} : vector<8x32xf32>, vector<32x64xf32>, vector<8x64xf32> -> vector<8x64xf32>
    %45 = arith.addf %43, %44 : vector<8x64xf32>
    %46 = vector.broadcast %17 : vector<1x64xf32> to vector<8x64xf32>
    %47 = arith.addf %45, %46 : vector<8x64xf32>
    %cst_41 = arith.constant 0.000000e+00 : f32
    %48 = vector.broadcast %cst_41 : f32 to vector<8x64xf32>
    %49 = arith.maximumf %47, %48 : vector<8x64xf32>
    %c0_42 = arith.constant 0 : index
    %c0_43 = arith.constant 0 : index
    %c0_44 = arith.constant 0 : index
    %50 = vector.load %arg10[%c0_42, %c0_43, %c0_44] : memref<2x8x64xf32, #tpu.memory_space<vmem>>, vector<1x8x64xf32>
    %51 = vector.shape_cast %50 : vector<1x8x64xf32> to vector<8x64xf32>
    %52 = vector.shape_cast %49 : vector<8x64xf32> to vector<1x8x64xf32>
    tpu.vector_store %arg10[%c0_42, %c0_43, %c0_44], %52 {strides = array<i32>} : memref<2x8x64xf32, #tpu.memory_space<vmem>>, vector<1x8x64xf32>,
    %c1_45 = arith.constant 1 : index
    %c0_46 = arith.constant 0 : index
    %c0_47 = arith.constant 0 : index
    %53 = vector.load %arg1[%c1_45, %c0_46, %c0_47] : memref<2x16x64xf32, #tpu.memory_space<vmem>>, vector<1x16x64xf32>
    %54 = vector.shape_cast %53 : vector<1x16x64xf32> to vector<16x64xf32>
    %cst_48 = arith.constant dense<0.000000e+00> : vector<24x64xf32>
    %55 = tpu.matmul %0, %54, %cst_48 {dimension_numbers = #tpu.dot_dimension_numbers<[1], [0], [0], [1], [0, 0, 1, 1], [], []>, precision = #tpu.contract_precision<fp32>} : vector<24x16xf32>, vector<16x64xf32>, vector<24x64xf32> -> vector<24x64xf32>
    %56 = vector.extract_strided_slice %55 {offsets = [0, 0], sizes = [8, 64], strides = [1, 1]} : vector<24x64xf32> to vector<8x64xf32>
    %cst_49 = arith.constant dense<0.000000e+00> : vector<8x32xf32>
    %57 = tpu.matmul %56, %2, %cst_49 {dimension_numbers = #tpu.dot_dimension_numbers<[1], [0], [0], [1], [0, 0, 1, 1], [], []>, precision = #tpu.contract_precision<fp32>} : vector<8x64xf32>, vector<64x32xf32>, vector<8x32xf32> -> vector<8x32xf32>
    %58 = vector.extract_strided_slice %55 {offsets = [8, 0], sizes = [8, 64], strides = [1, 1]} : vector<24x64xf32> to vector<8x64xf32>
    %cst_50 = arith.constant dense<0.000000e+00> : vector<8x32xf32>
    %59 = tpu.matmul %58, %4, %cst_50 {dimension_numbers = #tpu.dot_dimension_numbers<[1], [0], [0], [1], [0, 0, 1, 1], [], []>, precision = #tpu.contract_precision<fp32>} : vector<8x64xf32>, vector<64x32xf32>, vector<8x32xf32> -> vector<8x32xf32>
    %60 = arith.addf %57, %59 : vector<8x32xf32>
    %61 = vector.extract_strided_slice %55 {offsets = [16, 0], sizes = [8, 64], strides = [1, 1]} : vector<24x64xf32> to vector<8x64xf32>
    %cst_51 = arith.constant dense<0.000000e+00> : vector<8x32xf32>
    %62 = tpu.matmul %61, %6, %cst_51 {dimension_numbers = #tpu.dot_dimension_numbers<[1], [0], [0], [1], [0, 0, 1, 1], [], []>, precision = #tpu.contract_precision<fp32>} : vector<8x64xf32>, vector<64x32xf32>, vector<8x32xf32> -> vector<8x32xf32>
    %63 = arith.addf %60, %62 : vector<8x32xf32>
    %cst_52 = arith.constant dense<0.000000e+00> : vector<16x64xf32>
    %64 = tpu.matmul %54, %13, %cst_52 {dimension_numbers = #tpu.dot_dimension_numbers<[1], [0], [0], [1], [0, 0, 1, 1], [], []>, precision = #tpu.contract_precision<fp32>} : vector<16x64xf32>, vector<64x64xf32>, vector<16x64xf32> -> vector<16x64xf32>
    %65 = vector.broadcast %14 : vector<1x64xf32> to vector<16x64xf32>
    %66 = arith.addf %64, %65 : vector<16x64xf32>
    %cst_53 = arith.constant 0.000000e+00 : f32
    %67 = vector.broadcast %cst_53 : f32 to vector<16x64xf32>
    %68 = arith.maximumf %66, %67 : vector<16x64xf32>
    %cst_54 = arith.constant dense<0.000000e+00> : vector<24x64xf32>
    %69 = tpu.matmul %0, %68, %cst_54 {dimension_numbers = #tpu.dot_dimension_numbers<[1], [0], [0], [1], [0, 0, 1, 1], [], []>, precision = #tpu.contract_precision<fp32>} : vector<24x16xf32>, vector<16x64xf32>, vector<24x64xf32> -> vector<24x64xf32>
    %70 = vector.extract_strided_slice %69 {offsets = [0, 0], sizes = [8, 64], strides = [1, 1]} : vector<24x64xf32> to vector<8x64xf32>
    %cst_55 = arith.constant dense<0.000000e+00> : vector<8x32xf32>
    %71 = tpu.matmul %70, %8, %cst_55 {dimension_numbers = #tpu.dot_dimension_numbers<[1], [0], [0], [1], [0, 0, 1, 1], [], []>, precision = #tpu.contract_precision<fp32>} : vector<8x64xf32>, vector<64x32xf32>, vector<8x32xf32> -> vector<8x32xf32>
    %72 = vector.extract_strided_slice %69 {offsets = [8, 0], sizes = [8, 64], strides = [1, 1]} : vector<24x64xf32> to vector<8x64xf32>
    %cst_56 = arith.constant dense<0.000000e+00> : vector<8x32xf32>
    %73 = tpu.matmul %72, %10, %cst_56 {dimension_numbers = #tpu.dot_dimension_numbers<[1], [0], [0], [1], [0, 0, 1, 1], [], []>, precision = #tpu.contract_precision<fp32>} : vector<8x64xf32>, vector<64x32xf32>, vector<8x32xf32> -> vector<8x32xf32>
    %74 = arith.addf %71, %73 : vector<8x32xf32>
    %75 = vector.extract_strided_slice %69 {offsets = [16, 0], sizes = [8, 64], strides = [1, 1]} : vector<24x64xf32> to vector<8x64xf32>
    %cst_57 = arith.constant dense<0.000000e+00> : vector<8x32xf32>
    %76 = tpu.matmul %75, %12, %cst_57 {dimension_numbers = #tpu.dot_dimension_numbers<[1], [0], [0], [1], [0, 0, 1, 1], [], []>, precision = #tpu.contract_precision<fp32>} : vector<8x64xf32>, vector<64x32xf32>, vector<8x32xf32> -> vector<8x32xf32>
    %77 = arith.addf %74, %76 : vector<8x32xf32>
    %cst_58 = arith.constant dense<0.000000e+00> : vector<8x64xf32>
    %78 = tpu.matmul %63, %15, %cst_58 {dimension_numbers = #tpu.dot_dimension_numbers<[1], [0], [0], [1], [0, 0, 1, 1], [], []>, precision = #tpu.contract_precision<fp32>} : vector<8x32xf32>, vector<32x64xf32>, vector<8x64xf32> -> vector<8x64xf32>
    %cst_59 = arith.constant dense<0.000000e+00> : vector<8x64xf32>
    %79 = tpu.matmul %77, %16, %cst_59 {dimension_numbers = #tpu.dot_dimension_numbers<[1], [0], [0], [1], [0, 0, 1, 1], [], []>, precision = #tpu.contract_precision<fp32>} : vector<8x32xf32>, vector<32x64xf32>, vector<8x64xf32> -> vector<8x64xf32>
    %80 = arith.addf %78, %79 : vector<8x64xf32>
    %81 = vector.broadcast %17 : vector<1x64xf32> to vector<8x64xf32>
    %82 = arith.addf %80, %81 : vector<8x64xf32>
    %cst_60 = arith.constant 0.000000e+00 : f32
    %83 = vector.broadcast %cst_60 : f32 to vector<8x64xf32>
    %84 = arith.maximumf %82, %83 : vector<8x64xf32>
    %c1_61 = arith.constant 1 : index
    %c0_62 = arith.constant 0 : index
    %c0_63 = arith.constant 0 : index
    %85 = vector.load %arg10[%c1_61, %c0_62, %c0_63] : memref<2x8x64xf32, #tpu.memory_space<vmem>>, vector<1x8x64xf32>
    %86 = vector.shape_cast %85 : vector<1x8x64xf32> to vector<8x64xf32>
    %87 = vector.shape_cast %84 : vector<8x64xf32> to vector<1x8x64xf32>
    tpu.vector_store %arg10[%c1_61, %c0_62, %c0_63], %87 {strides = array<i32>} : memref<2x8x64xf32, #tpu.memory_space<vmem>>, vector<1x8x64xf32>,
    return
  }
  func.func @transform_0(%arg0: i32) -> (i32, i32, i32) {
    %c0_i32 = arith.constant 0 : i32
    %c0_i32_0 = arith.constant 0 : i32
    %c0_i32_1 = arith.constant 0 : i32
    return %arg0, %c0_i32, %c0_i32_0 : i32, i32, i32
  }
  func.func @transform_1(%arg0: i32) -> (i32, i32) {
    %c0_i32 = arith.constant 0 : i32
    %c0_i32_0 = arith.constant 0 : i32
    %c0_i32_1 = arith.constant 0 : i32
    return %c0_i32, %c0_i32_0 : i32, i32
  }
  func.func @transform_2(%arg0: i32) -> (i32, i32, i32) {
    %c0_i32 = arith.constant 0 : i32
    %c0_i32_0 = arith.constant 0 : i32
    %c0_i32_1 = arith.constant 0 : i32
    %c0_i32_2 = arith.constant 0 : i32
    return %c0_i32, %c0_i32_0, %c0_i32_1 : i32, i32, i32
  }
  func.func @transform_3(%arg0: i32) -> (i32, i32, i32) {
    %c0_i32 = arith.constant 0 : i32
    %c0_i32_0 = arith.constant 0 : i32
    %c0_i32_1 = arith.constant 0 : i32
    %c0_i32_2 = arith.constant 0 : i32
    return %c0_i32, %c0_i32_0, %c0_i32_1 : i32, i32, i32
  }
  func.func @transform_4(%arg0: i32) -> (i32, i32) {
    %c0_i32 = arith.constant 0 : i32
    %c0_i32_0 = arith.constant 0 : i32
    %c0_i32_1 = arith.constant 0 : i32
    return %c0_i32, %c0_i32_0 : i32, i32
  }
  func.func @transform_5(%arg0: i32) -> (i32, i32) {
    %c0_i32 = arith.constant 0 : i32
    %c0_i32_0 = arith.constant 0 : i32
    %c0_i32_1 = arith.constant 0 : i32
    return %c0_i32, %c0_i32_0 : i32, i32
  }
  func.func @transform_6(%arg0: i32) -> (i32, i32) {
    %c0_i32 = arith.constant 0 : i32
    %c0_i32_0 = arith.constant 0 : i32
    %c0_i32_1 = arith.constant 0 : i32
    return %c0_i32, %c0_i32_0 : i32, i32
  }
  func.func @transform_7(%arg0: i32) -> (i32, i32) {
    %c0_i32 = arith.constant 0 : i32
    %c0_i32_0 = arith.constant 0 : i32
    %c0_i32_1 = arith.constant 0 : i32
    return %c0_i32, %c0_i32_0 : i32, i32
  }
  func.func @transform_8(%arg0: i32) -> (i32, i32) {
    %c0_i32 = arith.constant 0 : i32
    %c0_i32_0 = arith.constant 0 : i32
    %c0_i32_1 = arith.constant 0 : i32
    return %c0_i32, %c0_i32_0 : i32, i32
  }
  func.func @transform_9(%arg0: i32) -> (i32, i32, i32) {
    %c0_i32 = arith.constant 0 : i32
    %c0_i32_0 = arith.constant 0 : i32
    %c0_i32_1 = arith.constant 0 : i32
    return %arg0, %c0_i32, %c0_i32_0 : i32, i32, i32
  }
}

</mosaic_0001>

<llo_original>
// kernel: shuffle_unit_v2_s2.1
$region0: #{shuffle_unit_v2_s2.1}
  #allocation0 [shape = 'u32[]', space=smem, size = 0x4, offset = 0x4, fixed_abs, tag = 'smem constant byte address 0x4 - core index']
  #allocation1 [shape = 'u32[72,128]{1,0:T(1,128)}', space=vmem, size = 0x9000, scoped, tag = 'internal scratch']
  %s0 = inlined_call_operand.vmem [shape: f32[2,16,64], index: 0, kind: input, shape index: {}]
  %s1 = inlined_call_operand.vmem [shape: f32[24,16], index: 1, kind: input, shape index: {}]
  %s2 = inlined_call_operand.vmem [shape: f32[3,64,32], index: 2, kind: input, shape index: {}]
  %s3 = inlined_call_operand.vmem [shape: f32[3,64,32], index: 3, kind: input, shape index: {}]
  %s4 = inlined_call_operand.vmem [shape: f32[64,64], index: 4, kind: input, shape index: {}]
  %s5 = inlined_call_operand.vmem [shape: f32[1,64], index: 5, kind: input, shape index: {}]
  %s6 = inlined_call_operand.vmem [shape: f32[32,64], index: 6, kind: input, shape index: {}]
  %s7 = inlined_call_operand.vmem [shape: f32[32,64], index: 7, kind: input, shape index: {}]
  %s8 = inlined_call_operand.vmem [shape: f32[1,64], index: 8, kind: input, shape index: {}]
  %s9 = inlined_call_operand.vmem [shape: f32[2,8,64], index: 9, kind: output, shape index: {}]
  %s10 = sld [smem:[#allocation0]]
  $region46: #{shuffle_unit_v2_s2.1} parent=0
    _
  %s12 = ssub.s32 1, %s10
  %s13 = scalar_select 0, %s12, %s10
  // Predicated region
  $region2: #{shuffle_unit_v2_s2.1} parent=0 // pred_check
    _
  $region3: #{shuffle_unit_v2_s2.1} parent=0 // pred_check_branch
    %15 = sbr.rel (0) target = $region5
  $region4: #{shuffle_unit_v2_s2.1} parent=0 // pred_region
    _
  $region5: #{shuffle_unit_v2_s2.1} parent=0 // pred_fallthru
    _
  // Predicated region
  $region6: #{shuffle_unit_v2_s2.1} parent=0 // pred_check
    _
  $region7: #{shuffle_unit_v2_s2.1} parent=0 // pred_check_branch
    %17 = sbr.rel (0) target = $region9
  $region8: #{shuffle_unit_v2_s2.1} parent=0 // pred_region
    _
  $region9: #{shuffle_unit_v2_s2.1} parent=0 // pred_fallthru
    _
  // Predicated region
  $region10: #{shuffle_unit_v2_s2.1} parent=0 // pred_check
    _
  $region11: #{shuffle_unit_v2_s2.1} parent=0 // pred_check_branch
    %19 = sbr.rel (0) target = $region13
  $region12: #{shuffle_unit_v2_s2.1} parent=0 // pred_region
    _
  $region13: #{shuffle_unit_v2_s2.1} parent=0 // pred_fallthru
    _
  // Predicated region
  $region14: #{shuffle_unit_v2_s2.1} parent=0 // pred_check
    _
  $region15: #{shuffle_unit_v2_s2.1} parent=0 // pred_check_branch
    %21 = sbr.rel (0) target = $region17
  $region16: #{shuffle_unit_v2_s2.1} parent=0 // pred_region
    _
  $region17: #{shuffle_unit_v2_s2.1} parent=0 // pred_fallthru
    _
  // Predicated region
  $region18: #{shuffle_unit_v2_s2.1} parent=0 // pred_check
    _
  $region19: #{shuffle_unit_v2_s2.1} parent=0 // pred_check_branch
    %23 = sbr.rel (0) target = $region21
  $region20: #{shuffle_unit_v2_s2.1} parent=0 // pred_region
    _
  $region21: #{shuffle_unit_v2_s2.1} parent=0 // pred_fallthru
    _
  // Predicated region
  $region22: #{shuffle_unit_v2_s2.1} parent=0 // pred_check
    _
  $region23: #{shuffle_unit_v2_s2.1} parent=0 // pred_check_branch
    %25 = sbr.rel (0) target = $region25
  $region24: #{shuffle_unit_v2_s2.1} parent=0 // pred_region
    _
  $region25: #{shuffle_unit_v2_s2.1} parent=0 // pred_fallthru
    _
  // Predicated region
  $region26: #{shuffle_unit_v2_s2.1} parent=0 // pred_check
    _
  $region27: #{shuffle_unit_v2_s2.1} parent=0 // pred_check_branch
    %27 = sbr.rel (0) target = $region29
  $region28: #{shuffle_unit_v2_s2.1} parent=0 // pred_region
    _
  $region29: #{shuffle_unit_v2_s2.1} parent=0 // pred_fallthru
    _
  // Predicated region
  $region30: #{shuffle_unit_v2_s2.1} parent=0 // pred_check
    _
  $region31: #{shuffle_unit_v2_s2.1} parent=0 // pred_check_branch
    %29 = sbr.rel (0) target = $region33
  $region32: #{shuffle_unit_v2_s2.1} parent=0 // pred_region
    _
  $region33: #{shuffle_unit_v2_s2.1} parent=0 // pred_fallthru
    _
  // Predicated region
  $region34: #{shuffle_unit_v2_s2.1} parent=0 // pred_check
    _
  $region35: #{shuffle_unit_v2_s2.1} parent=0 // pred_check_branch
    %31 = sbr.rel (0) target = $region37
  $region36: #{shuffle_unit_v2_s2.1} parent=0 // pred_region
    _
  $region37: #{shuffle_unit_v2_s2.1} parent=0 // pred_fallthru
    _
  %v32 = vld [vmem:[%s1] sm:$0xff]
  %v33 = vld [vmem:[%s1 + $0x8] sm:$0xff]
  %v34 = vld [vmem:[%s1 + $0x10] sm:$0xff]
  %v35 = vld [vmem:[%s2] sm:$0xff]
  %v36 = vld [vmem:[%s2 + $0x8] sm:$0xff]
  %v37 = vld [vmem:[%s2 + $0x10] sm:$0xff]
  %v38 = vld [vmem:[%s2 + $0x18] sm:$0xff]
  %v39 = vld [vmem:[%s2 + $0x20] sm:$0xff]
  %v40 = vld [vmem:[%s2 + $0x28] sm:$0xff]
  %v41 = vld [vmem:[%s2 + $0x30] sm:$0xff]
  %v42 = vld [vmem:[%s2 + $0x38] sm:$0xff]
  %s43 = scalar_lea.vmem %s2, 64
  %v44 = vld [vmem:[%s43] sm:$0xff]
  %v45 = vld [vmem:[%s43 + $0x8] sm:$0xff]
  %v46 = vld [vmem:[%s43 + $0x10] sm:$0xff]
  %v47 = vld [vmem:[%s43 + $0x18] sm:$0xff]
  %v48 = vld [vmem:[%s43 + $0x20] sm:$0xff]
  %v49 = vld [vmem:[%s43 + $0x28] sm:$0xff]
  %v50 = vld [vmem:[%s43 + $0x30] sm:$0xff]
  %v51 = vld [vmem:[%s43 + $0x38] sm:$0xff]
  %s52 = scalar_lea.vmem %s2, 128
  %v53 = vld [vmem:[%s52] sm:$0xff]
  %v54 = vld [vmem:[%s52 + $0x8] sm:$0xff]
  %v55 = vld [vmem:[%s52 + $0x10] sm:$0xff]
  %v56 = vld [vmem:[%s52 + $0x18] sm:$0xff]
  %v57 = vld [vmem:[%s52 + $0x20] sm:$0xff]
  %v58 = vld [vmem:[%s52 + $0x28] sm:$0xff]
  %v59 = vld [vmem:[%s52 + $0x30] sm:$0xff]
  %v60 = vld [vmem:[%s52 + $0x38] sm:$0xff]
  %v61 = vld [vmem:[%s3] sm:$0xff]
  %v62 = vld [vmem:[%s3 + $0x8] sm:$0xff]
  %v63 = vld [vmem:[%s3 + $0x10] sm:$0xff]
  %v64 = vld [vmem:[%s3 + $0x18] sm:$0xff]
  %v65 = vld [vmem:[%s3 + $0x20] sm:$0xff]
  %v66 = vld [vmem:[%s3 + $0x28] sm:$0xff]
  %v67 = vld [vmem:[%s3 + $0x30] sm:$0xff]
  %v68 = vld [vmem:[%s3 + $0x38] sm:$0xff]
  %s69 = scalar_lea.vmem %s3, 64
  %v70 = vld [vmem:[%s69] sm:$0xff]
  %v71 = vld [vmem:[%s69 + $0x8] sm:$0xff]
  %v72 = vld [vmem:[%s69 + $0x10] sm:$0xff]
  %v73 = vld [vmem:[%s69 + $0x18] sm:$0xff]
  %v74 = vld [vmem:[%s69 + $0x20] sm:$0xff]
  %v75 = vld [vmem:[%s69 + $0x28] sm:$0xff]
  %v76 = vld [vmem:[%s69 + $0x30] sm:$0xff]
  %v77 = vld [vmem:[%s69 + $0x38] sm:$0xff]
  %s78 = scalar_lea.vmem %s3, 128
  %v79 = vld [vmem:[%s78] sm:$0xff]
  %v80 = vld [vmem:[%s78 + $0x8] sm:$0xff]
  %v81 = vld [vmem:[%s78 + $0x10] sm:$0xff]
  %v82 = vld [vmem:[%s78 + $0x18] sm:$0xff]
  %v83 = vld [vmem:[%s78 + $0x20] sm:$0xff]
  %v84 = vld [vmem:[%s78 + $0x28] sm:$0xff]
  %v85 = vld [vmem:[%s78 + $0x30] sm:$0xff]
  %v86 = vld [vmem:[%s78 + $0x38] sm:$0xff]
  %v87 = vld [vmem:[%s4] sm:$0xff]
  %v88 = vld [vmem:[%s4 + $0x8] sm:$0xff]
  %v89 = vld [vmem:[%s4 + $0x10] sm:$0xff]
  %v90 = vld [vmem:[%s4 + $0x18] sm:$0xff]
  %v91 = vld [vmem:[%s4 + $0x20] sm:$0xff]
  %v92 = vld [vmem:[%s4 + $0x28] sm:$0xff]
  %v93 = vld [vmem:[%s4 + $0x30] sm:$0xff]
  %v94 = vld [vmem:[%s4 + $0x38] sm:$0xff]
  %v95 = vld [vmem:[%s5] sm:$0x1]
  %v96 = vld [vmem:[%s6] sm:$0xff]
  %v97 = vld [vmem:[%s6 + $0x8] sm:$0xff]
  %v98 = vld [vmem:[%s6 + $0x10] sm:$0xff]
  %v99 = vld [vmem:[%s6 + $0x18] sm:$0xff]
  %v100 = vld [vmem:[%s7] sm:$0xff]
  %v101 = vld [vmem:[%s7 + $0x8] sm:$0xff]
  %v102 = vld [vmem:[%s7 + $0x10] sm:$0xff]
  %v103 = vld [vmem:[%s7 + $0x18] sm:$0xff]
  %v104 = vld [vmem:[%s8] sm:$0x1]
  %v105 = vld [vmem:[%s0] sm:$0xff]
  %v106 = vld [vmem:[%s0 + $0x8] sm:$0xff]
  %vm107 = vcmask 130048
  %v109 = vsel %vm107, %v32, 0
  %v112 = vsel %vm107, %v33, 0
  %v115 = vsel %vm107, %v34, 0
  %117 = vmatpush.msra.mxu0 0.0
  %118 = vmatpush.msra.mxu0 0.0
  %119 = vmatpush.msra.mxu0 0.0
  %120 = vmatpush.msra.mxu0 0.0
  %121 = vmatpush.msra.mxu0 0.0
  %122 = vmatpush.msra.mxu0 0.0
  %123 = vmatpush.msra.mxu0 0.0
  %124 = vmatpush.msra.mxu0 0.0
  %125 = vmatpush.msra.mxu0 0.0
  %126 = vmatpush.msra.mxu0 0.0
  %127 = vmatpush.msra.mxu0 0.0
  %128 = vmatpush.msra.mxu0 0.0
  %129 = vmatpush.msra.mxu0 0.0
  %130 = vmatpush.msra.mxu0 0.0
  %v131 = vand.u32 %v106, 4294901760
  %132 = vmatpush.msra.mxu0 %v131
  %v133 = vand.u32 %v105, 4294901760
  %134 = vmatpush.msra.mxu0 %v133
  %v135 = vand.u32 %v109, 4294901760
  %v136 = vsub.f32 %v109, %v135
  %v137 = vand.u32 %v136, 4294901760
  %v138 = vsub.f32 %v136, %v137
  %v139 = vand.u32 %v138, 4294901760
  %140 = vmatmul.f32.gmra.mxu0 %v139
  %v141 = vpop.f32.mrf.mxu0
  %v142 = vadd.f32 0.0, %v141
  %v143 = vand.u32 %v112, 4294901760
  %v144 = vsub.f32 %v112, %v143
  %v145 = vand.u32 %v144, 4294901760
  %v146 = vsub.f32 %v144, %v145
  %v147 = vand.u32 %v146, 4294901760
  %148 = vmatmul.f32.gmra.mxu0 %v147
  %v149 = vpop.f32.mrf.mxu0
  %v150 = vadd.f32 0.0, %v149
  %v151 = vand.u32 %v115, 4294901760
  %v152 = vsub.f32 %v115, %v151
  %v153 = vand.u32 %v152, 4294901760
  %v154 = vsub.f32 %v152, %v153
  %v155 = vand.u32 %v154, 4294901760
  %156 = vmatmul.f32.gmra.mxu0 %v155
  %v157 = vpop.f32.mrf.mxu0
  %v158 = vadd.f32 0.0, %v157
  %159 = vdwg.mxu0
  %160 = vmatpush.msra.mxu0 0.0
  %161 = vmatpush.msra.mxu0 0.0
  %162 = vmatpush.msra.mxu0 0.0
  %163 = vmatpush.msra.mxu0 0.0
  %164 = vmatpush.msra.mxu0 0.0
  %165 = vmatpush.msra.mxu0 0.0
  %166 = vmatpush.msra.mxu0 0.0
  %167 = vmatpush.msra.mxu0 0.0
  %168 = vmatpush.msra.mxu0 0.0
  %169 = vmatpush.msra.mxu0 0.0
  %170 = vmatpush.msra.mxu0 0.0
  %171 = vmatpush.msra.mxu0 0.0
  %172 = vmatpush.msra.mxu0 0.0
  %173 = vmatpush.msra.mxu0 0.0
  %v174 = vand.u32 %v106, 4294901760
  %v175 = vsub.f32 %v106, %v174
  %v176 = vand.u32 %v175, 4294901760
  %v177 = vsub.f32 %v175, %v176
  %v178 = vand.u32 %v177, 4294901760
  %179 = vmatpush.msra.mxu0 %v178
  %v180 = vand.u32 %v105, 4294901760
  %v181 = vsub.f32 %v105, %v180
  %v182 = vand.u32 %v181, 4294901760
  %v183 = vsub.f32 %v181, %v182
  %v184 = vand.u32 %v183, 4294901760
  %185 = vmatpush.msra.mxu0 %v184
  %v186 = vand.u32 %v109, 4294901760
  %187 = vmatmul.f32.gmra.mxu0 %v186
  %v188 = vpop.f32.mrf.mxu0
  %v189 = vadd.f32 %v142, %v188
  %v190 = vand.u32 %v112, 4294901760
  %191 = vmatmul.f32.gmra.mxu0 %v190
  %v192 = vpop.f32.mrf.mxu0
  %v193 = vadd.f32 %v150, %v192
  %v194 = vand.u32 %v115, 4294901760
  %195 = vmatmul.f32.gmra.mxu0 %v194
  %v196 = vpop.f32.mrf.mxu0
  %v197 = vadd.f32 %v158, %v196
  %198 = vdwg.mxu0
  %199 = vmatpush.msra.mxu0 0.0
  %200 = vmatpush.msra.mxu0 0.0
  %201 = vmatpush.msra.mxu0 0.0
  %202 = vmatpush.msra.mxu0 0.0
  %203 = vmatpush.msra.mxu0 0.0
  %204 = vmatpush.msra.mxu0 0.0
  %205 = vmatpush.msra.mxu0 0.0
  %206 = vmatpush.msra.mxu0 0.0
  %207 = vmatpush.msra.mxu0 0.0
  %208 = vmatpush.msra.mxu0 0.0
  %209 = vmatpush.msra.mxu0 0.0
  %210 = vmatpush.msra.mxu0 0.0
  %211 = vmatpush.msra.mxu0 0.0
  %212 = vmatpush.msra.mxu0 0.0
  %v213 = vand.u32 %v106, 4294901760
  %v214 = vsub.f32 %v106, %v213
  %215 = vmatpush.msra.mxu0 %v214
  %v216 = vand.u32 %v105, 4294901760
  %v217 = vsub.f32 %v105, %v216
  %218 = vmatpush.msra.mxu0 %v217
  %v219 = vand.u32 %v109, 4294901760
  %v220 = vsub.f32 %v109, %v219
  %221 = vmatmul.f32.gmra.mxu0 %v220
  %v222 = vpop.f32.mrf.mxu0
  %v223 = vadd.f32 %v189, %v222
  %v224 = vand.u32 %v112, 4294901760
  %v225 = vsub.f32 %v112, %v224
  %226 = vmatmul.f32.gmra.mxu0 %v225
  %v227 = vpop.f32.mrf.mxu0
  %v228 = vadd.f32 %v193, %v227
  %v229 = vand.u32 %v115, 4294901760
  %v230 = vsub.f32 %v115, %v229
  %231 = vmatmul.f32.gmra.mxu0 %v230
  %v232 = vpop.f32.mrf.mxu0
  %v233 = vadd.f32 %v197, %v232
  %234 = vdwg.mxu0
  %235 = vmatpush.msra.mxu0 0.0
  %236 = vmatpush.msra.mxu0 0.0
  %237 = vmatpush.msra.mxu0 0.0
  %238 = vmatpush.msra.mxu0 0.0
  %239 = vmatpush.msra.mxu0 0.0
  %240 = vmatpush.msra.mxu0 0.0
  %241 = vmatpush.msra.mxu0 0.0
  %242 = vmatpush.msra.mxu0 0.0
  %243 = vmatpush.msra.mxu0 0.0
  %244 = vmatpush.msra.mxu0 0.0
  %245 = vmatpush.msra.mxu0 0.0
  %246 = vmatpush.msra.mxu0 0.0
  %247 = vmatpush.msra.mxu0 0.0
  %248 = vmatpush.msra.mxu0 0.0
  %v249 = vand.u32 %v106, 4294901760
  %250 = vmatpush.msra.mxu0 %v249
  %v251 = vand.u32 %v105, 4294901760
  %252 = vmatpush.msra.mxu0 %v251
  %v253 = vand.u32 %v109, 4294901760
  %v254 = vsub.f32 %v109, %v253
  %v255 = vand.u32 %v254, 4294901760
  %256 = vmatmul.f32.gmra.mxu0 %v255
  %v257 = vpop.f32.mrf.mxu0
  %v258 = vadd.f32 %v223, %v257
  %v259 = vand.u32 %v112, 4294901760
  %v260 = vsub.f32 %v112, %v259
  %v261 = vand.u32 %v260, 4294901760
  %262 = vmatmul.f32.gmra.mxu0 %v261
  %v263 = vpop.f32.mrf.mxu0
  %v264 = vadd.f32 %v228, %v263
  %v265 = vand.u32 %v115, 4294901760
  %v266 = vsub.f32 %v115, %v265
  %v267 = vand.u32 %v266, 4294901760
  %268 = vmatmul.f32.gmra.mxu0 %v267
  %v269 = vpop.f32.mrf.mxu0
  %v270 = vadd.f32 %v233, %v269
  %271 = vdwg.mxu0
  %272 = vmatpush.msra.mxu0 0.0
  %273 = vmatpush.msra.mxu0 0.0
  %274 = vmatpush.msra.mxu0 0.0
  %275 = vmatpush.msra.mxu0 0.0
  %276 = vmatpush.msra.mxu0 0.0
  %277 = vmatpush.msra.mxu0 0.0
  %278 = vmatpush.msra.mxu0 0.0
  %279 = vmatpush.msra.mxu0 0.0
  %280 = vmatpush.msra.mxu0 0.0
  %281 = vmatpush.msra.mxu0 0.0
  %282 = vmatpush.msra.mxu0 0.0
  %283 = vmatpush.msra.mxu0 0.0
  %284 = vmatpush.msra.mxu0 0.0
  %285 = vmatpush.msra.mxu0 0.0
  %v286 = vand.u32 %v106, 4294901760
  %v287 = vsub.f32 %v106, %v286
  %v288 = vand.u32 %v287, 4294901760
  %289 = vmatpush.msra.mxu0 %v288
  %v290 = vand.u32 %v105, 4294901760
  %v291 = vsub.f32 %v105, %v290
  %v292 = vand.u32 %v291, 4294901760
  %293 = vmatpush.msra.mxu0 %v292
  %v294 = vand.u32 %v109, 4294901760
  %295 = vmatmul.f32.gmra.mxu0 %v294
  %v296 = vpop.f32.mrf.mxu0
  %v297 = vadd.f32 %v258, %v296
  %v298 = vand.u32 %v112, 4294901760
  %299 = vmatmul.f32.gmra.mxu0 %v298
  %v300 = vpop.f32.mrf.mxu0
  %v301 = vadd.f32 %v264, %v300
  %v302 = vand.u32 %v115, 4294901760
  %303 = vmatmul.f32.gmra.mxu0 %v302
  %v304 = vpop.f32.mrf.mxu0
  %v305 = vadd.f32 %v270, %v304
  %306 = vdwg.mxu0
  %307 = vmatpush.msra.mxu0 0.0
  %308 = vmatpush.msra.mxu0 0.0
  %309 = vmatpush.msra.mxu0 0.0
  %310 = vmatpush.msra.mxu0 0.0
  %311 = vmatpush.msra.mxu0 0.0
  %312 = vmatpush.msra.mxu0 0.0
  %313 = vmatpush.msra.mxu0 0.0
  %314 = vmatpush.msra.mxu0 0.0
  %315 = vmatpush.msra.mxu0 0.0
  %316 = vmatpush.msra.mxu0 0.0
  %317 = vmatpush.msra.mxu0 0.0
  %318 = vmatpush.msra.mxu0 0.0
  %319 = vmatpush.msra.mxu0 0.0
  %320 = vmatpush.msra.mxu0 0.0
  %v321 = vand.u32 %v106, 4294901760
  %322 = vmatpush.msra.mxu0 %v321
  %v323 = vand.u32 %v105, 4294901760
  %324 = vmatpush.msra.mxu0 %v323
  %v325 = vand.u32 %v109, 4294901760
  %326 = vmatmul.f32.gmra.mxu0 %v325
  %v327 = vpop.f32.mrf.mxu0
  %v328 = vadd.f32 %v297, %v327
  %v329 = vand.u32 %v112, 4294901760
  %330 = vmatmul.f32.gmra.mxu0 %v329
  %v331 = vpop.f32.mrf.mxu0
  %v332 = vadd.f32 %v301, %v331
  %v333 = vand.u32 %v115, 4294901760
  %334 = vmatmul.f32.gmra.mxu0 %v333
  %v335 = vpop.f32.mrf.mxu0
  %v336 = vadd.f32 %v305, %v335
  %337 = vdwg.mxu0
  %vm338 = vcmask 523264
  %v340 = vsel %vm338, %v332, 0
  %342 = vmatpush.msra.mxu0 0.0
  %343 = vmatpush.msra.mxu0 0.0
  %344 = vmatpush.msra.mxu0 0.0
  %345 = vmatpush.msra.mxu0 0.0
  %346 = vmatpush.msra.mxu0 0.0
  %347 = vmatpush.msra.mxu0 0.0
  %348 = vmatpush.msra.mxu0 0.0
  %349 = vmatpush.msra.mxu0 0.0
  %v350 = vand.u32 %v51, 4294901760
  %351 = vmatpush.msra.mxu0 %v350
  %v352 = vand.u32 %v50, 4294901760
  %353 = vmatpush.msra.mxu0 %v352
  %v354 = vand.u32 %v49, 4294901760
  %355 = vmatpush.msra.mxu0 %v354
  %v356 = vand.u32 %v48, 4294901760
  %357 = vmatpush.msra.mxu0 %v356
  %v358 = vand.u32 %v47, 4294901760
  %359 = vmatpush.msra.mxu0 %v358
  %v360 = vand.u32 %v46, 4294901760
  %361 = vmatpush.msra.mxu0 %v360
  %v362 = vand.u32 %v45, 4294901760
  %363 = vmatpush.msra.mxu0 %v362
  %v364 = vand.u32 %v44, 4294901760
  %365 = vmatpush.msra.mxu0 %v364
  %v366 = vand.u32 %v340, 4294901760
  %v367 = vsub.f32 %v340, %v366
  %v368 = vand.u32 %v367, 4294901760
  %v369 = vsub.f32 %v367, %v368
  %v370 = vand.u32 %v369, 4294901760
  %371 = vmatmul.f32.gmra.mxu0 %v370
  %v372 = vpop.f32.mrf.mxu0
  %v373 = vadd.f32 0.0, %v372
  %374 = vdwg.mxu0
  %375 = vmatpush.msra.mxu0 0.0
  %376 = vmatpush.msra.mxu0 0.0
  %377 = vmatpush.msra.mxu0 0.0
  %378 = vmatpush.msra.mxu0 0.0
  %379 = vmatpush.msra.mxu0 0.0
  %380 = vmatpush.msra.mxu0 0.0
  %381 = vmatpush.msra.mxu0 0.0
  %382 = vmatpush.msra.mxu0 0.0
  %v383 = vand.u32 %v51, 4294901760
  %v384 = vsub.f32 %v51, %v383
  %v385 = vand.u32 %v384, 4294901760
  %v386 = vsub.f32 %v384, %v385
  %v387 = vand.u32 %v386, 4294901760
  %388 = vmatpush.msra.mxu0 %v387
  %v389 = vand.u32 %v50, 4294901760
  %v390 = vsub.f32 %v50, %v389
  %v391 = vand.u32 %v390, 4294901760
  %v392 = vsub.f32 %v390, %v391
  %v393 = vand.u32 %v392, 4294901760
  %394 = vmatpush.msra.mxu0 %v393
  %v395 = vand.u32 %v49, 4294901760
  %v396 = vsub.f32 %v49, %v395
  %v397 = vand.u32 %v396, 4294901760
  %v398 = vsub.f32 %v396, %v397
  %v399 = vand.u32 %v398, 4294901760
  %400 = vmatpush.msra.mxu0 %v399
  %v401 = vand.u32 %v48, 4294901760
  %v402 = vsub.f32 %v48, %v401
  %v403 = vand.u32 %v402, 4294901760
  %v404 = vsub.f32 %v402, %v403
  %v405 = vand.u32 %v404, 4294901760
  %406 = vmatpush.msra.mxu0 %v405
  %v407 = vand.u32 %v47, 4294901760
  %v408 = vsub.f32 %v47, %v407
  %v409 = vand.u32 %v408, 4294901760
  %v410 = vsub.f32 %v408, %v409
  %v411 = vand.u32 %v410, 4294901760
  %412 = vmatpush.msra.mxu0 %v411
  %v413 = vand.u32 %v46, 4294901760
  %v414 = vsub.f32 %v46, %v413
  %v415 = vand.u32 %v414, 4294901760
  %v416 = vsub.f32 %v414, %v415
  %v417 = vand.u32 %v416, 4294901760
  %418 = vmatpush.msra.mxu0 %v417
  %v419 = vand.u32 %v45, 4294901760
  %v420 = vsub.f32 %v45, %v419
  %v421 = vand.u32 %v420, 4294901760
  %v422 = vsub.f32 %v420, %v421
  %v423 = vand.u32 %v422, 4294901760
  %424 = vmatpush.msra.mxu0 %v423
  %v425 = vand.u32 %v44, 4294901760
  %v426 = vsub.f32 %v44, %v425
  %v427 = vand.u32 %v426, 4294901760
  %v428 = vsub.f32 %v426, %v427
  %v429 = vand.u32 %v428, 4294901760
  %430 = vmatpush.msra.mxu0 %v429
  %v431 = vand.u32 %v340, 4294901760
  %432 = vmatmul.f32.gmra.mxu0 %v431
  %v433 = vpop.f32.mrf.mxu0
  %v434 = vadd.f32 %v373, %v433
  %435 = vdwg.mxu0
  %436 = vmatpush.msra.mxu0 0.0
  %437 = vmatpush.msra.mxu0 0.0
  %438 = vmatpush.msra.mxu0 0.0
  %439 = vmatpush.msra.mxu0 0.0
  %440 = vmatpush.msra.mxu0 0.0
  %441 = vmatpush.msra.mxu0 0.0
  %442 = vmatpush.msra.mxu0 0.0
  %443 = vmatpush.msra.mxu0 0.0
  %v444 = vand.u32 %v51, 4294901760
  %v445 = vsub.f32 %v51, %v444
  %446 = vmatpush.msra.mxu0 %v445
  %v447 = vand.u32 %v50, 4294901760
  %v448 = vsub.f32 %v50, %v447
  %449 = vmatpush.msra.mxu0 %v448
  %v450 = vand.u32 %v49, 4294901760
  %v451 = vsub.f32 %v49, %v450
  %452 = vmatpush.msra.mxu0 %v451
  %v453 = vand.u32 %v48, 4294901760
  %v454 = vsub.f32 %v48, %v453
  %455 = vmatpush.msra.mxu0 %v454
  %v456 = vand.u32 %v47, 4294901760
  %v457 = vsub.f32 %v47, %v456
  %458 = vmatpush.msra.mxu0 %v457
  %v459 = vand.u32 %v46, 4294901760
  %v460 = vsub.f32 %v46, %v459
  %461 = vmatpush.msra.mxu0 %v460
  %v462 = vand.u32 %v45, 4294901760
  %v463 = vsub.f32 %v45, %v462
  %464 = vmatpush.msra.mxu0 %v463
  %v465 = vand.u32 %v44, 4294901760
  %v466 = vsub.f32 %v44, %v465
  %467 = vmatpush.msra.mxu0 %v466
  %v468 = vand.u32 %v340, 4294901760
  %v469 = vsub.f32 %v340, %v468
  %470 = vmatmul.f32.gmra.mxu0 %v469
  %v471 = vpop.f32.mrf.mxu0
  %v472 = vadd.f32 %v434, %v471
  %473 = vdwg.mxu0
  %474 = vmatpush.msra.mxu0 0.0
  %475 = vmatpush.msra.mxu0 0.0
  %476 = vmatpush.msra.mxu0 0.0
  %477 = vmatpush.msra.mxu0 0.0
  %478 = vmatpush.msra.mxu0 0.0
  %479 = vmatpush.msra.mxu0 0.0
  %480 = vmatpush.msra.mxu0 0.0
  %481 = vmatpush.msra.mxu0 0.0
  %v482 = vand.u32 %v51, 4294901760
  %483 = vmatpush.msra.mxu0 %v482
  %v484 = vand.u32 %v50, 4294901760
  %485 = vmatpush.msra.mxu0 %v484
  %v486 = vand.u32 %v49, 4294901760
  %487 = vmatpush.msra.mxu0 %v486
  %v488 = vand.u32 %v48, 4294901760
  %489 = vmatpush.msra.mxu0 %v488
  %v490 = vand.u32 %v47, 4294901760
  %491 = vmatpush.msra.mxu0 %v490
  %v492 = vand.u32 %v46, 4294901760
  %493 = vmatpush.msra.mxu0 %v492
  %v494 = vand.u32 %v45, 4294901760
  %495 = vmatpush.msra.mxu0 %v494
  %v496 = vand.u32 %v44, 4294901760
  %497 = vmatpush.msra.mxu0 %v496
  %v498 = vand.u32 %v340, 4294901760
  %v499 = vsub.f32 %v340, %v498
  %v500 = vand.u32 %v499, 4294901760
  %501 = vmatmul.f32.gmra.mxu0 %v500
  %v502 = vpop.f32.mrf.mxu0
  %v503 = vadd.f32 %v472, %v502
  %504 = vdwg.mxu0
  %505 = vmatpush.msra.mxu0 0.0
  %506 = vmatpush.msra.mxu0 0.0
  %507 = vmatpush.msra.mxu0 0.0
  %508 = vmatpush.msra.mxu0 0.0
  %509 = vmatpush.msra.mxu0 0.0
  %510 = vmatpush.msra.mxu0 0.0
  %511 = vmatpush.msra.mxu0 0.0
  %512 = vmatpush.msra.mxu0 0.0
  %v513 = vand.u32 %v51, 4294901760
  %v514 = vsub.f32 %v51, %v513
  %v515 = vand.u32 %v514, 4294901760
  %516 = vmatpush.msra.mxu0 %v515
  %v517 = vand.u32 %v50, 4294901760
  %v518 = vsub.f32 %v50, %v517
  %v519 = vand.u32 %v518, 4294901760
  %520 = vmatpush.msra.mxu0 %v519
  %v521 = vand.u32 %v49, 4294901760
  %v522 = vsub.f32 %v49, %v521
  %v523 = vand.u32 %v522, 4294901760
  %524 = vmatpush.msra.mxu0 %v523
  %v525 = vand.u32 %v48, 4294901760
  %v526 = vsub.f32 %v48, %v525
  %v527 = vand.u32 %v526, 4294901760
  %528 = vmatpush.msra.mxu0 %v527
  %v529 = vand.u32 %v47, 4294901760
  %v530 = vsub.f32 %v47, %v529
  %v531 = vand.u32 %v530, 4294901760
  %532 = vmatpush.msra.mxu0 %v531
  %v533 = vand.u32 %v46, 4294901760
  %v534 = vsub.f32 %v46, %v533
  %v535 = vand.u32 %v534, 4294901760
  %536 = vmatpush.msra.mxu0 %v535
  %v537 = vand.u32 %v45, 4294901760
  %v538 = vsub.f32 %v45, %v537
  %v539 = vand.u32 %v538, 4294901760
  %540 = vmatpush.msra.mxu0 %v539
  %v541 = vand.u32 %v44, 4294901760
  %v542 = vsub.f32 %v44, %v541
  %v543 = vand.u32 %v542, 4294901760
  %544 = vmatpush.msra.mxu0 %v543
  %v545 = vand.u32 %v340, 4294901760
  %546 = vmatmul.f32.gmra.mxu0 %v545
  %v547 = vpop.f32.mrf.mxu0
  %v548 = vadd.f32 %v503, %v547
  %549 = vdwg.mxu0
  %550 = vmatpush.msra.mxu0 0.0
  %551 = vmatpush.msra.mxu0 0.0
  %552 = vmatpush.msra.mxu0 0.0
  %553 = vmatpush.msra.mxu0 0.0
  %554 = vmatpush.msra.mxu0 0.0
  %555 = vmatpush.msra.mxu0 0.0
  %556 = vmatpush.msra.mxu0 0.0
  %557 = vmatpush.msra.mxu0 0.0
  %v558 = vand.u32 %v51, 4294901760
  %559 = vmatpush.msra.mxu0 %v558
  %v560 = vand.u32 %v50, 4294901760
  %561 = vmatpush.msra.mxu0 %v560
  %v562 = vand.u32 %v49, 4294901760
  %563 = vmatpush.msra.mxu0 %v562
  %v564 = vand.u32 %v48, 4294901760
  %565 = vmatpush.msra.mxu0 %v564
  %v566 = vand.u32 %v47, 4294901760
  %567 = vmatpush.msra.mxu0 %v566
  %v568 = vand.u32 %v46, 4294901760
  %569 = vmatpush.msra.mxu0 %v568
  %v570 = vand.u32 %v45, 4294901760
  %571 = vmatpush.msra.mxu0 %v570
  %v572 = vand.u32 %v44, 4294901760
  %573 = vmatpush.msra.mxu0 %v572
  %v574 = vand.u32 %v340, 4294901760
  %575 = vmatmul.f32.gmra.mxu0 %v574
  %v576 = vpop.f32.mrf.mxu0
  %v577 = vadd.f32 %v548, %v576
  %578 = vdwg.mxu0
  %v580 = vsel %vm338, %v328, 0
  %582 = vmatpush.msra.mxu0 0.0
  %583 = vmatpush.msra.mxu0 0.0
  %584 = vmatpush.msra.mxu0 0.0
  %585 = vmatpush.msra.mxu0 0.0
  %586 = vmatpush.msra.mxu0 0.0
  %587 = vmatpush.msra.mxu0 0.0
  %588 = vmatpush.msra.mxu0 0.0
  %589 = vmatpush.msra.mxu0 0.0
  %v590 = vand.u32 %v42, 4294901760
  %591 = vmatpush.msra.mxu0 %v590
  %v592 = vand.u32 %v41, 4294901760
  %593 = vmatpush.msra.mxu0 %v592
  %v594 = vand.u32 %v40, 4294901760
  %595 = vmatpush.msra.mxu0 %v594
  %v596 = vand.u32 %v39, 4294901760
  %597 = vmatpush.msra.mxu0 %v596
  %v598 = vand.u32 %v38, 4294901760
  %599 = vmatpush.msra.mxu0 %v598
  %v600 = vand.u32 %v37, 4294901760
  %601 = vmatpush.msra.mxu0 %v600
  %v602 = vand.u32 %v36, 4294901760
  %603 = vmatpush.msra.mxu0 %v602
  %v604 = vand.u32 %v35, 4294901760
  %605 = vmatpush.msra.mxu0 %v604
  %v606 = vand.u32 %v580, 4294901760
  %v607 = vsub.f32 %v580, %v606
  %v608 = vand.u32 %v607, 4294901760
  %v609 = vsub.f32 %v607, %v608
  %v610 = vand.u32 %v609, 4294901760
  %611 = vmatmul.f32.gmra.mxu0 %v610
  %v612 = vpop.f32.mrf.mxu0
  %v613 = vadd.f32 %v577, %v612
  %614 = vdwg.mxu0
  %615 = vmatpush.msra.mxu0 0.0
  %616 = vmatpush.msra.mxu0 0.0
  %617 = vmatpush.msra.mxu0 0.0
  %618 = vmatpush.msra.mxu0 0.0
  %619 = vmatpush.msra.mxu0 0.0
  %620 = vmatpush.msra.mxu0 0.0
  %621 = vmatpush.msra.mxu0 0.0
  %622 = vmatpush.msra.mxu0 0.0
  %v623 = vand.u32 %v42, 4294901760
  %v624 = vsub.f32 %v42, %v623
  %v625 = vand.u32 %v624, 4294901760
  %v626 = vsub.f32 %v624, %v625
  %v627 = vand.u32 %v626, 4294901760
  %628 = vmatpush.msra.mxu0 %v627
  %v629 = vand.u32 %v41, 4294901760
  %v630 = vsub.f32 %v41, %v629
  %v631 = vand.u32 %v630, 4294901760
  %v632 = vsub.f32 %v630, %v631
  %v633 = vand.u32 %v632, 4294901760
  %634 = vmatpush.msra.mxu0 %v633
  %v635 = vand.u32 %v40, 4294901760
  %v636 = vsub.f32 %v40, %v635
  %v637 = vand.u32 %v636, 4294901760
  %v638 = vsub.f32 %v636, %v637
  %v639 = vand.u32 %v638, 4294901760
  %640 = vmatpush.msra.mxu0 %v639
  %v641 = vand.u32 %v39, 4294901760
  %v642 = vsub.f32 %v39, %v641
  %v643 = vand.u32 %v642, 4294901760
  %v644 = vsub.f32 %v642, %v643
  %v645 = vand.u32 %v644, 4294901760
  %646 = vmatpush.msra.mxu0 %v645
  %v647 = vand.u32 %v38, 4294901760
  %v648 = vsub.f32 %v38, %v647
  %v649 = vand.u32 %v648, 4294901760
  %v650 = vsub.f32 %v648, %v649
  %v651 = vand.u32 %v650, 4294901760
  %652 = vmatpush.msra.mxu0 %v651
  %v653 = vand.u32 %v37, 4294901760
  %v654 = vsub.f32 %v37, %v653
  %v655 = vand.u32 %v654, 4294901760
  %v656 = vsub.f32 %v654, %v655
  %v657 = vand.u32 %v656, 4294901760
  %658 = vmatpush.msra.mxu0 %v657
  %v659 = vand.u32 %v36, 4294901760
  %v660 = vsub.f32 %v36, %v659
  %v661 = vand.u32 %v660, 4294901760
  %v662 = vsub.f32 %v660, %v661
  %v663 = vand.u32 %v662, 4294901760
  %664 = vmatpush.msra.mxu0 %v663
  %v665 = vand.u32 %v35, 4294901760
  %v666 = vsub.f32 %v35, %v665
  %v667 = vand.u32 %v666, 4294901760
  %v668 = vsub.f32 %v666, %v667
  %v669 = vand.u32 %v668, 4294901760
  %670 = vmatpush.msra.mxu0 %v669
  %v671 = vand.u32 %v580, 4294901760
  %672 = vmatmul.f32.gmra.mxu0 %v671
  %v673 = vpop.f32.mrf.mxu0
  %v674 = vadd.f32 %v613, %v673
  %675 = vdwg.mxu0
  %676 = vmatpush.msra.mxu0 0.0
  %677 = vmatpush.msra.mxu0 0.0
  %678 = vmatpush.msra.mxu0 0.0
  %679 = vmatpush.msra.mxu0 0.0
  %680 = vmatpush.msra.mxu0 0.0
  %681 = vmatpush.msra.mxu0 0.0
  %682 = vmatpush.msra.mxu0 0.0
  %683 = vmatpush.msra.mxu0 0.0
  %v684 = vand.u32 %v42, 4294901760
  %v685 = vsub.f32 %v42, %v684
  %686 = vmatpush.msra.mxu0 %v685
  %v687 = vand.u32 %v41, 4294901760
  %v688 = vsub.f32 %v41, %v687
  %689 = vmatpush.msra.mxu0 %v688
  %v690 = vand.u32 %v40, 4294901760
  %v691 = vsub.f32 %v40, %v690
  %692 = vmatpush.msra.mxu0 %v691
  %v693 = vand.u32 %v39, 4294901760
  %v694 = vsub.f32 %v39, %v693
  %695 = vmatpush.msra.mxu0 %v694
  %v696 = vand.u32 %v38, 4294901760
  %v697 = vsub.f32 %v38, %v696
  %698 = vmatpush.msra.mxu0 %v697
  %v699 = vand.u32 %v37, 4294901760
  %v700 = vsub.f32 %v37, %v699
  %701 = vmatpush.msra.mxu0 %v700
  %v702 = vand.u32 %v36, 4294901760
  %v703 = vsub.f32 %v36, %v702
  %704 = vmatpush.msra.mxu0 %v703
  %v705 = vand.u32 %v35, 4294901760
  %v706 = vsub.f32 %v35, %v705
  %707 = vmatpush.msra.mxu0 %v706
  %v708 = vand.u32 %v580, 4294901760
  %v709 = vsub.f32 %v580, %v708
  %710 = vmatmul.f32.gmra.mxu0 %v709
  %v711 = vpop.f32.mrf.mxu0
  %v712 = vadd.f32 %v674, %v711
  %713 = vdwg.mxu0
  %714 = vmatpush.msra.mxu0 0.0
  %715 = vmatpush.msra.mxu0 0.0
  %716 = vmatpush.msra.mxu0 0.0
  %717 = vmatpush.msra.mxu0 0.0
  %718 = vmatpush.msra.mxu0 0.0
  %719 = vmatpush.msra.mxu0 0.0
  %720 = vmatpush.msra.mxu0 0.0
  %721 = vmatpush.msra.mxu0 0.0
  %v722 = vand.u32 %v42, 4294901760
  %723 = vmatpush.msra.mxu0 %v722
  %v724 = vand.u32 %v41, 4294901760
  %725 = vmatpush.msra.mxu0 %v724
  %v726 = vand.u32 %v40, 4294901760
  %727 = vmatpush.msra.mxu0 %v726
  %v728 = vand.u32 %v39, 4294901760
  %729 = vmatpush.msra.mxu0 %v728
  %v730 = vand.u32 %v38, 4294901760
  %731 = vmatpush.msra.mxu0 %v730
  %v732 = vand.u32 %v37, 4294901760
  %733 = vmatpush.msra.mxu0 %v732
  %v734 = vand.u32 %v36, 4294901760
  %735 = vmatpush.msra.mxu0 %v734
  %v736 = vand.u32 %v35, 4294901760
  %737 = vmatpush.msra.mxu0 %v736
  %v738 = vand.u32 %v580, 4294901760
  %v739 = vsub.f32 %v580, %v738
  %v740 = vand.u32 %v739, 4294901760
  %741 = vmatmul.f32.gmra.mxu0 %v740
  %v742 = vpop.f32.mrf.mxu0
  %v743 = vadd.f32 %v712, %v742
  %744 = vdwg.mxu0
  %745 = vmatpush.msra.mxu0 0.0
  %746 = vmatpush.msra.mxu0 0.0
  %747 = vmatpush.msra.mxu0 0.0
  %748 = vmatpush.msra.mxu0 0.0
  %749 = vmatpush.msra.mxu0 0.0
  %750 = vmatpush.msra.mxu0 0.0
  %751 = vmatpush.msra.mxu0 0.0
  %752 = vmatpush.msra.mxu0 0.0
  %v753 = vand.u32 %v42, 4294901760
  %v754 = vsub.f32 %v42, %v753
  %v755 = vand.u32 %v754, 4294901760
  %756 = vmatpush.msra.mxu0 %v755
  %v757 = vand.u32 %v41, 4294901760
  %v758 = vsub.f32 %v41, %v757
  %v759 = vand.u32 %v758, 4294901760
  %760 = vmatpush.msra.mxu0 %v759
  %v761 = vand.u32 %v40, 4294901760
  %v762 = vsub.f32 %v40, %v761
  %v763 = vand.u32 %v762, 4294901760
  %764 = vmatpush.msra.mxu0 %v763
  %v765 = vand.u32 %v39, 4294901760
  %v766 = vsub.f32 %v39, %v765
  %v767 = vand.u32 %v766, 4294901760
  %768 = vmatpush.msra.mxu0 %v767
  %v769 = vand.u32 %v38, 4294901760
  %v770 = vsub.f32 %v38, %v769
  %v771 = vand.u32 %v770, 4294901760
  %772 = vmatpush.msra.mxu0 %v771
  %v773 = vand.u32 %v37, 4294901760
  %v774 = vsub.f32 %v37, %v773
  %v775 = vand.u32 %v774, 4294901760
  %776 = vmatpush.msra.mxu0 %v775
  %v777 = vand.u32 %v36, 4294901760
  %v778 = vsub.f32 %v36, %v777
  %v779 = vand.u32 %v778, 4294901760
  %780 = vmatpush.msra.mxu0 %v779
  %v781 = vand.u32 %v35, 4294901760
  %v782 = vsub.f32 %v35, %v781
  %v783 = vand.u32 %v782, 4294901760
  %784 = vmatpush.msra.mxu0 %v783
  %v785 = vand.u32 %v580, 4294901760
  %786 = vmatmul.f32.gmra.mxu0 %v785
  %v787 = vpop.f32.mrf.mxu0
  %v788 = vadd.f32 %v743, %v787
  %789 = vdwg.mxu0
  %790 = vmatpush.msra.mxu0 0.0
  %791 = vmatpush.msra.mxu0 0.0
  %792 = vmatpush.msra.mxu0 0.0
  %793 = vmatpush.msra.mxu0 0.0
  %794 = vmatpush.msra.mxu0 0.0
  %795 = vmatpush.msra.mxu0 0.0
  %796 = vmatpush.msra.mxu0 0.0
  %797 = vmatpush.msra.mxu0 0.0
  %v798 = vand.u32 %v42, 4294901760
  %799 = vmatpush.msra.mxu0 %v798
  %v800 = vand.u32 %v41, 4294901760
  %801 = vmatpush.msra.mxu0 %v800
  %v802 = vand.u32 %v40, 4294901760
  %803 = vmatpush.msra.mxu0 %v802
  %v804 = vand.u32 %v39, 4294901760
  %805 = vmatpush.msra.mxu0 %v804
  %v806 = vand.u32 %v38, 4294901760
  %807 = vmatpush.msra.mxu0 %v806
  %v808 = vand.u32 %v37, 4294901760
  %809 = vmatpush.msra.mxu0 %v808
  %v810 = vand.u32 %v36, 4294901760
  %811 = vmatpush.msra.mxu0 %v810
  %v812 = vand.u32 %v35, 4294901760
  %813 = vmatpush.msra.mxu0 %v812
  %v814 = vand.u32 %v580, 4294901760
  %815 = vmatmul.f32.gmra.mxu0 %v814
  %v816 = vpop.f32.mrf.mxu0
  %v817 = vadd.f32 %v788, %v816
  %818 = vdwg.mxu0
  %v820 = vsel %vm338, %v336, 0
  %822 = vmatpush.msra.mxu0 0.0
  %823 = vmatpush.msra.mxu0 0.0
  %824 = vmatpush.msra.mxu0 0.0
  %825 = vmatpush.msra.mxu0 0.0
  %826 = vmatpush.msra.mxu0 0.0
  %827 = vmatpush.msra.mxu0 0.0
  %828 = vmatpush.msra.mxu0 0.0
  %829 = vmatpush.msra.mxu0 0.0
  %v830 = vand.u32 %v60, 4294901760
  %831 = vmatpush.msra.mxu0 %v830
  %v832 = vand.u32 %v59, 4294901760
  %833 = vmatpush.msra.mxu0 %v832
  %v834 = vand.u32 %v58, 4294901760
  %835 = vmatpush.msra.mxu0 %v834
  %v836 = vand.u32 %v57, 4294901760
  %837 = vmatpush.msra.mxu0 %v836
  %v838 = vand.u32 %v56, 4294901760
  %839 = vmatpush.msra.mxu0 %v838
  %v840 = vand.u32 %v55, 4294901760
  %841 = vmatpush.msra.mxu0 %v840
  %v842 = vand.u32 %v54, 4294901760
  %843 = vmatpush.msra.mxu0 %v842
  %v844 = vand.u32 %v53, 4294901760
  %845 = vmatpush.msra.mxu0 %v844
  %v846 = vand.u32 %v820, 4294901760
  %v847 = vsub.f32 %v820, %v846
  %v848 = vand.u32 %v847, 4294901760
  %v849 = vsub.f32 %v847, %v848
  %v850 = vand.u32 %v849, 4294901760
  %851 = vmatmul.f32.gmra.mxu0 %v850
  %v852 = vpop.f32.mrf.mxu0
  %v853 = vadd.f32 0.0, %v852
  %854 = vdwg.mxu0
  %855 = vmatpush.msra.mxu0 0.0
  %856 = vmatpush.msra.mxu0 0.0
  %857 = vmatpush.msra.mxu0 0.0
  %858 = vmatpush.msra.mxu0 0.0
  %859 = vmatpush.msra.mxu0 0.0
  %860 = vmatpush.msra.mxu0 0.0
  %861 = vmatpush.msra.mxu0 0.0
  %862 = vmatpush.msra.mxu0 0.0
  %v863 = vand.u32 %v60, 4294901760
  %v864 = vsub.f32 %v60, %v863
  %v865 = vand.u32 %v864, 4294901760
  %v866 = vsub.f32 %v864, %v865
  %v867 = vand.u32 %v866, 4294901760
  %868 = vmatpush.msra.mxu0 %v867
  %v869 = vand.u32 %v59, 4294901760
  %v870 = vsub.f32 %v59, %v869
  %v871 = vand.u32 %v870, 4294901760
  %v872 = vsub.f32 %v870, %v871
  %v873 = vand.u32 %v872, 4294901760
  %874 = vmatpush.msra.mxu0 %v873
  %v875 = vand.u32 %v58, 4294901760
  %v876 = vsub.f32 %v58, %v875
  %v877 = vand.u32 %v876, 4294901760
  %v878 = vsub.f32 %v876, %v877
  %v879 = vand.u32 %v878, 4294901760
  %880 = vmatpush.msra.mxu0 %v879
  %v881 = vand.u32 %v57, 4294901760
  %v882 = vsub.f32 %v57, %v881
  %v883 = vand.u32 %v882, 4294901760
  %v884 = vsub.f32 %v882, %v883
  %v885 = vand.u32 %v884, 4294901760
  %886 = vmatpush.msra.mxu0 %v885
  %v887 = vand.u32 %v56, 4294901760
  %v888 = vsub.f32 %v56, %v887
  %v889 = vand.u32 %v888, 4294901760
  %v890 = vsub.f32 %v888, %v889
  %v891 = vand.u32 %v890, 4294901760
  %892 = vmatpush.msra.mxu0 %v891
  %v893 = vand.u32 %v55, 4294901760
  %v894 = vsub.f32 %v55, %v893
  %v895 = vand.u32 %v894, 4294901760
  %v896 = vsub.f32 %v894, %v895
  %v897 = vand.u32 %v896, 4294901760
  %898 = vmatpush.msra.mxu0 %v897
  %v899 = vand.u32 %v54, 4294901760
  %v900 = vsub.f32 %v54, %v899
  %v901 = vand.u32 %v900, 4294901760
  %v902 = vsub.f32 %v900, %v901
  %v903 = vand.u32 %v902, 4294901760
  %904 = vmatpush.msra.mxu0 %v903
  %v905 = vand.u32 %v53, 4294901760
  %v906 = vsub.f32 %v53, %v905
  %v907 = vand.u32 %v906, 4294901760
  %v908 = vsub.f32 %v906, %v907
  %v909 = vand.u32 %v908, 4294901760
  %910 = vmatpush.msra.mxu0 %v909
  %v911 = vand.u32 %v820, 4294901760
  %912 = vmatmul.f32.gmra.mxu0 %v911
  %v913 = vpop.f32.mrf.mxu0
  %v914 = vadd.f32 %v853, %v913
  %915 = vdwg.mxu0
  %916 = vmatpush.msra.mxu0 0.0
  %917 = vmatpush.msra.mxu0 0.0
  %918 = vmatpush.msra.mxu0 0.0
  %919 = vmatpush.msra.mxu0 0.0
  %920 = vmatpush.msra.mxu0 0.0
  %921 = vmatpush.msra.mxu0 0.0
  %922 = vmatpush.msra.mxu0 0.0
  %923 = vmatpush.msra.mxu0 0.0
  %v924 = vand.u32 %v60, 4294901760
  %v925 = vsub.f32 %v60, %v924
  %926 = vmatpush.msra.mxu0 %v925
  %v927 = vand.u32 %v59, 4294901760
  %v928 = vsub.f32 %v59, %v927
  %929 = vmatpush.msra.mxu0 %v928
  %v930 = vand.u32 %v58, 4294901760
  %v931 = vsub.f32 %v58, %v930
  %932 = vmatpush.msra.mxu0 %v931
  %v933 = vand.u32 %v57, 4294901760
  %v934 = vsub.f32 %v57, %v933
  %935 = vmatpush.msra.mxu0 %v934
  %v936 = vand.u32 %v56, 4294901760
  %v937 = vsub.f32 %v56, %v936
  %938 = vmatpush.msra.mxu0 %v937
  %v939 = vand.u32 %v55, 4294901760
  %v940 = vsub.f32 %v55, %v939
  %941 = vmatpush.msra.mxu0 %v940
  %v942 = vand.u32 %v54, 4294901760
  %v943 = vsub.f32 %v54, %v942
  %944 = vmatpush.msra.mxu0 %v943
  %v945 = vand.u32 %v53, 4294901760
  %v946 = vsub.f32 %v53, %v945
  %947 = vmatpush.msra.mxu0 %v946
  %v948 = vand.u32 %v820, 4294901760
  %v949 = vsub.f32 %v820, %v948
  %950 = vmatmul.f32.gmra.mxu0 %v949
  %v951 = vpop.f32.mrf.mxu0
  %v952 = vadd.f32 %v914, %v951
  %953 = vdwg.mxu0
  %954 = vmatpush.msra.mxu0 0.0
  %955 = vmatpush.msra.mxu0 0.0
  %956 = vmatpush.msra.mxu0 0.0
  %957 = vmatpush.msra.mxu0 0.0
  %958 = vmatpush.msra.mxu0 0.0
  %959 = vmatpush.msra.mxu0 0.0
  %960 = vmatpush.msra.mxu0 0.0
  %961 = vmatpush.msra.mxu0 0.0
  %v962 = vand.u32 %v60, 4294901760
  %963 = vmatpush.msra.mxu0 %v962
  %v964 = vand.u32 %v59, 4294901760
  %965 = vmatpush.msra.mxu0 %v964
  %v966 = vand.u32 %v58, 4294901760
  %967 = vmatpush.msra.mxu0 %v966
  %v968 = vand.u32 %v57, 4294901760
  %969 = vmatpush.msra.mxu0 %v968
  %v970 = vand.u32 %v56, 4294901760
  %971 = vmatpush.msra.mxu0 %v970
  %v972 = vand.u32 %v55, 4294901760
  %973 = vmatpush.msra.mxu0 %v972
  %v974 = vand.u32 %v54, 4294901760
  %975 = vmatpush.msra.mxu0 %v974
  %v976 = vand.u32 %v53, 4294901760
  %977 = vmatpush.msra.mxu0 %v976
  %v978 = vand.u32 %v820, 4294901760
  %v979 = vsub.f32 %v820, %v978
  %v980 = vand.u32 %v979, 4294901760
  %981 = vmatmul.f32.gmra.mxu0 %v980
  %v982 = vpop.f32.mrf.mxu0
  %v983 = vadd.f32 %v952, %v982
  %984 = vdwg.mxu0
  %985 = vmatpush.msra.mxu0 0.0
  %986 = vmatpush.msra.mxu0 0.0
  %987 = vmatpush.msra.mxu0 0.0
  %988 = vmatpush.msra.mxu0 0.0
  %989 = vmatpush.msra.mxu0 0.0
  %990 = vmatpush.msra.mxu0 0.0
  %991 = vmatpush.msra.mxu0 0.0
  %992 = vmatpush.msra.mxu0 0.0
  %v993 = vand.u32 %v60, 4294901760
  %v994 = vsub.f32 %v60, %v993
  %v995 = vand.u32 %v994, 4294901760
  %996 = vmatpush.msra.mxu0 %v995
  %v997 = vand.u32 %v59, 4294901760
  %v998 = vsub.f32 %v59, %v997
  %v999 = vand.u32 %v998, 4294901760
  %1000 = vmatpush.msra.mxu0 %v999
  %v1001 = vand.u32 %v58, 4294901760
  %v1002 = vsub.f32 %v58, %v1001
  %v1003 = vand.u32 %v1002, 4294901760
  %1004 = vmatpush.msra.mxu0 %v1003
  %v1005 = vand.u32 %v57, 4294901760
  %v1006 = vsub.f32 %v57, %v1005
  %v1007 = vand.u32 %v1006, 4294901760
  %1008 = vmatpush.msra.mxu0 %v1007
  %v1009 = vand.u32 %v56, 4294901760
  %v1010 = vsub.f32 %v56, %v1009
  %v1011 = vand.u32 %v1010, 4294901760
  %1012 = vmatpush.msra.mxu0 %v1011
  %v1013 = vand.u32 %v55, 4294901760
  %v1014 = vsub.f32 %v55, %v1013
  %v1015 = vand.u32 %v1014, 4294901760
  %1016 = vmatpush.msra.mxu0 %v1015
  %v1017 = vand.u32 %v54, 4294901760
  %v1018 = vsub.f32 %v54, %v1017
  %v1019 = vand.u32 %v1018, 4294901760
  %1020 = vmatpush.msra.mxu0 %v1019
  %v1021 = vand.u32 %v53, 4294901760
  %v1022 = vsub.f32 %v53, %v1021
  %v1023 = vand.u32 %v1022, 4294901760
  %1024 = vmatpush.msra.mxu0 %v1023
  %v1025 = vand.u32 %v820, 4294901760
  %1026 = vmatmul.f32.gmra.mxu0 %v1025
  %v1027 = vpop.f32.mrf.mxu0
  %v1028 = vadd.f32 %v983, %v1027
  %1029 = vdwg.mxu0
  %1030 = vmatpush.msra.mxu0 0.0
  %1031 = vmatpush.msra.mxu0 0.0
  %1032 = vmatpush.msra.mxu0 0.0
  %1033 = vmatpush.msra.mxu0 0.0
  %1034 = vmatpush.msra.mxu0 0.0
  %1035 = vmatpush.msra.mxu0 0.0
  %1036 = vmatpush.msra.mxu0 0.0
  %1037 = vmatpush.msra.mxu0 0.0
  %v1038 = vand.u32 %v60, 4294901760
  %1039 = vmatpush.msra.mxu0 %v1038
  %v1040 = vand.u32 %v59, 4294901760
  %1041 = vmatpush.msra.mxu0 %v1040
  %v1042 = vand.u32 %v58, 4294901760
  %1043 = vmatpush.msra.mxu0 %v1042
  %v1044 = vand.u32 %v57, 4294901760
  %1045 = vmatpush.msra.mxu0 %v1044
  %v1046 = vand.u32 %v56, 4294901760
  %1047 = vmatpush.msra.mxu0 %v1046
  %v1048 = vand.u32 %v55, 4294901760
  %1049 = vmatpush.msra.mxu0 %v1048
  %v1050 = vand.u32 %v54, 4294901760
  %1051 = vmatpush.msra.mxu0 %v1050
  %v1052 = vand.u32 %v53, 4294901760
  %1053 = vmatpush.msra.mxu0 %v1052
  %v1054 = vand.u32 %v820, 4294901760
  %1055 = vmatmul.f32.gmra.mxu0 %v1054
  %v1056 = vpop.f32.mrf.mxu0
  %v1057 = vadd.f32 %v1028, %v1056
  %1058 = vdwg.mxu0
  %v1059 = vadd.f32 %v817, %v1057
  %v1061 = vperm.slane %v95, 0
  %v1064 = vsel %vm338, %v105, 0
  %v1067 = vsel %vm338, %v106, 0
  %1069 = vmatpush.msra.mxu0 0.0
  %1070 = vmatpush.msra.mxu0 0.0
  %1071 = vmatpush.msra.mxu0 0.0
  %1072 = vmatpush.msra.mxu0 0.0
  %1073 = vmatpush.msra.mxu0 0.0
  %1074 = vmatpush.msra.mxu0 0.0
  %1075 = vmatpush.msra.mxu0 0.0
  %1076 = vmatpush.msra.mxu0 0.0
  %v1077 = vand.u32 %v94, 4294901760
  %1078 = vmatpush.msra.mxu0 %v1077
  %v1079 = vand.u32 %v93, 4294901760
  %1080 = vmatpush.msra.mxu0 %v1079
  %v1081 = vand.u32 %v92, 4294901760
  %1082 = vmatpush.msra.mxu0 %v1081
  %v1083 = vand.u32 %v91, 4294901760
  %1084 = vmatpush.msra.mxu0 %v1083
  %v1085 = vand.u32 %v90, 4294901760
  %1086 = vmatpush.msra.mxu0 %v1085
  %v1087 = vand.u32 %v89, 4294901760
  %1088 = vmatpush.msra.mxu0 %v1087
  %v1089 = vand.u32 %v88, 4294901760
  %1090 = vmatpush.msra.mxu0 %v1089
  %v1091 = vand.u32 %v87, 4294901760
  %1092 = vmatpush.msra.mxu0 %v1091
  %v1093 = vand.u32 %v1064, 4294901760
  %v1094 = vsub.f32 %v1064, %v1093
  %v1095 = vand.u32 %v1094, 4294901760
  %v1096 = vsub.f32 %v1094, %v1095
  %v1097 = vand.u32 %v1096, 4294901760
  %1098 = vmatmul.f32.gmra.mxu0 %v1097
  %v1099 = vpop.f32.mrf.mxu0
  %v1100 = vadd.f32 %v1061, %v1099
  %v1101 = vand.u32 %v1067, 4294901760
  %v1102 = vsub.f32 %v1067, %v1101
  %v1103 = vand.u32 %v1102, 4294901760
  %v1104 = vsub.f32 %v1102, %v1103
  %v1105 = vand.u32 %v1104, 4294901760
  %1106 = vmatmul.f32.gmra.mxu0 %v1105
  %v1107 = vpop.f32.mrf.mxu0
  %v1108 = vadd.f32 %v1061, %v1107
  %1109 = vdwg.mxu0
  %1110 = vmatpush.msra.mxu0 0.0
  %1111 = vmatpush.msra.mxu0 0.0
  %1112 = vmatpush.msra.mxu0 0.0
  %1113 = vmatpush.msra.mxu0 0.0
  %1114 = vmatpush.msra.mxu0 0.0
  %1115 = vmatpush.msra.mxu0 0.0
  %1116 = vmatpush.msra.mxu0 0.0
  %1117 = vmatpush.msra.mxu0 0.0
  %v1118 = vand.u32 %v94, 4294901760
  %v1119 = vsub.f32 %v94, %v1118
  %v1120 = vand.u32 %v1119, 4294901760
  %v1121 = vsub.f32 %v1119, %v1120
  %v1122 = vand.u32 %v1121, 4294901760
  %1123 = vmatpush.msra.mxu0 %v1122
  %v1124 = vand.u32 %v93, 4294901760
  %v1125 = vsub.f32 %v93, %v1124
  %v1126 = vand.u32 %v1125, 4294901760
  %v1127 = vsub.f32 %v1125, %v1126
  %v1128 = vand.u32 %v1127, 4294901760
  %1129 = vmatpush.msra.mxu0 %v1128
  %v1130 = vand.u32 %v92, 4294901760
  %v1131 = vsub.f32 %v92, %v1130
  %v1132 = vand.u32 %v1131, 4294901760
  %v1133 = vsub.f32 %v1131, %v1132
  %v1134 = vand.u32 %v1133, 4294901760
  %1135 = vmatpush.msra.mxu0 %v1134
  %v1136 = vand.u32 %v91, 4294901760
  %v1137 = vsub.f32 %v91, %v1136
  %v1138 = vand.u32 %v1137, 4294901760
  %v1139 = vsub.f32 %v1137, %v1138
  %v1140 = vand.u32 %v1139, 4294901760
  %1141 = vmatpush.msra.mxu0 %v1140
  %v1142 = vand.u32 %v90, 4294901760
  %v1143 = vsub.f32 %v90, %v1142
  %v1144 = vand.u32 %v1143, 4294901760
  %v1145 = vsub.f32 %v1143, %v1144
  %v1146 = vand.u32 %v1145, 4294901760
  %1147 = vmatpush.msra.mxu0 %v1146
  %v1148 = vand.u32 %v89, 4294901760
  %v1149 = vsub.f32 %v89, %v1148
  %v1150 = vand.u32 %v1149, 4294901760
  %v1151 = vsub.f32 %v1149, %v1150
  %v1152 = vand.u32 %v1151, 4294901760
  %1153 = vmatpush.msra.mxu0 %v1152
  %v1154 = vand.u32 %v88, 4294901760
  %v1155 = vsub.f32 %v88, %v1154
  %v1156 = vand.u32 %v1155, 4294901760
  %v1157 = vsub.f32 %v1155, %v1156
  %v1158 = vand.u32 %v1157, 4294901760
  %1159 = vmatpush.msra.mxu0 %v1158
  %v1160 = vand.u32 %v87, 4294901760
  %v1161 = vsub.f32 %v87, %v1160
  %v1162 = vand.u32 %v1161, 4294901760
  %v1163 = vsub.f32 %v1161, %v1162
  %v1164 = vand.u32 %v1163, 4294901760
  %1165 = vmatpush.msra.mxu0 %v1164
  %v1166 = vand.u32 %v1064, 4294901760
  %1167 = vmatmul.f32.gmra.mxu0 %v1166
  %v1168 = vpop.f32.mrf.mxu0
  %v1169 = vadd.f32 %v1100, %v1168
  %v1170 = vand.u32 %v1067, 4294901760
  %1171 = vmatmul.f32.gmra.mxu0 %v1170
  %v1172 = vpop.f32.mrf.mxu0
  %v1173 = vadd.f32 %v1108, %v1172
  %1174 = vdwg.mxu0
  %1175 = vmatpush.msra.mxu0 0.0
  %1176 = vmatpush.msra.mxu0 0.0
  %1177 = vmatpush.msra.mxu0 0.0
  %1178 = vmatpush.msra.mxu0 0.0
  %1179 = vmatpush.msra.mxu0 0.0
  %1180 = vmatpush.msra.mxu0 0.0
  %1181 = vmatpush.msra.mxu0 0.0
  %1182 = vmatpush.msra.mxu0 0.0
  %v1183 = vand.u32 %v94, 4294901760
  %v1184 = vsub.f32 %v94, %v1183
  %1185 = vmatpush.msra.mxu0 %v1184
  %v1186 = vand.u32 %v93, 4294901760
  %v1187 = vsub.f32 %v93, %v1186
  %1188 = vmatpush.msra.mxu0 %v1187
  %v1189 = vand.u32 %v92, 4294901760
  %v1190 = vsub.f32 %v92, %v1189
  %1191 = vmatpush.msra.mxu0 %v1190
  %v1192 = vand.u32 %v91, 4294901760
  %v1193 = vsub.f32 %v91, %v1192
  %1194 = vmatpush.msra.mxu0 %v1193
  %v1195 = vand.u32 %v90, 4294901760
  %v1196 = vsub.f32 %v90, %v1195
  %1197 = vmatpush.msra.mxu0 %v1196
  %v1198 = vand.u32 %v89, 4294901760
  %v1199 = vsub.f32 %v89, %v1198
  %1200 = vmatpush.msra.mxu0 %v1199
  %v1201 = vand.u32 %v88, 4294901760
  %v1202 = vsub.f32 %v88, %v1201
  %1203 = vmatpush.msra.mxu0 %v1202
  %v1204 = vand.u32 %v87, 4294901760
  %v1205 = vsub.f32 %v87, %v1204
  %1206 = vmatpush.msra.mxu0 %v1205
  %v1207 = vand.u32 %v1064, 4294901760
  %v1208 = vsub.f32 %v1064, %v1207
  %1209 = vmatmul.f32.gmra.mxu0 %v1208
  %v1210 = vpop.f32.mrf.mxu0
  %v1211 = vadd.f32 %v1169, %v1210
  %v1212 = vand.u32 %v1067, 4294901760
  %v1213 = vsub.f32 %v1067, %v1212
  %1214 = vmatmul.f32.gmra.mxu0 %v1213
  %v1215 = vpop.f32.mrf.mxu0
  %v1216 = vadd.f32 %v1173, %v1215
  %1217 = vdwg.mxu0
  %1218 = vmatpush.msra.mxu0 0.0
  %1219 = vmatpush.msra.mxu0 0.0
  %1220 = vmatpush.msra.mxu0 0.0
  %1221 = vmatpush.msra.mxu0 0.0
  %1222 = vmatpush.msra.mxu0 0.0
  %1223 = vmatpush.msra.mxu0 0.0
  %1224 = vmatpush.msra.mxu0 0.0
  %1225 = vmatpush.msra.mxu0 0.0
  %v1226 = vand.u32 %v94, 4294901760
  %1227 = vmatpush.msra.mxu0 %v1226
  %v1228 = vand.u32 %v93, 4294901760
  %1229 = vmatpush.msra.mxu0 %v1228
  %v1230 = vand.u32 %v92, 4294901760
  %1231 = vmatpush.msra.mxu0 %v1230
  %v1232 = vand.u32 %v91, 4294901760
  %1233 = vmatpush.msra.mxu0 %v1232
  %v1234 = vand.u32 %v90, 4294901760
  %1235 = vmatpush.msra.mxu0 %v1234
  %v1236 = vand.u32 %v89, 4294901760
  %1237 = vmatpush.msra.mxu0 %v1236
  %v1238 = vand.u32 %v88, 4294901760
  %1239 = vmatpush.msra.mxu0 %v1238
  %v1240 = vand.u32 %v87, 4294901760
  %1241 = vmatpush.msra.mxu0 %v1240
  %v1242 = vand.u32 %v1064, 4294901760
  %v1243 = vsub.f32 %v1064, %v1242
  %v1244 = vand.u32 %v1243, 4294901760
  %1245 = vmatmul.f32.gmra.mxu0 %v1244
  %v1246 = vpop.f32.mrf.mxu0
  %v1247 = vadd.f32 %v1211, %v1246
  %v1248 = vand.u32 %v1067, 4294901760
  %v1249 = vsub.f32 %v1067, %v1248
  %v1250 = vand.u32 %v1249, 4294901760
  %1251 = vmatmul.f32.gmra.mxu0 %v1250
  %v1252 = vpop.f32.mrf.mxu0
  %v1253 = vadd.f32 %v1216, %v1252
  %1254 = vdwg.mxu0
  %1255 = vmatpush.msra.mxu0 0.0
  %1256 = vmatpush.msra.mxu0 0.0
  %1257 = vmatpush.msra.mxu0 0.0
  %1258 = vmatpush.msra.mxu0 0.0
  %1259 = vmatpush.msra.mxu0 0.0
  %1260 = vmatpush.msra.mxu0 0.0
  %1261 = vmatpush.msra.mxu0 0.0
  %1262 = vmatpush.msra.mxu0 0.0
  %v1263 = vand.u32 %v94, 4294901760
  %v1264 = vsub.f32 %v94, %v1263
  %v1265 = vand.u32 %v1264, 4294901760
  %1266 = vmatpush.msra.mxu0 %v1265
  %v1267 = vand.u32 %v93, 4294901760
  %v1268 = vsub.f32 %v93, %v1267
  %v1269 = vand.u32 %v1268, 4294901760
  %1270 = vmatpush.msra.mxu0 %v1269
  %v1271 = vand.u32 %v92, 4294901760
  %v1272 = vsub.f32 %v92, %v1271
  %v1273 = vand.u32 %v1272, 4294901760
  %1274 = vmatpush.msra.mxu0 %v1273
  %v1275 = vand.u32 %v91, 4294901760
  %v1276 = vsub.f32 %v91, %v1275
  %v1277 = vand.u32 %v1276, 4294901760
  %1278 = vmatpush.msra.mxu0 %v1277
  %v1279 = vand.u32 %v90, 4294901760
  %v1280 = vsub.f32 %v90, %v1279
  %v1281 = vand.u32 %v1280, 4294901760
  %1282 = vmatpush.msra.mxu0 %v1281
  %v1283 = vand.u32 %v89, 4294901760
  %v1284 = vsub.f32 %v89, %v1283
  %v1285 = vand.u32 %v1284, 4294901760
  %1286 = vmatpush.msra.mxu0 %v1285
  %v1287 = vand.u32 %v88, 4294901760
  %v1288 = vsub.f32 %v88, %v1287
  %v1289 = vand.u32 %v1288, 4294901760
  %1290 = vmatpush.msra.mxu0 %v1289
  %v1291 = vand.u32 %v87, 4294901760
  %v1292 = vsub.f32 %v87, %v1291
  %v1293 = vand.u32 %v1292, 4294901760
  %1294 = vmatpush.msra.mxu0 %v1293
  %v1295 = vand.u32 %v1064, 4294901760
  %1296 = vmatmul.f32.gmra.mxu0 %v1295
  %v1297 = vpop.f32.mrf.mxu0
  %v1298 = vadd.f32 %v1247, %v1297
  %v1299 = vand.u32 %v1067, 4294901760
  %1300 = vmatmul.f32.gmra.mxu0 %v1299
  %v1301 = vpop.f32.mrf.mxu0
  %v1302 = vadd.f32 %v1253, %v1301
  %1303 = vdwg.mxu0
  %1304 = vmatpush.msra.mxu0 0.0
  %1305 = vmatpush.msra.mxu0 0.0
  %1306 = vmatpush.msra.mxu0 0.0
  %1307 = vmatpush.msra.mxu0 0.0
  %1308 = vmatpush.msra.mxu0 0.0
  %1309 = vmatpush.msra.mxu0 0.0
  %1310 = vmatpush.msra.mxu0 0.0
  %1311 = vmatpush.msra.mxu0 0.0
  %v1312 = vand.u32 %v94, 4294901760
  %1313 = vmatpush.msra.mxu0 %v1312
  %v1314 = vand.u32 %v93, 4294901760
  %1315 = vmatpush.msra.mxu0 %v1314
  %v1316 = vand.u32 %v92, 4294901760
  %1317 = vmatpush.msra.mxu0 %v1316
  %v1318 = vand.u32 %v91, 4294901760
  %1319 = vmatpush.msra.mxu0 %v1318
  %v1320 = vand.u32 %v90, 4294901760
  %1321 = vmatpush.msra.mxu0 %v1320
  %v1322 = vand.u32 %v89, 4294901760
  %1323 = vmatpush.msra.mxu0 %v1322
  %v1324 = vand.u32 %v88, 4294901760
  %1325 = vmatpush.msra.mxu0 %v1324
  %v1326 = vand.u32 %v87, 4294901760
  %1327 = vmatpush.msra.mxu0 %v1326
  %v1328 = vand.u32 %v1064, 4294901760
  %1329 = vmatmul.f32.gmra.mxu0 %v1328
  %v1330 = vpop.f32.mrf.mxu0
  %v1331 = vadd.f32 %v1298, %v1330
  %v1332 = vand.u32 %v1067, 4294901760
  %1333 = vmatmul.f32.gmra.mxu0 %v1332
  %v1334 = vpop.f32.mrf.mxu0
  %v1335 = vadd.f32 %v1302, %v1334
  %1336 = vdwg.mxu0
  %v1337 = vmax.f32 %v1331, 0.0
  %v1338 = vmax.f32 %v1335, 0.0
  %1339 = vmatpush.msra.mxu0 0.0
  %1340 = vmatpush.msra.mxu0 0.0
  %1341 = vmatpush.msra.mxu0 0.0
  %1342 = vmatpush.msra.mxu0 0.0
  %1343 = vmatpush.msra.mxu0 0.0
  %1344 = vmatpush.msra.mxu0 0.0
  %1345 = vmatpush.msra.mxu0 0.0
  %1346 = vmatpush.msra.mxu0 0.0
  %1347 = vmatpush.msra.mxu0 0.0
  %1348 = vmatpush.msra.mxu0 0.0
  %1349 = vmatpush.msra.mxu0 0.0
  %1350 = vmatpush.msra.mxu0 0.0
  %1351 = vmatpush.msra.mxu0 0.0
  %1352 = vmatpush.msra.mxu0 0.0
  %v1353 = vand.u32 %v1338, 4294901760
  %1354 = vmatpush.msra.mxu0 %v1353
  %v1355 = vand.u32 %v1337, 4294901760
  %1356 = vmatpush.msra.mxu0 %v1355
  %v1357 = vand.u32 %v109, 4294901760
  %v1358 = vsub.f32 %v109, %v1357
  %v1359 = vand.u32 %v1358, 4294901760
  %v1360 = vsub.f32 %v1358, %v1359
  %v1361 = vand.u32 %v1360, 4294901760
  %1362 = vmatmul.f32.gmra.mxu0 %v1361
  %v1363 = vpop.f32.mrf.mxu0
  %v1364 = vadd.f32 0.0, %v1363
  %v1365 = vand.u32 %v112, 4294901760
  %v1366 = vsub.f32 %v112, %v1365
  %v1367 = vand.u32 %v1366, 4294901760
  %v1368 = vsub.f32 %v1366, %v1367
  %v1369 = vand.u32 %v1368, 4294901760
  %1370 = vmatmul.f32.gmra.mxu0 %v1369
  %v1371 = vpop.f32.mrf.mxu0
  %v1372 = vadd.f32 0.0, %v1371
  %v1373 = vand.u32 %v115, 4294901760
  %v1374 = vsub.f32 %v115, %v1373
  %v1375 = vand.u32 %v1374, 4294901760
  %v1376 = vsub.f32 %v1374, %v1375
  %v1377 = vand.u32 %v1376, 4294901760
  %1378 = vmatmul.f32.gmra.mxu0 %v1377
  %v1379 = vpop.f32.mrf.mxu0
  %v1380 = vadd.f32 0.0, %v1379
  %1381 = vdwg.mxu0
  %1382 = vmatpush.msra.mxu0 0.0
  %1383 = vmatpush.msra.mxu0 0.0
  %1384 = vmatpush.msra.mxu0 0.0
  %1385 = vmatpush.msra.mxu0 0.0
  %1386 = vmatpush.msra.mxu0 0.0
  %1387 = vmatpush.msra.mxu0 0.0
  %1388 = vmatpush.msra.mxu0 0.0
  %1389 = vmatpush.msra.mxu0 0.0
  %1390 = vmatpush.msra.mxu0 0.0
  %1391 = vmatpush.msra.mxu0 0.0
  %1392 = vmatpush.msra.mxu0 0.0
  %1393 = vmatpush.msra.mxu0 0.0
  %1394 = vmatpush.msra.mxu0 0.0
  %1395 = vmatpush.msra.mxu0 0.0
  %v1396 = vand.u32 %v1338, 4294901760
  %v1397 = vsub.f32 %v1338, %v1396
  %v1398 = vand.u32 %v1397, 4294901760
  %v1399 = vsub.f32 %v1397, %v1398
  %v1400 = vand.u32 %v1399, 4294901760
  %1401 = vmatpush.msra.mxu0 %v1400
  %v1402 = vand.u32 %v1337, 4294901760
  %v1403 = vsub.f32 %v1337, %v1402
  %v1404 = vand.u32 %v1403, 4294901760
  %v1405 = vsub.f32 %v1403, %v1404
  %v1406 = vand.u32 %v1405, 4294901760
  %1407 = vmatpush.msra.mxu0 %v1406
  %v1408 = vand.u32 %v109, 4294901760
  %1409 = vmatmul.f32.gmra.mxu0 %v1408
  %v1410 = vpop.f32.mrf.mxu0
  %v1411 = vadd.f32 %v1364, %v1410
  %v1412 = vand.u32 %v112, 4294901760
  %1413 = vmatmul.f32.gmra.mxu0 %v1412
  %v1414 = vpop.f32.mrf.mxu0
  %v1415 = vadd.f32 %v1372, %v1414
  %v1416 = vand.u32 %v115, 4294901760
  %1417 = vmatmul.f32.gmra.mxu0 %v1416
  %v1418 = vpop.f32.mrf.mxu0
  %v1419 = vadd.f32 %v1380, %v1418
  %1420 = vdwg.mxu0
  %1421 = vmatpush.msra.mxu0 0.0
  %1422 = vmatpush.msra.mxu0 0.0
  %1423 = vmatpush.msra.mxu0 0.0
  %1424 = vmatpush.msra.mxu0 0.0
  %1425 = vmatpush.msra.mxu0 0.0
  %1426 = vmatpush.msra.mxu0 0.0
  %1427 = vmatpush.msra.mxu0 0.0
  %1428 = vmatpush.msra.mxu0 0.0
  %1429 = vmatpush.msra.mxu0 0.0
  %1430 = vmatpush.msra.mxu0 0.0
  %1431 = vmatpush.msra.mxu0 0.0
  %1432 = vmatpush.msra.mxu0 0.0
  %1433 = vmatpush.msra.mxu0 0.0
  %1434 = vmatpush.msra.mxu0 0.0
  %v1435 = vand.u32 %v1338, 4294901760
  %v1436 = vsub.f32 %v1338, %v1435
  %1437 = vmatpush.msra.mxu0 %v1436
  %v1438 = vand.u32 %v1337, 4294901760
  %v1439 = vsub.f32 %v1337, %v1438
  %1440 = vmatpush.msra.mxu0 %v1439
  %v1441 = vand.u32 %v109, 4294901760
  %v1442 = vsub.f32 %v109, %v1441
  %1443 = vmatmul.f32.gmra.mxu0 %v1442
  %v1444 = vpop.f32.mrf.mxu0
  %v1445 = vadd.f32 %v1411, %v1444
  %v1446 = vand.u32 %v112, 4294901760
  %v1447 = vsub.f32 %v112, %v1446
  %1448 = vmatmul.f32.gmra.mxu0 %v1447
  %v1449 = vpop.f32.mrf.mxu0
  %v1450 = vadd.f32 %v1415, %v1449
  %v1451 = vand.u32 %v115, 4294901760
  %v1452 = vsub.f32 %v115, %v1451
  %1453 = vmatmul.f32.gmra.mxu0 %v1452
  %v1454 = vpop.f32.mrf.mxu0
  %v1455 = vadd.f32 %v1419, %v1454
  %1456 = vdwg.mxu0
  %1457 = vmatpush.msra.mxu0 0.0
  %1458 = vmatpush.msra.mxu0 0.0
  %1459 = vmatpush.msra.mxu0 0.0
  %1460 = vmatpush.msra.mxu0 0.0
  %1461 = vmatpush.msra.mxu0 0.0
  %1462 = vmatpush.msra.mxu0 0.0
  %1463 = vmatpush.msra.mxu0 0.0
  %1464 = vmatpush.msra.mxu0 0.0
  %1465 = vmatpush.msra.mxu0 0.0
  %1466 = vmatpush.msra.mxu0 0.0
  %1467 = vmatpush.msra.mxu0 0.0
  %1468 = vmatpush.msra.mxu0 0.0
  %1469 = vmatpush.msra.mxu0 0.0
  %1470 = vmatpush.msra.mxu0 0.0
  %v1471 = vand.u32 %v1338, 4294901760
  %1472 = vmatpush.msra.mxu0 %v1471
  %v1473 = vand.u32 %v1337, 4294901760
  %1474 = vmatpush.msra.mxu0 %v1473
  %v1475 = vand.u32 %v109, 4294901760
  %v1476 = vsub.f32 %v109, %v1475
  %v1477 = vand.u32 %v1476, 4294901760
  %1478 = vmatmul.f32.gmra.mxu0 %v1477
  %v1479 = vpop.f32.mrf.mxu0
  %v1480 = vadd.f32 %v1445, %v1479
  %v1481 = vand.u32 %v112, 4294901760
  %v1482 = vsub.f32 %v112, %v1481
  %v1483 = vand.u32 %v1482, 4294901760
  %1484 = vmatmul.f32.gmra.mxu0 %v1483
  %v1485 = vpop.f32.mrf.mxu0
  %v1486 = vadd.f32 %v1450, %v1485
  %v1487 = vand.u32 %v115, 4294901760
  %v1488 = vsub.f32 %v115, %v1487
  %v1489 = vand.u32 %v1488, 4294901760
  %1490 = vmatmul.f32.gmra.mxu0 %v1489
  %v1491 = vpop.f32.mrf.mxu0
  %v1492 = vadd.f32 %v1455, %v1491
  %1493 = vdwg.mxu0
  %1494 = vmatpush.msra.mxu0 0.0
  %1495 = vmatpush.msra.mxu0 0.0
  %1496 = vmatpush.msra.mxu0 0.0
  %1497 = vmatpush.msra.mxu0 0.0
  %1498 = vmatpush.msra.mxu0 0.0
  %1499 = vmatpush.msra.mxu0 0.0
  %1500 = vmatpush.msra.mxu0 0.0
  %1501 = vmatpush.msra.mxu0 0.0
  %1502 = vmatpush.msra.mxu0 0.0
  %1503 = vmatpush.msra.mxu0 0.0
  %1504 = vmatpush.msra.mxu0 0.0
  %1505 = vmatpush.msra.mxu0 0.0
  %1506 = vmatpush.msra.mxu0 0.0
  %1507 = vmatpush.msra.mxu0 0.0
  %v1508 = vand.u32 %v1338, 4294901760
  %v1509 = vsub.f32 %v1338, %v1508
  %v1510 = vand.u32 %v1509, 4294901760
  %1511 = vmatpush.msra.mxu0 %v1510
  %v1512 = vand.u32 %v1337, 4294901760
  %v1513 = vsub.f32 %v1337, %v1512
  %v1514 = vand.u32 %v1513, 4294901760
  %1515 = vmatpush.msra.mxu0 %v1514
  %v1516 = vand.u32 %v109, 4294901760
  %1517 = vmatmul.f32.gmra.mxu0 %v1516
  %v1518 = vpop.f32.mrf.mxu0
  %v1519 = vadd.f32 %v1480, %v1518
  %v1520 = vand.u32 %v112, 4294901760
  %1521 = vmatmul.f32.gmra.mxu0 %v1520
  %v1522 = vpop.f32.mrf.mxu0
  %v1523 = vadd.f32 %v1486, %v1522
  %v1524 = vand.u32 %v115, 4294901760
  %1525 = vmatmul.f32.gmra.mxu0 %v1524
  %v1526 = vpop.f32.mrf.mxu0
  %v1527 = vadd.f32 %v1492, %v1526
  %1528 = vdwg.mxu0
  %1529 = vmatpush.msra.mxu0 0.0
  %1530 = vmatpush.msra.mxu0 0.0
  %1531 = vmatpush.msra.mxu0 0.0
  %1532 = vmatpush.msra.mxu0 0.0
  %1533 = vmatpush.msra.mxu0 0.0
  %1534 = vmatpush.msra.mxu0 0.0
  %1535 = vmatpush.msra.mxu0 0.0
  %1536 = vmatpush.msra.mxu0 0.0
  %1537 = vmatpush.msra.mxu0 0.0
  %1538 = vmatpush.msra.mxu0 0.0
  %1539 = vmatpush.msra.mxu0 0.0
  %1540 = vmatpush.msra.mxu0 0.0
  %1541 = vmatpush.msra.mxu0 0.0
  %1542 = vmatpush.msra.mxu0 0.0
  %v1543 = vand.u32 %v1338, 4294901760
  %1544 = vmatpush.msra.mxu0 %v1543
  %v1545 = vand.u32 %v1337, 4294901760
  %1546 = vmatpush.msra.mxu0 %v1545
  %v1547 = vand.u32 %v109, 4294901760
  %1548 = vmatmul.f32.gmra.mxu0 %v1547
  %v1549 = vpop.f32.mrf.mxu0
  %v1550 = vadd.f32 %v1519, %v1549
  %v1551 = vand.u32 %v112, 4294901760
  %1552 = vmatmul.f32.gmra.mxu0 %v1551
  %v1553 = vpop.f32.mrf.mxu0
  %v1554 = vadd.f32 %v1523, %v1553
  %v1555 = vand.u32 %v115, 4294901760
  %1556 = vmatmul.f32.gmra.mxu0 %v1555
  %v1557 = vpop.f32.mrf.mxu0
  %v1558 = vadd.f32 %v1527, %v1557
  %1559 = vdwg.mxu0
  %v1561 = vsel %vm338, %v1554, 0
  %1563 = vmatpush.msra.mxu0 0.0
  %1564 = vmatpush.msra.mxu0 0.0
  %1565 = vmatpush.msra.mxu0 0.0
  %1566 = vmatpush.msra.mxu0 0.0
  %1567 = vmatpush.msra.mxu0 0.0
  %1568 = vmatpush.msra.mxu0 0.0
  %1569 = vmatpush.msra.mxu0 0.0
  %1570 = vmatpush.msra.mxu0 0.0
  %v1571 = vand.u32 %v77, 4294901760
  %1572 = vmatpush.msra.mxu0 %v1571
  %v1573 = vand.u32 %v76, 4294901760
  %1574 = vmatpush.msra.mxu0 %v1573
  %v1575 = vand.u32 %v75, 4294901760
  %1576 = vmatpush.msra.mxu0 %v1575
  %v1577 = vand.u32 %v74, 4294901760
  %1578 = vmatpush.msra.mxu0 %v1577
  %v1579 = vand.u32 %v73, 4294901760
  %1580 = vmatpush.msra.mxu0 %v1579
  %v1581 = vand.u32 %v72, 4294901760
  %1582 = vmatpush.msra.mxu0 %v1581
  %v1583 = vand.u32 %v71, 4294901760
  %1584 = vmatpush.msra.mxu0 %v1583
  %v1585 = vand.u32 %v70, 4294901760
  %1586 = vmatpush.msra.mxu0 %v1585
  %v1587 = vand.u32 %v1561, 4294901760
  %v1588 = vsub.f32 %v1561, %v1587
  %v1589 = vand.u32 %v1588, 4294901760
  %v1590 = vsub.f32 %v1588, %v1589
  %v1591 = vand.u32 %v1590, 4294901760
  %1592 = vmatmul.f32.gmra.mxu0 %v1591
  %v1593 = vpop.f32.mrf.mxu0
  %v1594 = vadd.f32 0.0, %v1593
  %1595 = vdwg.mxu0
  %1596 = vmatpush.msra.mxu0 0.0
  %1597 = vmatpush.msra.mxu0 0.0
  %1598 = vmatpush.msra.mxu0 0.0
  %1599 = vmatpush.msra.mxu0 0.0
  %1600 = vmatpush.msra.mxu0 0.0
  %1601 = vmatpush.msra.mxu0 0.0
  %1602 = vmatpush.msra.mxu0 0.0
  %1603 = vmatpush.msra.mxu0 0.0
  %v1604 = vand.u32 %v77, 4294901760
  %v1605 = vsub.f32 %v77, %v1604
  %v1606 = vand.u32 %v1605, 4294901760
  %v1607 = vsub.f32 %v1605, %v1606
  %v1608 = vand.u32 %v1607, 4294901760
  %1609 = vmatpush.msra.mxu0 %v1608
  %v1610 = vand.u32 %v76, 4294901760
  %v1611 = vsub.f32 %v76, %v1610
  %v1612 = vand.u32 %v1611, 4294901760
  %v1613 = vsub.f32 %v1611, %v1612
  %v1614 = vand.u32 %v1613, 4294901760
  %1615 = vmatpush.msra.mxu0 %v1614
  %v1616 = vand.u32 %v75, 4294901760
  %v1617 = vsub.f32 %v75, %v1616
  %v1618 = vand.u32 %v1617, 4294901760
  %v1619 = vsub.f32 %v1617, %v1618
  %v1620 = vand.u32 %v1619, 4294901760
  %1621 = vmatpush.msra.mxu0 %v1620
  %v1622 = vand.u32 %v74, 4294901760
  %v1623 = vsub.f32 %v74, %v1622
  %v1624 = vand.u32 %v1623, 4294901760
  %v1625 = vsub.f32 %v1623, %v1624
  %v1626 = vand.u32 %v1625, 4294901760
  %1627 = vmatpush.msra.mxu0 %v1626
  %v1628 = vand.u32 %v73, 4294901760
  %v1629 = vsub.f32 %v73, %v1628
  %v1630 = vand.u32 %v1629, 4294901760
  %v1631 = vsub.f32 %v1629, %v1630
  %v1632 = vand.u32 %v1631, 4294901760
  %1633 = vmatpush.msra.mxu0 %v1632
  %v1634 = vand.u32 %v72, 4294901760
  %v1635 = vsub.f32 %v72, %v1634
  %v1636 = vand.u32 %v1635, 4294901760
  %v1637 = vsub.f32 %v1635, %v1636
  %v1638 = vand.u32 %v1637, 4294901760
  %1639 = vmatpush.msra.mxu0 %v1638
  %v1640 = vand.u32 %v71, 4294901760
  %v1641 = vsub.f32 %v71, %v1640
  %v1642 = vand.u32 %v1641, 4294901760
  %v1643 = vsub.f32 %v1641, %v1642
  %v1644 = vand.u32 %v1643, 4294901760
  %1645 = vmatpush.msra.mxu0 %v1644
  %v1646 = vand.u32 %v70, 4294901760
  %v1647 = vsub.f32 %v70, %v1646
  %v1648 = vand.u32 %v1647, 4294901760
  %v1649 = vsub.f32 %v1647, %v1648
  %v1650 = vand.u32 %v1649, 4294901760
  %1651 = vmatpush.msra.mxu0 %v1650
  %v1652 = vand.u32 %v1561, 4294901760
  %1653 = vmatmul.f32.gmra.mxu0 %v1652
  %v1654 = vpop.f32.mrf.mxu0
  %v1655 = vadd.f32 %v1594, %v1654
  %1656 = vdwg.mxu0
  %1657 = vmatpush.msra.mxu0 0.0
  %1658 = vmatpush.msra.mxu0 0.0
  %1659 = vmatpush.msra.mxu0 0.0
  %1660 = vmatpush.msra.mxu0 0.0
  %1661 = vmatpush.msra.mxu0 0.0
  %1662 = vmatpush.msra.mxu0 0.0
  %1663 = vmatpush.msra.mxu0 0.0
  %1664 = vmatpush.msra.mxu0 0.0
  %v1665 = vand.u32 %v77, 4294901760
  %v1666 = vsub.f32 %v77, %v1665
  %1667 = vmatpush.msra.mxu0 %v1666
  %v1668 = vand.u32 %v76, 4294901760
  %v1669 = vsub.f32 %v76, %v1668
  %1670 = vmatpush.msra.mxu0 %v1669
  %v1671 = vand.u32 %v75, 4294901760
  %v1672 = vsub.f32 %v75, %v1671
  %1673 = vmatpush.msra.mxu0 %v1672
  %v1674 = vand.u32 %v74, 4294901760
  %v1675 = vsub.f32 %v74, %v1674
  %1676 = vmatpush.msra.mxu0 %v1675
  %v1677 = vand.u32 %v73, 4294901760
  %v1678 = vsub.f32 %v73, %v1677
  %1679 = vmatpush.msra.mxu0 %v1678
  %v1680 = vand.u32 %v72, 4294901760
  %v1681 = vsub.f32 %v72, %v1680
  %1682 = vmatpush.msra.mxu0 %v1681
  %v1683 = vand.u32 %v71, 4294901760
  %v1684 = vsub.f32 %v71, %v1683
  %1685 = vmatpush.msra.mxu0 %v1684
  %v1686 = vand.u32 %v70, 4294901760
  %v1687 = vsub.f32 %v70, %v1686
  %1688 = vmatpush.msra.mxu0 %v1687
  %v1689 = vand.u32 %v1561, 4294901760
  %v1690 = vsub.f32 %v1561, %v1689
  %1691 = vmatmul.f32.gmra.mxu0 %v1690
  %v1692 = vpop.f32.mrf.mxu0
  %v1693 = vadd.f32 %v1655, %v1692
  %1694 = vdwg.mxu0
  %1695 = vmatpush.msra.mxu0 0.0
  %1696 = vmatpush.msra.mxu0 0.0
  %1697 = vmatpush.msra.mxu0 0.0
  %1698 = vmatpush.msra.mxu0 0.0
  %1699 = vmatpush.msra.mxu0 0.0
  %1700 = vmatpush.msra.mxu0 0.0
  %1701 = vmatpush.msra.mxu0 0.0
  %1702 = vmatpush.msra.mxu0 0.0
  %v1703 = vand.u32 %v77, 4294901760
  %1704 = vmatpush.msra.mxu0 %v1703
  %v1705 = vand.u32 %v76, 4294901760
  %1706 = vmatpush.msra.mxu0 %v1705
  %v1707 = vand.u32 %v75, 4294901760
  %1708 = vmatpush.msra.mxu0 %v1707
  %v1709 = vand.u32 %v74, 4294901760
  %1710 = vmatpush.msra.mxu0 %v1709
  %v1711 = vand.u32 %v73, 4294901760
  %1712 = vmatpush.msra.mxu0 %v1711
  %v1713 = vand.u32 %v72, 4294901760
  %1714 = vmatpush.msra.mxu0 %v1713
  %v1715 = vand.u32 %v71, 4294901760
  %1716 = vmatpush.msra.mxu0 %v1715
  %v1717 = vand.u32 %v70, 4294901760
  %1718 = vmatpush.msra.mxu0 %v1717
  %v1719 = vand.u32 %v1561, 4294901760
  %v1720 = vsub.f32 %v1561, %v1719
  %v1721 = vand.u32 %v1720, 4294901760
  %1722 = vmatmul.f32.gmra.mxu0 %v1721
  %v1723 = vpop.f32.mrf.mxu0
  %v1724 = vadd.f32 %v1693, %v1723
  %1725 = vdwg.mxu0
  %1726 = vmatpush.msra.mxu0 0.0
  %1727 = vmatpush.msra.mxu0 0.0
  %1728 = vmatpush.msra.mxu0 0.0
  %1729 = vmatpush.msra.mxu0 0.0
  %1730 = vmatpush.msra.mxu0 0.0
  %1731 = vmatpush.msra.mxu0 0.0
  %1732 = vmatpush.msra.mxu0 0.0
  %1733 = vmatpush.msra.mxu0 0.0
  %v1734 = vand.u32 %v77, 4294901760
  %v1735 = vsub.f32 %v77, %v1734
  %v1736 = vand.u32 %v1735, 4294901760
  %1737 = vmatpush.msra.mxu0 %v1736
  %v1738 = vand.u32 %v76, 4294901760
  %v1739 = vsub.f32 %v76, %v1738
  %v1740 = vand.u32 %v1739, 4294901760
  %1741 = vmatpush.msra.mxu0 %v1740
  %v1742 = vand.u32 %v75, 4294901760
  %v1743 = vsub.f32 %v75, %v1742
  %v1744 = vand.u32 %v1743, 4294901760
  %1745 = vmatpush.msra.mxu0 %v1744
  %v1746 = vand.u32 %v74, 4294901760
  %v1747 = vsub.f32 %v74, %v1746
  %v1748 = vand.u32 %v1747, 4294901760
  %1749 = vmatpush.msra.mxu0 %v1748
  %v1750 = vand.u32 %v73, 4294901760
  %v1751 = vsub.f32 %v73, %v1750
  %v1752 = vand.u32 %v1751, 4294901760
  %1753 = vmatpush.msra.mxu0 %v1752
  %v1754 = vand.u32 %v72, 4294901760
  %v1755 = vsub.f32 %v72, %v1754
  %v1756 = vand.u32 %v1755, 4294901760
  %1757 = vmatpush.msra.mxu0 %v1756
  %v1758 = vand.u32 %v71, 4294901760
  %v1759 = vsub.f32 %v71, %v1758
  %v1760 = vand.u32 %v1759, 4294901760
  %1761 = vmatpush.msra.mxu0 %v1760
  %v1762 = vand.u32 %v70, 4294901760
  %v1763 = vsub.f32 %v70, %v1762
  %v1764 = vand.u32 %v1763, 4294901760
  %1765 = vmatpush.msra.mxu0 %v1764
  %v1766 = vand.u32 %v1561, 4294901760
  %1767 = vmatmul.f32.gmra.mxu0 %v1766
  %v1768 = vpop.f32.mrf.mxu0
  %v1769 = vadd.f32 %v1724, %v1768
  %1770 = vdwg.mxu0
  %1771 = vmatpush.msra.mxu0 0.0
  %1772 = vmatpush.msra.mxu0 0.0
  %1773 = vmatpush.msra.mxu0 0.0
  %1774 = vmatpush.msra.mxu0 0.0
  %1775 = vmatpush.msra.mxu0 0.0
  %1776 = vmatpush.msra.mxu0 0.0
  %1777 = vmatpush.msra.mxu0 0.0
  %1778 = vmatpush.msra.mxu0 0.0
  %v1779 = vand.u32 %v77, 4294901760
  %1780 = vmatpush.msra.mxu0 %v1779
  %v1781 = vand.u32 %v76, 4294901760
  %1782 = vmatpush.msra.mxu0 %v1781
  %v1783 = vand.u32 %v75, 4294901760
  %1784 = vmatpush.msra.mxu0 %v1783
  %v1785 = vand.u32 %v74, 4294901760
  %1786 = vmatpush.msra.mxu0 %v1785
  %v1787 = vand.u32 %v73, 4294901760
  %1788 = vmatpush.msra.mxu0 %v1787
  %v1789 = vand.u32 %v72, 4294901760
  %1790 = vmatpush.msra.mxu0 %v1789
  %v1791 = vand.u32 %v71, 4294901760
  %1792 = vmatpush.msra.mxu0 %v1791
  %v1793 = vand.u32 %v70, 4294901760
  %1794 = vmatpush.msra.mxu0 %v1793
  %v1795 = vand.u32 %v1561, 4294901760
  %1796 = vmatmul.f32.gmra.mxu0 %v1795
  %v1797 = vpop.f32.mrf.mxu0
  %v1798 = vadd.f32 %v1769, %v1797
  %1799 = vdwg.mxu0
  %v1801 = vsel %vm338, %v1550, 0
  %1803 = vmatpush.msra.mxu0 0.0
  %1804 = vmatpush.msra.mxu0 0.0
  %1805 = vmatpush.msra.mxu0 0.0
  %1806 = vmatpush.msra.mxu0 0.0
  %1807 = vmatpush.msra.mxu0 0.0
  %1808 = vmatpush.msra.mxu0 0.0
  %1809 = vmatpush.msra.mxu0 0.0
  %1810 = vmatpush.msra.mxu0 0.0
  %v1811 = vand.u32 %v68, 4294901760
  %1812 = vmatpush.msra.mxu0 %v1811
  %v1813 = vand.u32 %v67, 4294901760
  %1814 = vmatpush.msra.mxu0 %v1813
  %v1815 = vand.u32 %v66, 4294901760
  %1816 = vmatpush.msra.mxu0 %v1815
  %v1817 = vand.u32 %v65, 4294901760
  %1818 = vmatpush.msra.mxu0 %v1817
  %v1819 = vand.u32 %v64, 4294901760
  %1820 = vmatpush.msra.mxu0 %v1819
  %v1821 = vand.u32 %v63, 4294901760
  %1822 = vmatpush.msra.mxu0 %v1821
  %v1823 = vand.u32 %v62, 4294901760
  %1824 = vmatpush.msra.mxu0 %v1823
  %v1825 = vand.u32 %v61, 4294901760
  %1826 = vmatpush.msra.mxu0 %v1825
  %v1827 = vand.u32 %v1801, 4294901760
  %v1828 = vsub.f32 %v1801, %v1827
  %v1829 = vand.u32 %v1828, 4294901760
  %v1830 = vsub.f32 %v1828, %v1829
  %v1831 = vand.u32 %v1830, 4294901760
  %1832 = vmatmul.f32.gmra.mxu0 %v1831
  %v1833 = vpop.f32.mrf.mxu0
  %v1834 = vadd.f32 %v1798, %v1833
  %1835 = vdwg.mxu0
  %1836 = vmatpush.msra.mxu0 0.0
  %1837 = vmatpush.msra.mxu0 0.0
  %1838 = vmatpush.msra.mxu0 0.0
  %1839 = vmatpush.msra.mxu0 0.0
  %1840 = vmatpush.msra.mxu0 0.0
  %1841 = vmatpush.msra.mxu0 0.0
  %1842 = vmatpush.msra.mxu0 0.0
  %1843 = vmatpush.msra.mxu0 0.0
  %v1844 = vand.u32 %v68, 4294901760
  %v1845 = vsub.f32 %v68, %v1844
  %v1846 = vand.u32 %v1845, 4294901760
  %v1847 = vsub.f32 %v1845, %v1846
  %v1848 = vand.u32 %v1847, 4294901760
  %1849 = vmatpush.msra.mxu0 %v1848
  %v1850 = vand.u32 %v67, 4294901760
  %v1851 = vsub.f32 %v67, %v1850
  %v1852 = vand.u32 %v1851, 4294901760
  %v1853 = vsub.f32 %v1851, %v1852
  %v1854 = vand.u32 %v1853, 4294901760
  %1855 = vmatpush.msra.mxu0 %v1854
  %v1856 = vand.u32 %v66, 4294901760
  %v1857 = vsub.f32 %v66, %v1856
  %v1858 = vand.u32 %v1857, 4294901760
  %v1859 = vsub.f32 %v1857, %v1858
  %v1860 = vand.u32 %v1859, 4294901760
  %1861 = vmatpush.msra.mxu0 %v1860
  %v1862 = vand.u32 %v65, 4294901760
  %v1863 = vsub.f32 %v65, %v1862
  %v1864 = vand.u32 %v1863, 4294901760
  %v1865 = vsub.f32 %v1863, %v1864
  %v1866 = vand.u32 %v1865, 4294901760
  %1867 = vmatpush.msra.mxu0 %v1866
  %v1868 = vand.u32 %v64, 4294901760
  %v1869 = vsub.f32 %v64, %v1868
  %v1870 = vand.u32 %v1869, 4294901760
  %v1871 = vsub.f32 %v1869, %v1870
  %v1872 = vand.u32 %v1871, 4294901760
  %1873 = vmatpush.msra.mxu0 %v1872
  %v1874 = vand.u32 %v63, 4294901760
  %v1875 = vsub.f32 %v63, %v1874
  %v1876 = vand.u32 %v1875, 4294901760
  %v1877 = vsub.f32 %v1875, %v1876
  %v1878 = vand.u32 %v1877, 4294901760
  %1879 = vmatpush.msra.mxu0 %v1878
  %v1880 = vand.u32 %v62, 4294901760
  %v1881 = vsub.f32 %v62, %v1880
  %v1882 = vand.u32 %v1881, 4294901760
  %v1883 = vsub.f32 %v1881, %v1882
  %v1884 = vand.u32 %v1883, 4294901760
  %1885 = vmatpush.msra.mxu0 %v1884
  %v1886 = vand.u32 %v61, 4294901760
  %v1887 = vsub.f32 %v61, %v1886
  %v1888 = vand.u32 %v1887, 4294901760
  %v1889 = vsub.f32 %v1887, %v1888
  %v1890 = vand.u32 %v1889, 4294901760
  %1891 = vmatpush.msra.mxu0 %v1890
  %v1892 = vand.u32 %v1801, 4294901760
  %1893 = vmatmul.f32.gmra.mxu0 %v1892
  %v1894 = vpop.f32.mrf.mxu0
  %v1895 = vadd.f32 %v1834, %v1894
  %1896 = vdwg.mxu0
  %1897 = vmatpush.msra.mxu0 0.0
  %1898 = vmatpush.msra.mxu0 0.0
  %1899 = vmatpush.msra.mxu0 0.0
  %1900 = vmatpush.msra.mxu0 0.0
  %1901 = vmatpush.msra.mxu0 0.0
  %1902 = vmatpush.msra.mxu0 0.0
  %1903 = vmatpush.msra.mxu0 0.0
  %1904 = vmatpush.msra.mxu0 0.0
  %v1905 = vand.u32 %v68, 4294901760
  %v1906 = vsub.f32 %v68, %v1905
  %1907 = vmatpush.msra.mxu0 %v1906
  %v1908 = vand.u32 %v67, 4294901760
  %v1909 = vsub.f32 %v67, %v1908
  %1910 = vmatpush.msra.mxu0 %v1909
  %v1911 = vand.u32 %v66, 4294901760
  %v1912 = vsub.f32 %v66, %v1911
  %1913 = vmatpush.msra.mxu0 %v1912
  %v1914 = vand.u32 %v65, 4294901760
  %v1915 = vsub.f32 %v65, %v1914
  %1916 = vmatpush.msra.mxu0 %v1915
  %v1917 = vand.u32 %v64, 4294901760
  %v1918 = vsub.f32 %v64, %v1917
  %1919 = vmatpush.msra.mxu0 %v1918
  %v1920 = vand.u32 %v63, 4294901760
  %v1921 = vsub.f32 %v63, %v1920
  %1922 = vmatpush.msra.mxu0 %v1921
  %v1923 = vand.u32 %v62, 4294901760
  %v1924 = vsub.f32 %v62, %v1923
  %1925 = vmatpush.msra.mxu0 %v1924
  %v1926 = vand.u32 %v61, 4294901760
  %v1927 = vsub.f32 %v61, %v1926
  %1928 = vmatpush.msra.mxu0 %v1927
  %v1929 = vand.u32 %v1801, 4294901760
  %v1930 = vsub.f32 %v1801, %v1929
  %1931 = vmatmul.f32.gmra.mxu0 %v1930
  %v1932 = vpop.f32.mrf.mxu0
  %v1933 = vadd.f32 %v1895, %v1932
  %1934 = vdwg.mxu0
  %1935 = vmatpush.msra.mxu0 0.0
  %1936 = vmatpush.msra.mxu0 0.0
  %1937 = vmatpush.msra.mxu0 0.0
  %1938 = vmatpush.msra.mxu0 0.0
  %1939 = vmatpush.msra.mxu0 0.0
  %1940 = vmatpush.msra.mxu0 0.0
  %1941 = vmatpush.msra.mxu0 0.0
  %1942 = vmatpush.msra.mxu0 0.0
  %v1943 = vand.u32 %v68, 4294901760
  %1944 = vmatpush.msra.mxu0 %v1943
  %v1945 = vand.u32 %v67, 4294901760
  %1946 = vmatpush.msra.mxu0 %v1945
  %v1947 = vand.u32 %v66, 4294901760
  %1948 = vmatpush.msra.mxu0 %v1947
  %v1949 = vand.u32 %v65, 4294901760
  %1950 = vmatpush.msra.mxu0 %v1949
  %v1951 = vand.u32 %v64, 4294901760
  %1952 = vmatpush.msra.mxu0 %v1951
  %v1953 = vand.u32 %v63, 4294901760
  %1954 = vmatpush.msra.mxu0 %v1953
  %v1955 = vand.u32 %v62, 4294901760
  %1956 = vmatpush.msra.mxu0 %v1955
  %v1957 = vand.u32 %v61, 4294901760
  %1958 = vmatpush.msra.mxu0 %v1957
  %v1959 = vand.u32 %v1801, 4294901760
  %v1960 = vsub.f32 %v1801, %v1959
  %v1961 = vand.u32 %v1960, 4294901760
  %1962 = vmatmul.f32.gmra.mxu0 %v1961
  %v1963 = vpop.f32.mrf.mxu0
  %v1964 = vadd.f32 %v1933, %v1963
  %1965 = vdwg.mxu0
  %1966 = vmatpush.msra.mxu0 0.0
  %1967 = vmatpush.msra.mxu0 0.0
  %1968 = vmatpush.msra.mxu0 0.0
  %1969 = vmatpush.msra.mxu0 0.0
  %1970 = vmatpush.msra.mxu0 0.0
  %1971 = vmatpush.msra.mxu0 0.0
  %1972 = vmatpush.msra.mxu0 0.0
  %1973 = vmatpush.msra.mxu0 0.0
  %v1974 = vand.u32 %v68, 4294901760
  %v1975 = vsub.f32 %v68, %v1974
  %v1976 = vand.u32 %v1975, 4294901760
  %1977 = vmatpush.msra.mxu0 %v1976
  %v1978 = vand.u32 %v67, 4294901760
  %v1979 = vsub.f32 %v67, %v1978
  %v1980 = vand.u32 %v1979, 4294901760
  %1981 = vmatpush.msra.mxu0 %v1980
  %v1982 = vand.u32 %v66, 4294901760
  %v1983 = vsub.f32 %v66, %v1982
  %v1984 = vand.u32 %v1983, 4294901760
  %1985 = vmatpush.msra.mxu0 %v1984
  %v1986 = vand.u32 %v65, 4294901760
  %v1987 = vsub.f32 %v65, %v1986
  %v1988 = vand.u32 %v1987, 4294901760
  %1989 = vmatpush.msra.mxu0 %v1988
  %v1990 = vand.u32 %v64, 4294901760
  %v1991 = vsub.f32 %v64, %v1990
  %v1992 = vand.u32 %v1991, 4294901760
  %1993 = vmatpush.msra.mxu0 %v1992
  %v1994 = vand.u32 %v63, 4294901760
  %v1995 = vsub.f32 %v63, %v1994
  %v1996 = vand.u32 %v1995, 4294901760
  %1997 = vmatpush.msra.mxu0 %v1996
  %v1998 = vand.u32 %v62, 4294901760
  %v1999 = vsub.f32 %v62, %v1998
  %v2000 = vand.u32 %v1999, 4294901760
  %2001 = vmatpush.msra.mxu0 %v2000
  %v2002 = vand.u32 %v61, 4294901760
  %v2003 = vsub.f32 %v61, %v2002
  %v2004 = vand.u32 %v2003, 4294901760
  %2005 = vmatpush.msra.mxu0 %v2004
  %v2006 = vand.u32 %v1801, 4294901760
  %2007 = vmatmul.f32.gmra.mxu0 %v2006
  %v2008 = vpop.f32.mrf.mxu0
  %v2009 = vadd.f32 %v1964, %v2008
  %2010 = vdwg.mxu0
  %2011 = vmatpush.msra.mxu0 0.0
  %2012 = vmatpush.msra.mxu0 0.0
  %2013 = vmatpush.msra.mxu0 0.0
  %2014 = vmatpush.msra.mxu0 0.0
  %2015 = vmatpush.msra.mxu0 0.0
  %2016 = vmatpush.msra.mxu0 0.0
  %2017 = vmatpush.msra.mxu0 0.0
  %2018 = vmatpush.msra.mxu0 0.0
  %v2019 = vand.u32 %v68, 4294901760
  %2020 = vmatpush.msra.mxu0 %v2019
  %v2021 = vand.u32 %v67, 4294901760
  %2022 = vmatpush.msra.mxu0 %v2021
  %v2023 = vand.u32 %v66, 4294901760
  %2024 = vmatpush.msra.mxu0 %v2023
  %v2025 = vand.u32 %v65, 4294901760
  %2026 = vmatpush.msra.mxu0 %v2025
  %v2027 = vand.u32 %v64, 4294901760
  %2028 = vmatpush.msra.mxu0 %v2027
  %v2029 = vand.u32 %v63, 4294901760
  %2030 = vmatpush.msra.mxu0 %v2029
  %v2031 = vand.u32 %v62, 4294901760
  %2032 = vmatpush.msra.mxu0 %v2031
  %v2033 = vand.u32 %v61, 4294901760
  %2034 = vmatpush.msra.mxu0 %v2033
  %v2035 = vand.u32 %v1801, 4294901760
  %2036 = vmatmul.f32.gmra.mxu0 %v2035
  %v2037 = vpop.f32.mrf.mxu0
  %v2038 = vadd.f32 %v2009, %v2037
  %2039 = vdwg.mxu0
  %v2041 = vsel %vm338, %v1558, 0
  %2043 = vmatpush.msra.mxu0 0.0
  %2044 = vmatpush.msra.mxu0 0.0
  %2045 = vmatpush.msra.mxu0 0.0
  %2046 = vmatpush.msra.mxu0 0.0
  %2047 = vmatpush.msra.mxu0 0.0
  %2048 = vmatpush.msra.mxu0 0.0
  %2049 = vmatpush.msra.mxu0 0.0
  %2050 = vmatpush.msra.mxu0 0.0
  %v2051 = vand.u32 %v86, 4294901760
  %2052 = vmatpush.msra.mxu0 %v2051
  %v2053 = vand.u32 %v85, 4294901760
  %2054 = vmatpush.msra.mxu0 %v2053
  %v2055 = vand.u32 %v84, 4294901760
  %2056 = vmatpush.msra.mxu0 %v2055
  %v2057 = vand.u32 %v83, 4294901760
  %2058 = vmatpush.msra.mxu0 %v2057
  %v2059 = vand.u32 %v82, 4294901760
  %2060 = vmatpush.msra.mxu0 %v2059
  %v2061 = vand.u32 %v81, 4294901760
  %2062 = vmatpush.msra.mxu0 %v2061
  %v2063 = vand.u32 %v80, 4294901760
  %2064 = vmatpush.msra.mxu0 %v2063
  %v2065 = vand.u32 %v79, 4294901760
  %2066 = vmatpush.msra.mxu0 %v2065
  %v2067 = vand.u32 %v2041, 4294901760
  %v2068 = vsub.f32 %v2041, %v2067
  %v2069 = vand.u32 %v2068, 4294901760
  %v2070 = vsub.f32 %v2068, %v2069
  %v2071 = vand.u32 %v2070, 4294901760
  %2072 = vmatmul.f32.gmra.mxu0 %v2071
  %v2073 = vpop.f32.mrf.mxu0
  %v2074 = vadd.f32 0.0, %v2073
  %2075 = vdwg.mxu0
  %2076 = vmatpush.msra.mxu0 0.0
  %2077 = vmatpush.msra.mxu0 0.0
  %2078 = vmatpush.msra.mxu0 0.0
  %2079 = vmatpush.msra.mxu0 0.0
  %2080 = vmatpush.msra.mxu0 0.0
  %2081 = vmatpush.msra.mxu0 0.0
  %2082 = vmatpush.msra.mxu0 0.0
  %2083 = vmatpush.msra.mxu0 0.0
  %v2084 = vand.u32 %v86, 4294901760
  %v2085 = vsub.f32 %v86, %v2084
  %v2086 = vand.u32 %v2085, 4294901760
  %v2087 = vsub.f32 %v2085, %v2086
  %v2088 = vand.u32 %v2087, 4294901760
  %2089 = vmatpush.msra.mxu0 %v2088
  %v2090 = vand.u32 %v85, 4294901760
  %v2091 = vsub.f32 %v85, %v2090
  %v2092 = vand.u32 %v2091, 4294901760
  %v2093 = vsub.f32 %v2091, %v2092
  %v2094 = vand.u32 %v2093, 4294901760
  %2095 = vmatpush.msra.mxu0 %v2094
  %v2096 = vand.u32 %v84, 4294901760
  %v2097 = vsub.f32 %v84, %v2096
  %v2098 = vand.u32 %v2097, 4294901760
  %v2099 = vsub.f32 %v2097, %v2098
  %v2100 = vand.u32 %v2099, 4294901760
  %2101 = vmatpush.msra.mxu0 %v2100
  %v2102 = vand.u32 %v83, 4294901760
  %v2103 = vsub.f32 %v83, %v2102
  %v2104 = vand.u32 %v2103, 4294901760
  %v2105 = vsub.f32 %v2103, %v2104
  %v2106 = vand.u32 %v2105, 4294901760
  %2107 = vmatpush.msra.mxu0 %v2106
  %v2108 = vand.u32 %v82, 4294901760
  %v2109 = vsub.f32 %v82, %v2108
  %v2110 = vand.u32 %v2109, 4294901760
  %v2111 = vsub.f32 %v2109, %v2110
  %v2112 = vand.u32 %v2111, 4294901760
  %2113 = vmatpush.msra.mxu0 %v2112
  %v2114 = vand.u32 %v81, 4294901760
  %v2115 = vsub.f32 %v81, %v2114
  %v2116 = vand.u32 %v2115, 4294901760
  %v2117 = vsub.f32 %v2115, %v2116
  %v2118 = vand.u32 %v2117, 4294901760
  %2119 = vmatpush.msra.mxu0 %v2118
  %v2120 = vand.u32 %v80, 4294901760
  %v2121 = vsub.f32 %v80, %v2120
  %v2122 = vand.u32 %v2121, 4294901760
  %v2123 = vsub.f32 %v2121, %v2122
  %v2124 = vand.u32 %v2123, 4294901760
  %2125 = vmatpush.msra.mxu0 %v2124
  %v2126 = vand.u32 %v79, 4294901760
  %v2127 = vsub.f32 %v79, %v2126
  %v2128 = vand.u32 %v2127, 4294901760
  %v2129 = vsub.f32 %v2127, %v2128
  %v2130 = vand.u32 %v2129, 4294901760
  %2131 = vmatpush.msra.mxu0 %v2130
  %v2132 = vand.u32 %v2041, 4294901760
  %2133 = vmatmul.f32.gmra.mxu0 %v2132
  %v2134 = vpop.f32.mrf.mxu0
  %v2135 = vadd.f32 %v2074, %v2134
  %2136 = vdwg.mxu0
  %2137 = vmatpush.msra.mxu0 0.0
  %2138 = vmatpush.msra.mxu0 0.0
  %2139 = vmatpush.msra.mxu0 0.0
  %2140 = vmatpush.msra.mxu0 0.0
  %2141 = vmatpush.msra.mxu0 0.0
  %2142 = vmatpush.msra.mxu0 0.0
  %2143 = vmatpush.msra.mxu0 0.0
  %2144 = vmatpush.msra.mxu0 0.0
  %v2145 = vand.u32 %v86, 4294901760
  %v2146 = vsub.f32 %v86, %v2145
  %2147 = vmatpush.msra.mxu0 %v2146
  %v2148 = vand.u32 %v85, 4294901760
  %v2149 = vsub.f32 %v85, %v2148
  %2150 = vmatpush.msra.mxu0 %v2149
  %v2151 = vand.u32 %v84, 4294901760
  %v2152 = vsub.f32 %v84, %v2151
  %2153 = vmatpush.msra.mxu0 %v2152
  %v2154 = vand.u32 %v83, 4294901760
  %v2155 = vsub.f32 %v83, %v2154
  %2156 = vmatpush.msra.mxu0 %v2155
  %v2157 = vand.u32 %v82, 4294901760
  %v2158 = vsub.f32 %v82, %v2157
  %2159 = vmatpush.msra.mxu0 %v2158
  %v2160 = vand.u32 %v81, 4294901760
  %v2161 = vsub.f32 %v81, %v2160
  %2162 = vmatpush.msra.mxu0 %v2161
  %v2163 = vand.u32 %v80, 4294901760
  %v2164 = vsub.f32 %v80, %v2163
  %2165 = vmatpush.msra.mxu0 %v2164
  %v2166 = vand.u32 %v79, 4294901760
  %v2167 = vsub.f32 %v79, %v2166
  %2168 = vmatpush.msra.mxu0 %v2167
  %v2169 = vand.u32 %v2041, 4294901760
  %v2170 = vsub.f32 %v2041, %v2169
  %2171 = vmatmul.f32.gmra.mxu0 %v2170
  %v2172 = vpop.f32.mrf.mxu0
  %v2173 = vadd.f32 %v2135, %v2172
  %2174 = vdwg.mxu0
  %2175 = vmatpush.msra.mxu0 0.0
  %2176 = vmatpush.msra.mxu0 0.0
  %2177 = vmatpush.msra.mxu0 0.0
  %2178 = vmatpush.msra.mxu0 0.0
  %2179 = vmatpush.msra.mxu0 0.0
  %2180 = vmatpush.msra.mxu0 0.0
  %2181 = vmatpush.msra.mxu0 0.0
  %2182 = vmatpush.msra.mxu0 0.0
  %v2183 = vand.u32 %v86, 4294901760
  %2184 = vmatpush.msra.mxu0 %v2183
  %v2185 = vand.u32 %v85, 4294901760
  %2186 = vmatpush.msra.mxu0 %v2185
  %v2187 = vand.u32 %v84, 4294901760
  %2188 = vmatpush.msra.mxu0 %v2187
  %v2189 = vand.u32 %v83, 4294901760
  %2190 = vmatpush.msra.mxu0 %v2189
  %v2191 = vand.u32 %v82, 4294901760
  %2192 = vmatpush.msra.mxu0 %v2191
  %v2193 = vand.u32 %v81, 4294901760
  %2194 = vmatpush.msra.mxu0 %v2193
  %v2195 = vand.u32 %v80, 4294901760
  %2196 = vmatpush.msra.mxu0 %v2195
  %v2197 = vand.u32 %v79, 4294901760
  %2198 = vmatpush.msra.mxu0 %v2197
  %v2199 = vand.u32 %v2041, 4294901760
  %v2200 = vsub.f32 %v2041, %v2199
  %v2201 = vand.u32 %v2200, 4294901760
  %2202 = vmatmul.f32.gmra.mxu0 %v2201
  %v2203 = vpop.f32.mrf.mxu0
  %v2204 = vadd.f32 %v2173, %v2203
  %2205 = vdwg.mxu0
  %2206 = vmatpush.msra.mxu0 0.0
  %2207 = vmatpush.msra.mxu0 0.0
  %2208 = vmatpush.msra.mxu0 0.0
  %2209 = vmatpush.msra.mxu0 0.0
  %2210 = vmatpush.msra.mxu0 0.0
  %2211 = vmatpush.msra.mxu0 0.0
  %2212 = vmatpush.msra.mxu0 0.0
  %2213 = vmatpush.msra.mxu0 0.0
  %v2214 = vand.u32 %v86, 4294901760
  %v2215 = vsub.f32 %v86, %v2214
  %v2216 = vand.u32 %v2215, 4294901760
  %2217 = vmatpush.msra.mxu0 %v2216
  %v2218 = vand.u32 %v85, 4294901760
  %v2219 = vsub.f32 %v85, %v2218
  %v2220 = vand.u32 %v2219, 4294901760
  %2221 = vmatpush.msra.mxu0 %v2220
  %v2222 = vand.u32 %v84, 4294901760
  %v2223 = vsub.f32 %v84, %v2222
  %v2224 = vand.u32 %v2223, 4294901760
  %2225 = vmatpush.msra.mxu0 %v2224
  %v2226 = vand.u32 %v83, 4294901760
  %v2227 = vsub.f32 %v83, %v2226
  %v2228 = vand.u32 %v2227, 4294901760
  %2229 = vmatpush.msra.mxu0 %v2228
  %v2230 = vand.u32 %v82, 4294901760
  %v2231 = vsub.f32 %v82, %v2230
  %v2232 = vand.u32 %v2231, 4294901760
  %2233 = vmatpush.msra.mxu0 %v2232
  %v2234 = vand.u32 %v81, 4294901760
  %v2235 = vsub.f32 %v81, %v2234
  %v2236 = vand.u32 %v2235, 4294901760
  %2237 = vmatpush.msra.mxu0 %v2236
  %v2238 = vand.u32 %v80, 4294901760
  %v2239 = vsub.f32 %v80, %v2238
  %v2240 = vand.u32 %v2239, 4294901760
  %2241 = vmatpush.msra.mxu0 %v2240
  %v2242 = vand.u32 %v79, 4294901760
  %v2243 = vsub.f32 %v79, %v2242
  %v2244 = vand.u32 %v2243, 4294901760
  %2245 = vmatpush.msra.mxu0 %v2244
  %v2246 = vand.u32 %v2041, 4294901760
  %2247 = vmatmul.f32.gmra.mxu0 %v2246
  %v2248 = vpop.f32.mrf.mxu0
  %v2249 = vadd.f32 %v2204, %v2248
  %2250 = vdwg.mxu0
  %2251 = vmatpush.msra.mxu0 0.0
  %2252 = vmatpush.msra.mxu0 0.0
  %2253 = vmatpush.msra.mxu0 0.0
  %2254 = vmatpush.msra.mxu0 0.0
  %2255 = vmatpush.msra.mxu0 0.0
  %2256 = vmatpush.msra.mxu0 0.0
  %2257 = vmatpush.msra.mxu0 0.0
  %2258 = vmatpush.msra.mxu0 0.0
  %v2259 = vand.u32 %v86, 4294901760
  %2260 = vmatpush.msra.mxu0 %v2259
  %v2261 = vand.u32 %v85, 4294901760
  %2262 = vmatpush.msra.mxu0 %v2261
  %v2263 = vand.u32 %v84, 4294901760
  %2264 = vmatpush.msra.mxu0 %v2263
  %v2265 = vand.u32 %v83, 4294901760
  %2266 = vmatpush.msra.mxu0 %v2265
  %v2267 = vand.u32 %v82, 4294901760
  %2268 = vmatpush.msra.mxu0 %v2267
  %v2269 = vand.u32 %v81, 4294901760
  %2270 = vmatpush.msra.mxu0 %v2269
  %v2271 = vand.u32 %v80, 4294901760
  %2272 = vmatpush.msra.mxu0 %v2271
  %v2273 = vand.u32 %v79, 4294901760
  %2274 = vmatpush.msra.mxu0 %v2273
  %v2275 = vand.u32 %v2041, 4294901760
  %2276 = vmatmul.f32.gmra.mxu0 %v2275
  %v2277 = vpop.f32.mrf.mxu0
  %v2278 = vadd.f32 %v2249, %v2277
  %2279 = vdwg.mxu0
  %v2280 = vadd.f32 %v2038, %v2278
  %vm2281 = vcmask 261120
  %v2283 = vsel %vm2281, %v2280, 0
  %2285 = vmatpush.msra.mxu0 0.0
  %2286 = vmatpush.msra.mxu0 0.0
  %2287 = vmatpush.msra.mxu0 0.0
  %2288 = vmatpush.msra.mxu0 0.0
  %2289 = vmatpush.msra.mxu0 0.0
  %2290 = vmatpush.msra.mxu0 0.0
  %2291 = vmatpush.msra.mxu0 0.0
  %2292 = vmatpush.msra.mxu0 0.0
  %2293 = vmatpush.msra.mxu0 0.0
  %2294 = vmatpush.msra.mxu0 0.0
  %2295 = vmatpush.msra.mxu0 0.0
  %2296 = vmatpush.msra.mxu0 0.0
  %v2297 = vand.u32 %v103, 4294901760
  %2298 = vmatpush.msra.mxu0 %v2297
  %v2299 = vand.u32 %v102, 4294901760
  %2300 = vmatpush.msra.mxu0 %v2299
  %v2301 = vand.u32 %v101, 4294901760
  %2302 = vmatpush.msra.mxu0 %v2301
  %v2303 = vand.u32 %v100, 4294901760
  %2304 = vmatpush.msra.mxu0 %v2303
  %v2305 = vand.u32 %v2283, 4294901760
  %v2306 = vsub.f32 %v2283, %v2305
  %v2307 = vand.u32 %v2306, 4294901760
  %v2308 = vsub.f32 %v2306, %v2307
  %v2309 = vand.u32 %v2308, 4294901760
  %2310 = vmatmul.f32.gmra.mxu0 %v2309
  %v2311 = vpop.f32.mrf.mxu0
  %v2312 = vadd.f32 0.0, %v2311
  %2313 = vdwg.mxu0
  %2314 = vmatpush.msra.mxu0 0.0
  %2315 = vmatpush.msra.mxu0 0.0
  %2316 = vmatpush.msra.mxu0 0.0
  %2317 = vmatpush.msra.mxu0 0.0
  %2318 = vmatpush.msra.mxu0 0.0
  %2319 = vmatpush.msra.mxu0 0.0
  %2320 = vmatpush.msra.mxu0 0.0
  %2321 = vmatpush.msra.mxu0 0.0
  %2322 = vmatpush.msra.mxu0 0.0
  %2323 = vmatpush.msra.mxu0 0.0
  %2324 = vmatpush.msra.mxu0 0.0
  %2325 = vmatpush.msra.mxu0 0.0
  %v2326 = vand.u32 %v103, 4294901760
  %v2327 = vsub.f32 %v103, %v2326
  %v2328 = vand.u32 %v2327, 4294901760
  %v2329 = vsub.f32 %v2327, %v2328
  %v2330 = vand.u32 %v2329, 4294901760
  %2331 = vmatpush.msra.mxu0 %v2330
  %v2332 = vand.u32 %v102, 4294901760
  %v2333 = vsub.f32 %v102, %v2332
  %v2334 = vand.u32 %v2333, 4294901760
  %v2335 = vsub.f32 %v2333, %v2334
  %v2336 = vand.u32 %v2335, 4294901760
  %2337 = vmatpush.msra.mxu0 %v2336
  %v2338 = vand.u32 %v101, 4294901760
  %v2339 = vsub.f32 %v101, %v2338
  %v2340 = vand.u32 %v2339, 4294901760
  %v2341 = vsub.f32 %v2339, %v2340
  %v2342 = vand.u32 %v2341, 4294901760
  %2343 = vmatpush.msra.mxu0 %v2342
  %v2344 = vand.u32 %v100, 4294901760
  %v2345 = vsub.f32 %v100, %v2344
  %v2346 = vand.u32 %v2345, 4294901760
  %v2347 = vsub.f32 %v2345, %v2346
  %v2348 = vand.u32 %v2347, 4294901760
  %2349 = vmatpush.msra.mxu0 %v2348
  %v2350 = vand.u32 %v2283, 4294901760
  %2351 = vmatmul.f32.gmra.mxu0 %v2350
  %v2352 = vpop.f32.mrf.mxu0
  %v2353 = vadd.f32 %v2312, %v2352
  %2354 = vdwg.mxu0
  %2355 = vmatpush.msra.mxu0 0.0
  %2356 = vmatpush.msra.mxu0 0.0
  %2357 = vmatpush.msra.mxu0 0.0
  %2358 = vmatpush.msra.mxu0 0.0
  %2359 = vmatpush.msra.mxu0 0.0
  %2360 = vmatpush.msra.mxu0 0.0
  %2361 = vmatpush.msra.mxu0 0.0
  %2362 = vmatpush.msra.mxu0 0.0
  %2363 = vmatpush.msra.mxu0 0.0
  %2364 = vmatpush.msra.mxu0 0.0
  %2365 = vmatpush.msra.mxu0 0.0
  %2366 = vmatpush.msra.mxu0 0.0
  %v2367 = vand.u32 %v103, 4294901760
  %v2368 = vsub.f32 %v103, %v2367
  %2369 = vmatpush.msra.mxu0 %v2368
  %v2370 = vand.u32 %v102, 4294901760
  %v2371 = vsub.f32 %v102, %v2370
  %2372 = vmatpush.msra.mxu0 %v2371
  %v2373 = vand.u32 %v101, 4294901760
  %v2374 = vsub.f32 %v101, %v2373
  %2375 = vmatpush.msra.mxu0 %v2374
  %v2376 = vand.u32 %v100, 4294901760
  %v2377 = vsub.f32 %v100, %v2376
  %2378 = vmatpush.msra.mxu0 %v2377
  %v2379 = vand.u32 %v2283, 4294901760
  %v2380 = vsub.f32 %v2283, %v2379
  %2381 = vmatmul.f32.gmra.mxu0 %v2380
  %v2382 = vpop.f32.mrf.mxu0
  %v2383 = vadd.f32 %v2353, %v2382
  %2384 = vdwg.mxu0
  %2385 = vmatpush.msra.mxu0 0.0
  %2386 = vmatpush.msra.mxu0 0.0
  %2387 = vmatpush.msra.mxu0 0.0
  %2388 = vmatpush.msra.mxu0 0.0
  %2389 = vmatpush.msra.mxu0 0.0
  %2390 = vmatpush.msra.mxu0 0.0
  %2391 = vmatpush.msra.mxu0 0.0
  %2392 = vmatpush.msra.mxu0 0.0
  %2393 = vmatpush.msra.mxu0 0.0
  %2394 = vmatpush.msra.mxu0 0.0
  %2395 = vmatpush.msra.mxu0 0.0
  %2396 = vmatpush.msra.mxu0 0.0
  %v2397 = vand.u32 %v103, 4294901760
  %2398 = vmatpush.msra.mxu0 %v2397
  %v2399 = vand.u32 %v102, 4294901760
  %2400 = vmatpush.msra.mxu0 %v2399
  %v2401 = vand.u32 %v101, 4294901760
  %2402 = vmatpush.msra.mxu0 %v2401
  %v2403 = vand.u32 %v100, 4294901760
  %2404 = vmatpush.msra.mxu0 %v2403
  %v2405 = vand.u32 %v2283, 4294901760
  %v2406 = vsub.f32 %v2283, %v2405
  %v2407 = vand.u32 %v2406, 4294901760
  %2408 = vmatmul.f32.gmra.mxu0 %v2407
  %v2409 = vpop.f32.mrf.mxu0
  %v2410 = vadd.f32 %v2383, %v2409
  %2411 = vdwg.mxu0
  %2412 = vmatpush.msra.mxu0 0.0
  %2413 = vmatpush.msra.mxu0 0.0
  %2414 = vmatpush.msra.mxu0 0.0
  %2415 = vmatpush.msra.mxu0 0.0
  %2416 = vmatpush.msra.mxu0 0.0
  %2417 = vmatpush.msra.mxu0 0.0
  %2418 = vmatpush.msra.mxu0 0.0
  %2419 = vmatpush.msra.mxu0 0.0
  %2420 = vmatpush.msra.mxu0 0.0
  %2421 = vmatpush.msra.mxu0 0.0
  %2422 = vmatpush.msra.mxu0 0.0
  %2423 = vmatpush.msra.mxu0 0.0
  %v2424 = vand.u32 %v103, 4294901760
  %v2425 = vsub.f32 %v103, %v2424
  %v2426 = vand.u32 %v2425, 4294901760
  %2427 = vmatpush.msra.mxu0 %v2426
  %v2428 = vand.u32 %v102, 4294901760
  %v2429 = vsub.f32 %v102, %v2428
  %v2430 = vand.u32 %v2429, 4294901760
  %2431 = vmatpush.msra.mxu0 %v2430
  %v2432 = vand.u32 %v101, 4294901760
  %v2433 = vsub.f32 %v101, %v2432
  %v2434 = vand.u32 %v2433, 4294901760
  %2435 = vmatpush.msra.mxu0 %v2434
  %v2436 = vand.u32 %v100, 4294901760
  %v2437 = vsub.f32 %v100, %v2436
  %v2438 = vand.u32 %v2437, 4294901760
  %2439 = vmatpush.msra.mxu0 %v2438
  %v2440 = vand.u32 %v2283, 4294901760
  %2441 = vmatmul.f32.gmra.mxu0 %v2440
  %v2442 = vpop.f32.mrf.mxu0
  %v2443 = vadd.f32 %v2410, %v2442
  %2444 = vdwg.mxu0
  %2445 = vmatpush.msra.mxu0 0.0
  %2446 = vmatpush.msra.mxu0 0.0
  %2447 = vmatpush.msra.mxu0 0.0
  %2448 = vmatpush.msra.mxu0 0.0
  %2449 = vmatpush.msra.mxu0 0.0
  %2450 = vmatpush.msra.mxu0 0.0
  %2451 = vmatpush.msra.mxu0 0.0
  %2452 = vmatpush.msra.mxu0 0.0
  %2453 = vmatpush.msra.mxu0 0.0
  %2454 = vmatpush.msra.mxu0 0.0
  %2455 = vmatpush.msra.mxu0 0.0
  %2456 = vmatpush.msra.mxu0 0.0
  %v2457 = vand.u32 %v103, 4294901760
  %2458 = vmatpush.msra.mxu0 %v2457
  %v2459 = vand.u32 %v102, 4294901760
  %2460 = vmatpush.msra.mxu0 %v2459
  %v2461 = vand.u32 %v101, 4294901760
  %2462 = vmatpush.msra.mxu0 %v2461
  %v2463 = vand.u32 %v100, 4294901760
  %2464 = vmatpush.msra.mxu0 %v2463
  %v2465 = vand.u32 %v2283, 4294901760
  %2466 = vmatmul.f32.gmra.mxu0 %v2465
  %v2467 = vpop.f32.mrf.mxu0
  %v2468 = vadd.f32 %v2443, %v2467
  %2469 = vdwg.mxu0
  %v2471 = vsel %vm2281, %v1059, 0
  %2473 = vmatpush.msra.mxu0 0.0
  %2474 = vmatpush.msra.mxu0 0.0
  %2475 = vmatpush.msra.mxu0 0.0
  %2476 = vmatpush.msra.mxu0 0.0
  %2477 = vmatpush.msra.mxu0 0.0
  %2478 = vmatpush.msra.mxu0 0.0
  %2479 = vmatpush.msra.mxu0 0.0
  %2480 = vmatpush.msra.mxu0 0.0
  %2481 = vmatpush.msra.mxu0 0.0
  %2482 = vmatpush.msra.mxu0 0.0
  %2483 = vmatpush.msra.mxu0 0.0
  %2484 = vmatpush.msra.mxu0 0.0
  %v2485 = vand.u32 %v99, 4294901760
  %2486 = vmatpush.msra.mxu0 %v2485
  %v2487 = vand.u32 %v98, 4294901760
  %2488 = vmatpush.msra.mxu0 %v2487
  %v2489 = vand.u32 %v97, 4294901760
  %2490 = vmatpush.msra.mxu0 %v2489
  %v2491 = vand.u32 %v96, 4294901760
  %2492 = vmatpush.msra.mxu0 %v2491
  %v2493 = vand.u32 %v2471, 4294901760
  %v2494 = vsub.f32 %v2471, %v2493
  %v2495 = vand.u32 %v2494, 4294901760
  %v2496 = vsub.f32 %v2494, %v2495
  %v2497 = vand.u32 %v2496, 4294901760
  %2498 = vmatmul.f32.gmra.mxu0 %v2497
  %v2499 = vpop.f32.mrf.mxu0
  %v2500 = vadd.f32 %v2468, %v2499
  %2501 = vdwg.mxu0
  %2502 = vmatpush.msra.mxu0 0.0
  %2503 = vmatpush.msra.mxu0 0.0
  %2504 = vmatpush.msra.mxu0 0.0
  %2505 = vmatpush.msra.mxu0 0.0
  %2506 = vmatpush.msra.mxu0 0.0
  %2507 = vmatpush.msra.mxu0 0.0
  %2508 = vmatpush.msra.mxu0 0.0
  %2509 = vmatpush.msra.mxu0 0.0
  %2510 = vmatpush.msra.mxu0 0.0
  %2511 = vmatpush.msra.mxu0 0.0
  %2512 = vmatpush.msra.mxu0 0.0
  %2513 = vmatpush.msra.mxu0 0.0
  %v2514 = vand.u32 %v99, 4294901760
  %v2515 = vsub.f32 %v99, %v2514
  %v2516 = vand.u32 %v2515, 4294901760
  %v2517 = vsub.f32 %v2515, %v2516
  %v2518 = vand.u32 %v2517, 4294901760
  %2519 = vmatpush.msra.mxu0 %v2518
  %v2520 = vand.u32 %v98, 4294901760
  %v2521 = vsub.f32 %v98, %v2520
  %v2522 = vand.u32 %v2521, 4294901760
  %v2523 = vsub.f32 %v2521, %v2522
  %v2524 = vand.u32 %v2523, 4294901760
  %2525 = vmatpush.msra.mxu0 %v2524
  %v2526 = vand.u32 %v97, 4294901760
  %v2527 = vsub.f32 %v97, %v2526
  %v2528 = vand.u32 %v2527, 4294901760
  %v2529 = vsub.f32 %v2527, %v2528
  %v2530 = vand.u32 %v2529, 4294901760
  %2531 = vmatpush.msra.mxu0 %v2530
  %v2532 = vand.u32 %v96, 4294901760
  %v2533 = vsub.f32 %v96, %v2532
  %v2534 = vand.u32 %v2533, 4294901760
  %v2535 = vsub.f32 %v2533, %v2534
  %v2536 = vand.u32 %v2535, 4294901760
  %2537 = vmatpush.msra.mxu0 %v2536
  %v2538 = vand.u32 %v2471, 4294901760
  %2539 = vmatmul.f32.gmra.mxu0 %v2538
  %v2540 = vpop.f32.mrf.mxu0
  %v2541 = vadd.f32 %v2500, %v2540
  %2542 = vdwg.mxu0
  %2543 = vmatpush.msra.mxu0 0.0
  %2544 = vmatpush.msra.mxu0 0.0
  %2545 = vmatpush.msra.mxu0 0.0
  %2546 = vmatpush.msra.mxu0 0.0
  %2547 = vmatpush.msra.mxu0 0.0
  %2548 = vmatpush.msra.mxu0 0.0
  %2549 = vmatpush.msra.mxu0 0.0
  %2550 = vmatpush.msra.mxu0 0.0
  %2551 = vmatpush.msra.mxu0 0.0
  %2552 = vmatpush.msra.mxu0 0.0
  %2553 = vmatpush.msra.mxu0 0.0
  %2554 = vmatpush.msra.mxu0 0.0
  %v2555 = vand.u32 %v99, 4294901760
  %v2556 = vsub.f32 %v99, %v2555
  %2557 = vmatpush.msra.mxu0 %v2556
  %v2558 = vand.u32 %v98, 4294901760
  %v2559 = vsub.f32 %v98, %v2558
  %2560 = vmatpush.msra.mxu0 %v2559
  %v2561 = vand.u32 %v97, 4294901760
  %v2562 = vsub.f32 %v97, %v2561
  %2563 = vmatpush.msra.mxu0 %v2562
  %v2564 = vand.u32 %v96, 4294901760
  %v2565 = vsub.f32 %v96, %v2564
  %2566 = vmatpush.msra.mxu0 %v2565
  %v2567 = vand.u32 %v2471, 4294901760
  %v2568 = vsub.f32 %v2471, %v2567
  %2569 = vmatmul.f32.gmra.mxu0 %v2568
  %v2570 = vpop.f32.mrf.mxu0
  %v2571 = vadd.f32 %v2541, %v2570
  %2572 = vdwg.mxu0
  %2573 = vmatpush.msra.mxu0 0.0
  %2574 = vmatpush.msra.mxu0 0.0
  %2575 = vmatpush.msra.mxu0 0.0
  %2576 = vmatpush.msra.mxu0 0.0
  %2577 = vmatpush.msra.mxu0 0.0
  %2578 = vmatpush.msra.mxu0 0.0
  %2579 = vmatpush.msra.mxu0 0.0
  %2580 = vmatpush.msra.mxu0 0.0
  %2581 = vmatpush.msra.mxu0 0.0
  %2582 = vmatpush.msra.mxu0 0.0
  %2583 = vmatpush.msra.mxu0 0.0
  %2584 = vmatpush.msra.mxu0 0.0
  %v2585 = vand.u32 %v99, 4294901760
  %2586 = vmatpush.msra.mxu0 %v2585
  %v2587 = vand.u32 %v98, 4294901760
  %2588 = vmatpush.msra.mxu0 %v2587
  %v2589 = vand.u32 %v97, 4294901760
  %2590 = vmatpush.msra.mxu0 %v2589
  %v2591 = vand.u32 %v96, 4294901760
  %2592 = vmatpush.msra.mxu0 %v2591
  %v2593 = vand.u32 %v2471, 4294901760
  %v2594 = vsub.f32 %v2471, %v2593
  %v2595 = vand.u32 %v2594, 4294901760
  %2596 = vmatmul.f32.gmra.mxu0 %v2595
  %v2597 = vpop.f32.mrf.mxu0
  %v2598 = vadd.f32 %v2571, %v2597
  %2599 = vdwg.mxu0
  %2600 = vmatpush.msra.mxu0 0.0
  %2601 = vmatpush.msra.mxu0 0.0
  %2602 = vmatpush.msra.mxu0 0.0
  %2603 = vmatpush.msra.mxu0 0.0
  %2604 = vmatpush.msra.mxu0 0.0
  %2605 = vmatpush.msra.mxu0 0.0
  %2606 = vmatpush.msra.mxu0 0.0
  %2607 = vmatpush.msra.mxu0 0.0
  %2608 = vmatpush.msra.mxu0 0.0
  %2609 = vmatpush.msra.mxu0 0.0
  %2610 = vmatpush.msra.mxu0 0.0
  %2611 = vmatpush.msra.mxu0 0.0
  %v2612 = vand.u32 %v99, 4294901760
  %v2613 = vsub.f32 %v99, %v2612
  %v2614 = vand.u32 %v2613, 4294901760
  %2615 = vmatpush.msra.mxu0 %v2614
  %v2616 = vand.u32 %v98, 4294901760
  %v2617 = vsub.f32 %v98, %v2616
  %v2618 = vand.u32 %v2617, 4294901760
  %2619 = vmatpush.msra.mxu0 %v2618
  %v2620 = vand.u32 %v97, 4294901760
  %v2621 = vsub.f32 %v97, %v2620
  %v2622 = vand.u32 %v2621, 4294901760
  %2623 = vmatpush.msra.mxu0 %v2622
  %v2624 = vand.u32 %v96, 4294901760
  %v2625 = vsub.f32 %v96, %v2624
  %v2626 = vand.u32 %v2625, 4294901760
  %2627 = vmatpush.msra.mxu0 %v2626
  %v2628 = vand.u32 %v2471, 4294901760
  %2629 = vmatmul.f32.gmra.mxu0 %v2628
  %v2630 = vpop.f32.mrf.mxu0
  %v2631 = vadd.f32 %v2598, %v2630
  %2632 = vdwg.mxu0
  %2633 = vmatpush.msra.mxu0 0.0
  %2634 = vmatpush.msra.mxu0 0.0
  %2635 = vmatpush.msra.mxu0 0.0
  %2636 = vmatpush.msra.mxu0 0.0
  %2637 = vmatpush.msra.mxu0 0.0
  %2638 = vmatpush.msra.mxu0 0.0
  %2639 = vmatpush.msra.mxu0 0.0
  %2640 = vmatpush.msra.mxu0 0.0
  %2641 = vmatpush.msra.mxu0 0.0
  %2642 = vmatpush.msra.mxu0 0.0
  %2643 = vmatpush.msra.mxu0 0.0
  %2644 = vmatpush.msra.mxu0 0.0
  %v2645 = vand.u32 %v99, 4294901760
  %2646 = vmatpush.msra.mxu0 %v2645
  %v2647 = vand.u32 %v98, 4294901760
  %2648 = vmatpush.msra.mxu0 %v2647
  %v2649 = vand.u32 %v97, 4294901760
  %2650 = vmatpush.msra.mxu0 %v2649
  %v2651 = vand.u32 %v96, 4294901760
  %2652 = vmatpush.msra.mxu0 %v2651
  %v2653 = vand.u32 %v2471, 4294901760
  %2654 = vmatmul.f32.gmra.mxu0 %v2653
  %v2655 = vpop.f32.mrf.mxu0
  %v2656 = vadd.f32 %v2631, %v2655
  %2657 = vdwg.mxu0
  %v2659 = vperm.slane %v104, 0
  %v2661 = vadd.f32 %v2656, %v2659
  %v2662 = vmax.f32 %v2661, 0.0
  %2663 = vst.msk [vmem:[%s9] sm:$0xff] %vm338, %v2662
  %s2664 = scalar_lea.vmem %s0, 16
  %v2665 = vld [vmem:[%s2664] sm:$0xff]
  %v2666 = vld [vmem:[%s2664 + $0x8] sm:$0xff]
  %2667 = vmatpush.msra.mxu0 0.0
  %2668 = vmatpush.msra.mxu0 0.0
  %2669 = vmatpush.msra.mxu0 0.0
  %2670 = vmatpush.msra.mxu0 0.0
  %2671 = vmatpush.msra.mxu0 0.0
  %2672 = vmatpush.msra.mxu0 0.0
  %2673 = vmatpush.msra.mxu0 0.0
  %2674 = vmatpush.msra.mxu0 0.0
  %2675 = vmatpush.msra.mxu0 0.0
  %2676 = vmatpush.msra.mxu0 0.0
  %2677 = vmatpush.msra.mxu0 0.0
  %2678 = vmatpush.msra.mxu0 0.0
  %2679 = vmatpush.msra.mxu0 0.0
  %2680 = vmatpush.msra.mxu0 0.0
  %v2681 = vand.u32 %v2666, 4294901760
  %2682 = vmatpush.msra.mxu0 %v2681
  %v2683 = vand.u32 %v2665, 4294901760
  %2684 = vmatpush.msra.mxu0 %v2683
  %v2685 = vand.u32 %v109, 4294901760
  %v2686 = vsub.f32 %v109, %v2685
  %v2687 = vand.u32 %v2686, 4294901760
  %v2688 = vsub.f32 %v2686, %v2687
  %v2689 = vand.u32 %v2688, 4294901760
  %2690 = vmatmul.f32.gmra.mxu0 %v2689
  %v2691 = vpop.f32.mrf.mxu0
  %v2692 = vadd.f32 0.0, %v2691
  %v2693 = vand.u32 %v112, 4294901760
  %v2694 = vsub.f32 %v112, %v2693
  %v2695 = vand.u32 %v2694, 4294901760
  %v2696 = vsub.f32 %v2694, %v2695
  %v2697 = vand.u32 %v2696, 4294901760
  %2698 = vmatmul.f32.gmra.mxu0 %v2697
  %v2699 = vpop.f32.mrf.mxu0
  %v2700 = vadd.f32 0.0, %v2699
  %v2701 = vand.u32 %v115, 4294901760
  %v2702 = vsub.f32 %v115, %v2701
  %v2703 = vand.u32 %v2702, 4294901760
  %v2704 = vsub.f32 %v2702, %v2703
  %v2705 = vand.u32 %v2704, 4294901760
  %2706 = vmatmul.f32.gmra.mxu0 %v2705
  %v2707 = vpop.f32.mrf.mxu0
  %v2708 = vadd.f32 0.0, %v2707
  %2709 = vdwg.mxu0
  %2710 = vmatpush.msra.mxu0 0.0
  %2711 = vmatpush.msra.mxu0 0.0
  %2712 = vmatpush.msra.mxu0 0.0
  %2713 = vmatpush.msra.mxu0 0.0
  %2714 = vmatpush.msra.mxu0 0.0
  %2715 = vmatpush.msra.mxu0 0.0
  %2716 = vmatpush.msra.mxu0 0.0
  %2717 = vmatpush.msra.mxu0 0.0
  %2718 = vmatpush.msra.mxu0 0.0
  %2719 = vmatpush.msra.mxu0 0.0
  %2720 = vmatpush.msra.mxu0 0.0
  %2721 = vmatpush.msra.mxu0 0.0
  %2722 = vmatpush.msra.mxu0 0.0
  %2723 = vmatpush.msra.mxu0 0.0
  %v2724 = vand.u32 %v2666, 4294901760
  %v2725 = vsub.f32 %v2666, %v2724
  %v2726 = vand.u32 %v2725, 4294901760
  %v2727 = vsub.f32 %v2725, %v2726
  %v2728 = vand.u32 %v2727, 4294901760
  %2729 = vmatpush.msra.mxu0 %v2728
  %v2730 = vand.u32 %v2665, 4294901760
  %v2731 = vsub.f32 %v2665, %v2730
  %v2732 = vand.u32 %v2731, 4294901760
  %v2733 = vsub.f32 %v2731, %v2732
  %v2734 = vand.u32 %v2733, 4294901760
  %2735 = vmatpush.msra.mxu0 %v2734
  %v2736 = vand.u32 %v109, 4294901760
  %2737 = vmatmul.f32.gmra.mxu0 %v2736
  %v2738 = vpop.f32.mrf.mxu0
  %v2739 = vadd.f32 %v2692, %v2738
  %v2740 = vand.u32 %v112, 4294901760
  %2741 = vmatmul.f32.gmra.mxu0 %v2740
  %v2742 = vpop.f32.mrf.mxu0
  %v2743 = vadd.f32 %v2700, %v2742
  %v2744 = vand.u32 %v115, 4294901760
  %2745 = vmatmul.f32.gmra.mxu0 %v2744
  %v2746 = vpop.f32.mrf.mxu0
  %v2747 = vadd.f32 %v2708, %v2746
  %2748 = vdwg.mxu0
  %2749 = vmatpush.msra.mxu0 0.0
  %2750 = vmatpush.msra.mxu0 0.0
  %2751 = vmatpush.msra.mxu0 0.0
  %2752 = vmatpush.msra.mxu0 0.0
  %2753 = vmatpush.msra.mxu0 0.0
  %2754 = vmatpush.msra.mxu0 0.0
  %2755 = vmatpush.msra.mxu0 0.0
  %2756 = vmatpush.msra.mxu0 0.0
  %2757 = vmatpush.msra.mxu0 0.0
  %2758 = vmatpush.msra.mxu0 0.0
  %2759 = vmatpush.msra.mxu0 0.0
  %2760 = vmatpush.msra.mxu0 0.0
  %2761 = vmatpush.msra.mxu0 0.0
  %2762 = vmatpush.msra.mxu0 0.0
  %v2763 = vand.u32 %v2666, 4294901760
  %v2764 = vsub.f32 %v2666, %v2763
  %2765 = vmatpush.msra.mxu0 %v2764
  %v2766 = vand.u32 %v2665, 4294901760
  %v2767 = vsub.f32 %v2665, %v2766
  %2768 = vmatpush.msra.mxu0 %v2767
  %v2769 = vand.u32 %v109, 4294901760
  %v2770 = vsub.f32 %v109, %v2769
  %2771 = vmatmul.f32.gmra.mxu0 %v2770
  %v2772 = vpop.f32.mrf.mxu0
  %v2773 = vadd.f32 %v2739, %v2772
  %v2774 = vand.u32 %v112, 4294901760
  %v2775 = vsub.f32 %v112, %v2774
  %2776 = vmatmul.f32.gmra.mxu0 %v2775
  %v2777 = vpop.f32.mrf.mxu0
  %v2778 = vadd.f32 %v2743, %v2777
  %v2779 = vand.u32 %v115, 4294901760
  %v2780 = vsub.f32 %v115, %v2779
  %2781 = vmatmul.f32.gmra.mxu0 %v2780
  %v2782 = vpop.f32.mrf.mxu0
  %v2783 = vadd.f32 %v2747, %v2782
  %2784 = vdwg.mxu0
  %2785 = vmatpush.msra.mxu0 0.0
  %2786 = vmatpush.msra.mxu0 0.0
  %2787 = vmatpush.msra.mxu0 0.0
  %2788 = vmatpush.msra.mxu0 0.0
  %2789 = vmatpush.msra.mxu0 0.0
  %2790 = vmatpush.msra.mxu0 0.0
  %2791 = vmatpush.msra.mxu0 0.0
  %2792 = vmatpush.msra.mxu0 0.0
  %2793 = vmatpush.msra.mxu0 0.0
  %2794 = vmatpush.msra.mxu0 0.0
  %2795 = vmatpush.msra.mxu0 0.0
  %2796 = vmatpush.msra.mxu0 0.0
  %2797 = vmatpush.msra.mxu0 0.0
  %2798 = vmatpush.msra.mxu0 0.0
  %v2799 = vand.u32 %v2666, 4294901760
  %2800 = vmatpush.msra.mxu0 %v2799
  %v2801 = vand.u32 %v2665, 4294901760
  %2802 = vmatpush.msra.mxu0 %v2801
  %v2803 = vand.u32 %v109, 4294901760
  %v2804 = vsub.f32 %v109, %v2803
  %v2805 = vand.u32 %v2804, 4294901760
  %2806 = vmatmul.f32.gmra.mxu0 %v2805
  %v2807 = vpop.f32.mrf.mxu0
  %v2808 = vadd.f32 %v2773, %v2807
  %v2809 = vand.u32 %v112, 4294901760
  %v2810 = vsub.f32 %v112, %v2809
  %v2811 = vand.u32 %v2810, 4294901760
  %2812 = vmatmul.f32.gmra.mxu0 %v2811
  %v2813 = vpop.f32.mrf.mxu0
  %v2814 = vadd.f32 %v2778, %v2813
  %v2815 = vand.u32 %v115, 4294901760
  %v2816 = vsub.f32 %v115, %v2815
  %v2817 = vand.u32 %v2816, 4294901760
  %2818 = vmatmul.f32.gmra.mxu0 %v2817
  %v2819 = vpop.f32.mrf.mxu0
  %v2820 = vadd.f32 %v2783, %v2819
  %2821 = vdwg.mxu0
  %2822 = vmatpush.msra.mxu0 0.0
  %2823 = vmatpush.msra.mxu0 0.0
  %2824 = vmatpush.msra.mxu0 0.0
  %2825 = vmatpush.msra.mxu0 0.0
  %2826 = vmatpush.msra.mxu0 0.0
  %2827 = vmatpush.msra.mxu0 0.0
  %2828 = vmatpush.msra.mxu0 0.0
  %2829 = vmatpush.msra.mxu0 0.0
  %2830 = vmatpush.msra.mxu0 0.0
  %2831 = vmatpush.msra.mxu0 0.0
  %2832 = vmatpush.msra.mxu0 0.0
  %2833 = vmatpush.msra.mxu0 0.0
  %2834 = vmatpush.msra.mxu0 0.0
  %2835 = vmatpush.msra.mxu0 0.0
  %v2836 = vand.u32 %v2666, 4294901760
  %v2837 = vsub.f32 %v2666, %v2836
  %v2838 = vand.u32 %v2837, 4294901760
  %2839 = vmatpush.msra.mxu0 %v2838
  %v2840 = vand.u32 %v2665, 4294901760
  %v2841 = vsub.f32 %v2665, %v2840
  %v2842 = vand.u32 %v2841, 4294901760
  %2843 = vmatpush.msra.mxu0 %v2842
  %v2844 = vand.u32 %v109, 4294901760
  %2845 = vmatmul.f32.gmra.mxu0 %v2844
  %v2846 = vpop.f32.mrf.mxu0
  %v2847 = vadd.f32 %v2808, %v2846
  %v2848 = vand.u32 %v112, 4294901760
  %2849 = vmatmul.f32.gmra.mxu0 %v2848
  %v2850 = vpop.f32.mrf.mxu0
  %v2851 = vadd.f32 %v2814, %v2850
  %v2852 = vand.u32 %v115, 4294901760
  %2853 = vmatmul.f32.gmra.mxu0 %v2852
  %v2854 = vpop.f32.mrf.mxu0
  %v2855 = vadd.f32 %v2820, %v2854
  %2856 = vdwg.mxu0
  %2857 = vmatpush.msra.mxu0 0.0
  %2858 = vmatpush.msra.mxu0 0.0
  %2859 = vmatpush.msra.mxu0 0.0
  %2860 = vmatpush.msra.mxu0 0.0
  %2861 = vmatpush.msra.mxu0 0.0
  %2862 = vmatpush.msra.mxu0 0.0
  %2863 = vmatpush.msra.mxu0 0.0
  %2864 = vmatpush.msra.mxu0 0.0
  %2865 = vmatpush.msra.mxu0 0.0
  %2866 = vmatpush.msra.mxu0 0.0
  %2867 = vmatpush.msra.mxu0 0.0
  %2868 = vmatpush.msra.mxu0 0.0
  %2869 = vmatpush.msra.mxu0 0.0
  %2870 = vmatpush.msra.mxu0 0.0
  %v2871 = vand.u32 %v2666, 4294901760
  %2872 = vmatpush.msra.mxu0 %v2871
  %v2873 = vand.u32 %v2665, 4294901760
  %2874 = vmatpush.msra.mxu0 %v2873
  %v2875 = vand.u32 %v109, 4294901760
  %2876 = vmatmul.f32.gmra.mxu0 %v2875
  %v2877 = vpop.f32.mrf.mxu0
  %v2878 = vadd.f32 %v2847, %v2877
  %v2879 = vand.u32 %v112, 4294901760
  %2880 = vmatmul.f32.gmra.mxu0 %v2879
  %v2881 = vpop.f32.mrf.mxu0
  %v2882 = vadd.f32 %v2851, %v2881
  %v2883 = vand.u32 %v115, 4294901760
  %2884 = vmatmul.f32.gmra.mxu0 %v2883
  %v2885 = vpop.f32.mrf.mxu0
  %v2886 = vadd.f32 %v2855, %v2885
  %2887 = vdwg.mxu0
  %v2889 = vsel %vm338, %v2882, 0
  %2891 = vmatpush.msra.mxu0 0.0
  %2892 = vmatpush.msra.mxu0 0.0
  %2893 = vmatpush.msra.mxu0 0.0
  %2894 = vmatpush.msra.mxu0 0.0
  %2895 = vmatpush.msra.mxu0 0.0
  %2896 = vmatpush.msra.mxu0 0.0
  %2897 = vmatpush.msra.mxu0 0.0
  %2898 = vmatpush.msra.mxu0 0.0
  %v2899 = vand.u32 %v51, 4294901760
  %2900 = vmatpush.msra.mxu0 %v2899
  %v2901 = vand.u32 %v50, 4294901760
  %2902 = vmatpush.msra.mxu0 %v2901
  %v2903 = vand.u32 %v49, 4294901760
  %2904 = vmatpush.msra.mxu0 %v2903
  %v2905 = vand.u32 %v48, 4294901760
  %2906 = vmatpush.msra.mxu0 %v2905
  %v2907 = vand.u32 %v47, 4294901760
  %2908 = vmatpush.msra.mxu0 %v2907
  %v2909 = vand.u32 %v46, 4294901760
  %2910 = vmatpush.msra.mxu0 %v2909
  %v2911 = vand.u32 %v45, 4294901760
  %2912 = vmatpush.msra.mxu0 %v2911
  %v2913 = vand.u32 %v44, 4294901760
  %2914 = vmatpush.msra.mxu0 %v2913
  %v2915 = vand.u32 %v2889, 4294901760
  %v2916 = vsub.f32 %v2889, %v2915
  %v2917 = vand.u32 %v2916, 4294901760
  %v2918 = vsub.f32 %v2916, %v2917
  %v2919 = vand.u32 %v2918, 4294901760
  %2920 = vmatmul.f32.gmra.mxu0 %v2919
  %v2921 = vpop.f32.mrf.mxu0
  %v2922 = vadd.f32 0.0, %v2921
  %2923 = vdwg.mxu0
  %2924 = vmatpush.msra.mxu0 0.0
  %2925 = vmatpush.msra.mxu0 0.0
  %2926 = vmatpush.msra.mxu0 0.0
  %2927 = vmatpush.msra.mxu0 0.0
  %2928 = vmatpush.msra.mxu0 0.0
  %2929 = vmatpush.msra.mxu0 0.0
  %2930 = vmatpush.msra.mxu0 0.0
  %2931 = vmatpush.msra.mxu0 0.0
  %v2932 = vand.u32 %v51, 4294901760
  %v2933 = vsub.f32 %v51, %v2932
  %v2934 = vand.u32 %v2933, 4294901760
  %v2935 = vsub.f32 %v2933, %v2934
  %v2936 = vand.u32 %v2935, 4294901760
  %2937 = vmatpush.msra.mxu0 %v2936
  %v2938 = vand.u32 %v50, 4294901760
  %v2939 = vsub.f32 %v50, %v2938
  %v2940 = vand.u32 %v2939, 4294901760
  %v2941 = vsub.f32 %v2939, %v2940
  %v2942 = vand.u32 %v2941, 4294901760
  %2943 = vmatpush.msra.mxu0 %v2942
  %v2944 = vand.u32 %v49, 4294901760
  %v2945 = vsub.f32 %v49, %v2944
  %v2946 = vand.u32 %v2945, 4294901760
  %v2947 = vsub.f32 %v2945, %v2946
  %v2948 = vand.u32 %v2947, 4294901760
  %2949 = vmatpush.msra.mxu0 %v2948
  %v2950 = vand.u32 %v48, 4294901760
  %v2951 = vsub.f32 %v48, %v2950
  %v2952 = vand.u32 %v2951, 4294901760
  %v2953 = vsub.f32 %v2951, %v2952
  %v2954 = vand.u32 %v2953, 4294901760
  %2955 = vmatpush.msra.mxu0 %v2954
  %v2956 = vand.u32 %v47, 4294901760
  %v2957 = vsub.f32 %v47, %v2956
  %v2958 = vand.u32 %v2957, 4294901760
  %v2959 = vsub.f32 %v2957, %v2958
  %v2960 = vand.u32 %v2959, 4294901760
  %2961 = vmatpush.msra.mxu0 %v2960
  %v2962 = vand.u32 %v46, 4294901760
  %v2963 = vsub.f32 %v46, %v2962
  %v2964 = vand.u32 %v2963, 4294901760
  %v2965 = vsub.f32 %v2963, %v2964
  %v2966 = vand.u32 %v2965, 4294901760
  %2967 = vmatpush.msra.mxu0 %v2966
  %v2968 = vand.u32 %v45, 4294901760
  %v2969 = vsub.f32 %v45, %v2968
  %v2970 = vand.u32 %v2969, 4294901760
  %v2971 = vsub.f32 %v2969, %v2970
  %v2972 = vand.u32 %v2971, 4294901760
  %2973 = vmatpush.msra.mxu0 %v2972
  %v2974 = vand.u32 %v44, 4294901760
  %v2975 = vsub.f32 %v44, %v2974
  %v2976 = vand.u32 %v2975, 4294901760
  %v2977 = vsub.f32 %v2975, %v2976
  %v2978 = vand.u32 %v2977, 4294901760
  %2979 = vmatpush.msra.mxu0 %v2978
  %v2980 = vand.u32 %v2889, 4294901760
  %2981 = vmatmul.f32.gmra.mxu0 %v2980
  %v2982 = vpop.f32.mrf.mxu0
  %v2983 = vadd.f32 %v2922, %v2982
  %2984 = vdwg.mxu0
  %2985 = vmatpush.msra.mxu0 0.0
  %2986 = vmatpush.msra.mxu0 0.0
  %2987 = vmatpush.msra.mxu0 0.0
  %2988 = vmatpush.msra.mxu0 0.0
  %2989 = vmatpush.msra.mxu0 0.0
  %2990 = vmatpush.msra.mxu0 0.0
  %2991 = vmatpush.msra.mxu0 0.0
  %2992 = vmatpush.msra.mxu0 0.0
  %v2993 = vand.u32 %v51, 4294901760
  %v2994 = vsub.f32 %v51, %v2993
  %2995 = vmatpush.msra.mxu0 %v2994
  %v2996 = vand.u32 %v50, 4294901760
  %v2997 = vsub.f32 %v50, %v2996
  %2998 = vmatpush.msra.mxu0 %v2997
  %v2999 = vand.u32 %v49, 4294901760
  %v3000 = vsub.f32 %v49, %v2999
  %3001 = vmatpush.msra.mxu0 %v3000
  %v3002 = vand.u32 %v48, 4294901760
  %v3003 = vsub.f32 %v48, %v3002
  %3004 = vmatpush.msra.mxu0 %v3003
  %v3005 = vand.u32 %v47, 4294901760
  %v3006 = vsub.f32 %v47, %v3005
  %3007 = vmatpush.msra.mxu0 %v3006
  %v3008 = vand.u32 %v46, 4294901760
  %v3009 = vsub.f32 %v46, %v3008
  %3010 = vmatpush.msra.mxu0 %v3009
  %v3011 = vand.u32 %v45, 4294901760
  %v3012 = vsub.f32 %v45, %v3011
  %3013 = vmatpush.msra.mxu0 %v3012
  %v3014 = vand.u32 %v44, 4294901760
  %v3015 = vsub.f32 %v44, %v3014
  %3016 = vmatpush.msra.mxu0 %v3015
  %v3017 = vand.u32 %v2889, 4294901760
  %v3018 = vsub.f32 %v2889, %v3017
  %3019 = vmatmul.f32.gmra.mxu0 %v3018
  %v3020 = vpop.f32.mrf.mxu0
  %v3021 = vadd.f32 %v2983, %v3020
  %3022 = vdwg.mxu0
  %3023 = vmatpush.msra.mxu0 0.0
  %3024 = vmatpush.msra.mxu0 0.0
  %3025 = vmatpush.msra.mxu0 0.0
  %3026 = vmatpush.msra.mxu0 0.0
  %3027 = vmatpush.msra.mxu0 0.0
  %3028 = vmatpush.msra.mxu0 0.0
  %3029 = vmatpush.msra.mxu0 0.0
  %3030 = vmatpush.msra.mxu0 0.0
  %v3031 = vand.u32 %v51, 4294901760
  %3032 = vmatpush.msra.mxu0 %v3031
  %v3033 = vand.u32 %v50, 4294901760
  %3034 = vmatpush.msra.mxu0 %v3033
  %v3035 = vand.u32 %v49, 4294901760
  %3036 = vmatpush.msra.mxu0 %v3035
  %v3037 = vand.u32 %v48, 4294901760
  %3038 = vmatpush.msra.mxu0 %v3037
  %v3039 = vand.u32 %v47, 4294901760
  %3040 = vmatpush.msra.mxu0 %v3039
  %v3041 = vand.u32 %v46, 4294901760
  %3042 = vmatpush.msra.mxu0 %v3041
  %v3043 = vand.u32 %v45, 4294901760
  %3044 = vmatpush.msra.mxu0 %v3043
  %v3045 = vand.u32 %v44, 4294901760
  %3046 = vmatpush.msra.mxu0 %v3045
  %v3047 = vand.u32 %v2889, 4294901760
  %v3048 = vsub.f32 %v2889, %v3047
  %v3049 = vand.u32 %v3048, 4294901760
  %3050 = vmatmul.f32.gmra.mxu0 %v3049
  %v3051 = vpop.f32.mrf.mxu0
  %v3052 = vadd.f32 %v3021, %v3051
  %3053 = vdwg.mxu0
  %3054 = vmatpush.msra.mxu0 0.0
  %3055 = vmatpush.msra.mxu0 0.0
  %3056 = vmatpush.msra.mxu0 0.0
  %3057 = vmatpush.msra.mxu0 0.0
  %3058 = vmatpush.msra.mxu0 0.0
  %3059 = vmatpush.msra.mxu0 0.0
  %3060 = vmatpush.msra.mxu0 0.0
  %3061 = vmatpush.msra.mxu0 0.0
  %v3062 = vand.u32 %v51, 4294901760
  %v3063 = vsub.f32 %v51, %v3062
  %v3064 = vand.u32 %v3063, 4294901760
  %3065 = vmatpush.msra.mxu0 %v3064
  %v3066 = vand.u32 %v50, 4294901760
  %v3067 = vsub.f32 %v50, %v3066
  %v3068 = vand.u32 %v3067, 4294901760
  %3069 = vmatpush.msra.mxu0 %v3068
  %v3070 = vand.u32 %v49, 4294901760
  %v3071 = vsub.f32 %v49, %v3070
  %v3072 = vand.u32 %v3071, 4294901760
  %3073 = vmatpush.msra.mxu0 %v3072
  %v3074 = vand.u32 %v48, 4294901760
  %v3075 = vsub.f32 %v48, %v3074
  %v3076 = vand.u32 %v3075, 4294901760
  %3077 = vmatpush.msra.mxu0 %v3076
  %v3078 = vand.u32 %v47, 4294901760
  %v3079 = vsub.f32 %v47, %v3078
  %v3080 = vand.u32 %v3079, 4294901760
  %3081 = vmatpush.msra.mxu0 %v3080
  %v3082 = vand.u32 %v46, 4294901760
  %v3083 = vsub.f32 %v46, %v3082
  %v3084 = vand.u32 %v3083, 4294901760
  %3085 = vmatpush.msra.mxu0 %v3084
  %v3086 = vand.u32 %v45, 4294901760
  %v3087 = vsub.f32 %v45, %v3086
  %v3088 = vand.u32 %v3087, 4294901760
  %3089 = vmatpush.msra.mxu0 %v3088
  %v3090 = vand.u32 %v44, 4294901760
  %v3091 = vsub.f32 %v44, %v3090
  %v3092 = vand.u32 %v3091, 4294901760
  %3093 = vmatpush.msra.mxu0 %v3092
  %v3094 = vand.u32 %v2889, 4294901760
  %3095 = vmatmul.f32.gmra.mxu0 %v3094
  %v3096 = vpop.f32.mrf.mxu0
  %v3097 = vadd.f32 %v3052, %v3096
  %3098 = vdwg.mxu0
  %3099 = vmatpush.msra.mxu0 0.0
  %3100 = vmatpush.msra.mxu0 0.0
  %3101 = vmatpush.msra.mxu0 0.0
  %3102 = vmatpush.msra.mxu0 0.0
  %3103 = vmatpush.msra.mxu0 0.0
  %3104 = vmatpush.msra.mxu0 0.0
  %3105 = vmatpush.msra.mxu0 0.0
  %3106 = vmatpush.msra.mxu0 0.0
  %v3107 = vand.u32 %v51, 4294901760
  %3108 = vmatpush.msra.mxu0 %v3107
  %v3109 = vand.u32 %v50, 4294901760
  %3110 = vmatpush.msra.mxu0 %v3109
  %v3111 = vand.u32 %v49, 4294901760
  %3112 = vmatpush.msra.mxu0 %v3111
  %v3113 = vand.u32 %v48, 4294901760
  %3114 = vmatpush.msra.mxu0 %v3113
  %v3115 = vand.u32 %v47, 4294901760
  %3116 = vmatpush.msra.mxu0 %v3115
  %v3117 = vand.u32 %v46, 4294901760
  %3118 = vmatpush.msra.mxu0 %v3117
  %v3119 = vand.u32 %v45, 4294901760
  %3120 = vmatpush.msra.mxu0 %v3119
  %v3121 = vand.u32 %v44, 4294901760
  %3122 = vmatpush.msra.mxu0 %v3121
  %v3123 = vand.u32 %v2889, 4294901760
  %3124 = vmatmul.f32.gmra.mxu0 %v3123
  %v3125 = vpop.f32.mrf.mxu0
  %v3126 = vadd.f32 %v3097, %v3125
  %3127 = vdwg.mxu0
  %v3129 = vsel %vm338, %v2878, 0
  %3131 = vmatpush.msra.mxu0 0.0
  %3132 = vmatpush.msra.mxu0 0.0
  %3133 = vmatpush.msra.mxu0 0.0
  %3134 = vmatpush.msra.mxu0 0.0
  %3135 = vmatpush.msra.mxu0 0.0
  %3136 = vmatpush.msra.mxu0 0.0
  %3137 = vmatpush.msra.mxu0 0.0
  %3138 = vmatpush.msra.mxu0 0.0
  %v3139 = vand.u32 %v42, 4294901760
  %3140 = vmatpush.msra.mxu0 %v3139
  %v3141 = vand.u32 %v41, 4294901760
  %3142 = vmatpush.msra.mxu0 %v3141
  %v3143 = vand.u32 %v40, 4294901760
  %3144 = vmatpush.msra.mxu0 %v3143
  %v3145 = vand.u32 %v39, 4294901760
  %3146 = vmatpush.msra.mxu0 %v3145
  %v3147 = vand.u32 %v38, 4294901760
  %3148 = vmatpush.msra.mxu0 %v3147
  %v3149 = vand.u32 %v37, 4294901760
  %3150 = vmatpush.msra.mxu0 %v3149
  %v3151 = vand.u32 %v36, 4294901760
  %3152 = vmatpush.msra.mxu0 %v3151
  %v3153 = vand.u32 %v35, 4294901760
  %3154 = vmatpush.msra.mxu0 %v3153
  %v3155 = vand.u32 %v3129, 4294901760
  %v3156 = vsub.f32 %v3129, %v3155
  %v3157 = vand.u32 %v3156, 4294901760
  %v3158 = vsub.f32 %v3156, %v3157
  %v3159 = vand.u32 %v3158, 4294901760
  %3160 = vmatmul.f32.gmra.mxu0 %v3159
  %v3161 = vpop.f32.mrf.mxu0
  %v3162 = vadd.f32 %v3126, %v3161
  %3163 = vdwg.mxu0
  %3164 = vmatpush.msra.mxu0 0.0
  %3165 = vmatpush.msra.mxu0 0.0
  %3166 = vmatpush.msra.mxu0 0.0
  %3167 = vmatpush.msra.mxu0 0.0
  %3168 = vmatpush.msra.mxu0 0.0
  %3169 = vmatpush.msra.mxu0 0.0
  %3170 = vmatpush.msra.mxu0 0.0
  %3171 = vmatpush.msra.mxu0 0.0
  %v3172 = vand.u32 %v42, 4294901760
  %v3173 = vsub.f32 %v42, %v3172
  %v3174 = vand.u32 %v3173, 4294901760
  %v3175 = vsub.f32 %v3173, %v3174
  %v3176 = vand.u32 %v3175, 4294901760
  %3177 = vmatpush.msra.mxu0 %v3176
  %v3178 = vand.u32 %v41, 4294901760
  %v3179 = vsub.f32 %v41, %v3178
  %v3180 = vand.u32 %v3179, 4294901760
  %v3181 = vsub.f32 %v3179, %v3180
  %v3182 = vand.u32 %v3181, 4294901760
  %3183 = vmatpush.msra.mxu0 %v3182
  %v3184 = vand.u32 %v40, 4294901760
  %v3185 = vsub.f32 %v40, %v3184
  %v3186 = vand.u32 %v3185, 4294901760
  %v3187 = vsub.f32 %v3185, %v3186
  %v3188 = vand.u32 %v3187, 4294901760
  %3189 = vmatpush.msra.mxu0 %v3188
  %v3190 = vand.u32 %v39, 4294901760
  %v3191 = vsub.f32 %v39, %v3190
  %v3192 = vand.u32 %v3191, 4294901760
  %v3193 = vsub.f32 %v3191, %v3192
  %v3194 = vand.u32 %v3193, 4294901760
  %3195 = vmatpush.msra.mxu0 %v3194
  %v3196 = vand.u32 %v38, 4294901760
  %v3197 = vsub.f32 %v38, %v3196
  %v3198 = vand.u32 %v3197, 4294901760
  %v3199 = vsub.f32 %v3197, %v3198
  %v3200 = vand.u32 %v3199, 4294901760
  %3201 = vmatpush.msra.mxu0 %v3200
  %v3202 = vand.u32 %v37, 4294901760
  %v3203 = vsub.f32 %v37, %v3202
  %v3204 = vand.u32 %v3203, 4294901760
  %v3205 = vsub.f32 %v3203, %v3204
  %v3206 = vand.u32 %v3205, 4294901760
  %3207 = vmatpush.msra.mxu0 %v3206
  %v3208 = vand.u32 %v36, 4294901760
  %v3209 = vsub.f32 %v36, %v3208
  %v3210 = vand.u32 %v3209, 4294901760
  %v3211 = vsub.f32 %v3209, %v3210
  %v3212 = vand.u32 %v3211, 4294901760
  %3213 = vmatpush.msra.mxu0 %v3212
  %v3214 = vand.u32 %v35, 4294901760
  %v3215 = vsub.f32 %v35, %v3214
  %v3216 = vand.u32 %v3215, 4294901760
  %v3217 = vsub.f32 %v3215, %v3216
  %v3218 = vand.u32 %v3217, 4294901760
  %3219 = vmatpush.msra.mxu0 %v3218
  %v3220 = vand.u32 %v3129, 4294901760
  %3221 = vmatmul.f32.gmra.mxu0 %v3220
  %v3222 = vpop.f32.mrf.mxu0
  %v3223 = vadd.f32 %v3162, %v3222
  %3224 = vdwg.mxu0
  %3225 = vmatpush.msra.mxu0 0.0
  %3226 = vmatpush.msra.mxu0 0.0
  %3227 = vmatpush.msra.mxu0 0.0
  %3228 = vmatpush.msra.mxu0 0.0
  %3229 = vmatpush.msra.mxu0 0.0
  %3230 = vmatpush.msra.mxu0 0.0
  %3231 = vmatpush.msra.mxu0 0.0
  %3232 = vmatpush.msra.mxu0 0.0
  %v3233 = vand.u32 %v42, 4294901760
  %v3234 = vsub.f32 %v42, %v3233
  %3235 = vmatpush.msra.mxu0 %v3234
  %v3236 = vand.u32 %v41, 4294901760
  %v3237 = vsub.f32 %v41, %v3236
  %3238 = vmatpush.msra.mxu0 %v3237
  %v3239 = vand.u32 %v40, 4294901760
  %v3240 = vsub.f32 %v40, %v3239
  %3241 = vmatpush.msra.mxu0 %v3240
  %v3242 = vand.u32 %v39, 4294901760
  %v3243 = vsub.f32 %v39, %v3242
  %3244 = vmatpush.msra.mxu0 %v3243
  %v3245 = vand.u32 %v38, 4294901760
  %v3246 = vsub.f32 %v38, %v3245
  %3247 = vmatpush.msra.mxu0 %v3246
  %v3248 = vand.u32 %v37, 4294901760
  %v3249 = vsub.f32 %v37, %v3248
  %3250 = vmatpush.msra.mxu0 %v3249
  %v3251 = vand.u32 %v36, 4294901760
  %v3252 = vsub.f32 %v36, %v3251
  %3253 = vmatpush.msra.mxu0 %v3252
  %v3254 = vand.u32 %v35, 4294901760
  %v3255 = vsub.f32 %v35, %v3254
  %3256 = vmatpush.msra.mxu0 %v3255
  %v3257 = vand.u32 %v3129, 4294901760
  %v3258 = vsub.f32 %v3129, %v3257
  %3259 = vmatmul.f32.gmra.mxu0 %v3258
  %v3260 = vpop.f32.mrf.mxu0
  %v3261 = vadd.f32 %v3223, %v3260
  %3262 = vdwg.mxu0
  %3263 = vmatpush.msra.mxu0 0.0
  %3264 = vmatpush.msra.mxu0 0.0
  %3265 = vmatpush.msra.mxu0 0.0
  %3266 = vmatpush.msra.mxu0 0.0
  %3267 = vmatpush.msra.mxu0 0.0
  %3268 = vmatpush.msra.mxu0 0.0
  %3269 = vmatpush.msra.mxu0 0.0
  %3270 = vmatpush.msra.mxu0 0.0
  %v3271 = vand.u32 %v42, 4294901760
  %3272 = vmatpush.msra.mxu0 %v3271
  %v3273 = vand.u32 %v41, 4294901760
  %3274 = vmatpush.msra.mxu0 %v3273
  %v3275 = vand.u32 %v40, 4294901760
  %3276 = vmatpush.msra.mxu0 %v3275
  %v3277 = vand.u32 %v39, 4294901760
  %3278 = vmatpush.msra.mxu0 %v3277
  %v3279 = vand.u32 %v38, 4294901760
  %3280 = vmatpush.msra.mxu0 %v3279
  %v3281 = vand.u32 %v37, 4294901760
  %3282 = vmatpush.msra.mxu0 %v3281
  %v3283 = vand.u32 %v36, 4294901760
  %3284 = vmatpush.msra.mxu0 %v3283
  %v3285 = vand.u32 %v35, 4294901760
  %3286 = vmatpush.msra.mxu0 %v3285
  %v3287 = vand.u32 %v3129, 4294901760
  %v3288 = vsub.f32 %v3129, %v3287
  %v3289 = vand.u32 %v3288, 4294901760
  %3290 = vmatmul.f32.gmra.mxu0 %v3289
  %v3291 = vpop.f32.mrf.mxu0
  %v3292 = vadd.f32 %v3261, %v3291
  %3293 = vdwg.mxu0
  %3294 = vmatpush.msra.mxu0 0.0
  %3295 = vmatpush.msra.mxu0 0.0
  %3296 = vmatpush.msra.mxu0 0.0
  %3297 = vmatpush.msra.mxu0 0.0
  %3298 = vmatpush.msra.mxu0 0.0
  %3299 = vmatpush.msra.mxu0 0.0
  %3300 = vmatpush.msra.mxu0 0.0
  %3301 = vmatpush.msra.mxu0 0.0
  %v3302 = vand.u32 %v42, 4294901760
  %v3303 = vsub.f32 %v42, %v3302
  %v3304 = vand.u32 %v3303, 4294901760
  %3305 = vmatpush.msra.mxu0 %v3304
  %v3306 = vand.u32 %v41, 4294901760
  %v3307 = vsub.f32 %v41, %v3306
  %v3308 = vand.u32 %v3307, 4294901760
  %3309 = vmatpush.msra.mxu0 %v3308
  %v3310 = vand.u32 %v40, 4294901760
  %v3311 = vsub.f32 %v40, %v3310
  %v3312 = vand.u32 %v3311, 4294901760
  %3313 = vmatpush.msra.mxu0 %v3312
  %v3314 = vand.u32 %v39, 4294901760
  %v3315 = vsub.f32 %v39, %v3314
  %v3316 = vand.u32 %v3315, 4294901760
  %3317 = vmatpush.msra.mxu0 %v3316
  %v3318 = vand.u32 %v38, 4294901760
  %v3319 = vsub.f32 %v38, %v3318
  %v3320 = vand.u32 %v3319, 4294901760
  %3321 = vmatpush.msra.mxu0 %v3320
  %v3322 = vand.u32 %v37, 4294901760
  %v3323 = vsub.f32 %v37, %v3322
  %v3324 = vand.u32 %v3323, 4294901760
  %3325 = vmatpush.msra.mxu0 %v3324
  %v3326 = vand.u32 %v36, 4294901760
  %v3327 = vsub.f32 %v36, %v3326
  %v3328 = vand.u32 %v3327, 4294901760
  %3329 = vmatpush.msra.mxu0 %v3328
  %v3330 = vand.u32 %v35, 4294901760
  %v3331 = vsub.f32 %v35, %v3330
  %v3332 = vand.u32 %v3331, 4294901760
  %3333 = vmatpush.msra.mxu0 %v3332
  %v3334 = vand.u32 %v3129, 4294901760
  %3335 = vmatmul.f32.gmra.mxu0 %v3334
  %v3336 = vpop.f32.mrf.mxu0
  %v3337 = vadd.f32 %v3292, %v3336
  %3338 = vdwg.mxu0
  %3339 = vmatpush.msra.mxu0 0.0
  %3340 = vmatpush.msra.mxu0 0.0
  %3341 = vmatpush.msra.mxu0 0.0
  %3342 = vmatpush.msra.mxu0 0.0
  %3343 = vmatpush.msra.mxu0 0.0
  %3344 = vmatpush.msra.mxu0 0.0
  %3345 = vmatpush.msra.mxu0 0.0
  %3346 = vmatpush.msra.mxu0 0.0
  %v3347 = vand.u32 %v42, 4294901760
  %3348 = vmatpush.msra.mxu0 %v3347
  %v3349 = vand.u32 %v41, 4294901760
  %3350 = vmatpush.msra.mxu0 %v3349
  %v3351 = vand.u32 %v40, 4294901760
  %3352 = vmatpush.msra.mxu0 %v3351
  %v3353 = vand.u32 %v39, 4294901760
  %3354 = vmatpush.msra.mxu0 %v3353
  %v3355 = vand.u32 %v38, 4294901760
  %3356 = vmatpush.msra.mxu0 %v3355
  %v3357 = vand.u32 %v37, 4294901760
  %3358 = vmatpush.msra.mxu0 %v3357
  %v3359 = vand.u32 %v36, 4294901760
  %3360 = vmatpush.msra.mxu0 %v3359
  %v3361 = vand.u32 %v35, 4294901760
  %3362 = vmatpush.msra.mxu0 %v3361
  %v3363 = vand.u32 %v3129, 4294901760
  %3364 = vmatmul.f32.gmra.mxu0 %v3363
  %v3365 = vpop.f32.mrf.mxu0
  %v3366 = vadd.f32 %v3337, %v3365
  %3367 = vdwg.mxu0
  %v3369 = vsel %vm338, %v2886, 0
  %3371 = vmatpush.msra.mxu0 0.0
  %3372 = vmatpush.msra.mxu0 0.0
  %3373 = vmatpush.msra.mxu0 0.0
  %3374 = vmatpush.msra.mxu0 0.0
  %3375 = vmatpush.msra.mxu0 0.0
  %3376 = vmatpush.msra.mxu0 0.0
  %3377 = vmatpush.msra.mxu0 0.0
  %3378 = vmatpush.msra.mxu0 0.0
  %v3379 = vand.u32 %v60, 4294901760
  %3380 = vmatpush.msra.mxu0 %v3379
  %v3381 = vand.u32 %v59, 4294901760
  %3382 = vmatpush.msra.mxu0 %v3381
  %v3383 = vand.u32 %v58, 4294901760
  %3384 = vmatpush.msra.mxu0 %v3383
  %v3385 = vand.u32 %v57, 4294901760
  %3386 = vmatpush.msra.mxu0 %v3385
  %v3387 = vand.u32 %v56, 4294901760
  %3388 = vmatpush.msra.mxu0 %v3387
  %v3389 = vand.u32 %v55, 4294901760
  %3390 = vmatpush.msra.mxu0 %v3389
  %v3391 = vand.u32 %v54, 4294901760
  %3392 = vmatpush.msra.mxu0 %v3391
  %v3393 = vand.u32 %v53, 4294901760
  %3394 = vmatpush.msra.mxu0 %v3393
  %v3395 = vand.u32 %v3369, 4294901760
  %v3396 = vsub.f32 %v3369, %v3395
  %v3397 = vand.u32 %v3396, 4294901760
  %v3398 = vsub.f32 %v3396, %v3397
  %v3399 = vand.u32 %v3398, 4294901760
  %3400 = vmatmul.f32.gmra.mxu0 %v3399
  %v3401 = vpop.f32.mrf.mxu0
  %v3402 = vadd.f32 0.0, %v3401
  %3403 = vdwg.mxu0
  %3404 = vmatpush.msra.mxu0 0.0
  %3405 = vmatpush.msra.mxu0 0.0
  %3406 = vmatpush.msra.mxu0 0.0
  %3407 = vmatpush.msra.mxu0 0.0
  %3408 = vmatpush.msra.mxu0 0.0
  %3409 = vmatpush.msra.mxu0 0.0
  %3410 = vmatpush.msra.mxu0 0.0
  %3411 = vmatpush.msra.mxu0 0.0
  %v3412 = vand.u32 %v60, 4294901760
  %v3413 = vsub.f32 %v60, %v3412
  %v3414 = vand.u32 %v3413, 4294901760
  %v3415 = vsub.f32 %v3413, %v3414
  %v3416 = vand.u32 %v3415, 4294901760
  %3417 = vmatpush.msra.mxu0 %v3416
  %v3418 = vand.u32 %v59, 4294901760
  %v3419 = vsub.f32 %v59, %v3418
  %v3420 = vand.u32 %v3419, 4294901760
  %v3421 = vsub.f32 %v3419, %v3420
  %v3422 = vand.u32 %v3421, 4294901760
  %3423 = vmatpush.msra.mxu0 %v3422
  %v3424 = vand.u32 %v58, 4294901760
  %v3425 = vsub.f32 %v58, %v3424
  %v3426 = vand.u32 %v3425, 4294901760
  %v3427 = vsub.f32 %v3425, %v3426
  %v3428 = vand.u32 %v3427, 4294901760
  %3429 = vmatpush.msra.mxu0 %v3428
  %v3430 = vand.u32 %v57, 4294901760
  %v3431 = vsub.f32 %v57, %v3430
  %v3432 = vand.u32 %v3431, 4294901760
  %v3433 = vsub.f32 %v3431, %v3432
  %v3434 = vand.u32 %v3433, 4294901760
  %3435 = vmatpush.msra.mxu0 %v3434
  %v3436 = vand.u32 %v56, 4294901760
  %v3437 = vsub.f32 %v56, %v3436
  %v3438 = vand.u32 %v3437, 4294901760
  %v3439 = vsub.f32 %v3437, %v3438
  %v3440 = vand.u32 %v3439, 4294901760
  %3441 = vmatpush.msra.mxu0 %v3440
  %v3442 = vand.u32 %v55, 4294901760
  %v3443 = vsub.f32 %v55, %v3442
  %v3444 = vand.u32 %v3443, 4294901760
  %v3445 = vsub.f32 %v3443, %v3444
  %v3446 = vand.u32 %v3445, 4294901760
  %3447 = vmatpush.msra.mxu0 %v3446
  %v3448 = vand.u32 %v54, 4294901760
  %v3449 = vsub.f32 %v54, %v3448
  %v3450 = vand.u32 %v3449, 4294901760
  %v3451 = vsub.f32 %v3449, %v3450
  %v3452 = vand.u32 %v3451, 4294901760
  %3453 = vmatpush.msra.mxu0 %v3452
  %v3454 = vand.u32 %v53, 4294901760
  %v3455 = vsub.f32 %v53, %v3454
  %v3456 = vand.u32 %v3455, 4294901760
  %v3457 = vsub.f32 %v3455, %v3456
  %v3458 = vand.u32 %v3457, 4294901760
  %3459 = vmatpush.msra.mxu0 %v3458
  %v3460 = vand.u32 %v3369, 4294901760
  %3461 = vmatmul.f32.gmra.mxu0 %v3460
  %v3462 = vpop.f32.mrf.mxu0
  %v3463 = vadd.f32 %v3402, %v3462
  %3464 = vdwg.mxu0
  %3465 = vmatpush.msra.mxu0 0.0
  %3466 = vmatpush.msra.mxu0 0.0
  %3467 = vmatpush.msra.mxu0 0.0
  %3468 = vmatpush.msra.mxu0 0.0
  %3469 = vmatpush.msra.mxu0 0.0
  %3470 = vmatpush.msra.mxu0 0.0
  %3471 = vmatpush.msra.mxu0 0.0
  %3472 = vmatpush.msra.mxu0 0.0
  %v3473 = vand.u32 %v60, 4294901760
  %v3474 = vsub.f32 %v60, %v3473
  %3475 = vmatpush.msra.mxu0 %v3474
  %v3476 = vand.u32 %v59, 4294901760
  %v3477 = vsub.f32 %v59, %v3476
  %3478 = vmatpush.msra.mxu0 %v3477
  %v3479 = vand.u32 %v58, 4294901760
  %v3480 = vsub.f32 %v58, %v3479
  %3481 = vmatpush.msra.mxu0 %v3480
  %v3482 = vand.u32 %v57, 4294901760
  %v3483 = vsub.f32 %v57, %v3482
  %3484 = vmatpush.msra.mxu0 %v3483
  %v3485 = vand.u32 %v56, 4294901760
  %v3486 = vsub.f32 %v56, %v3485
  %3487 = vmatpush.msra.mxu0 %v3486
  %v3488 = vand.u32 %v55, 4294901760
  %v3489 = vsub.f32 %v55, %v3488
  %3490 = vmatpush.msra.mxu0 %v3489
  %v3491 = vand.u32 %v54, 4294901760
  %v3492 = vsub.f32 %v54, %v3491
  %3493 = vmatpush.msra.mxu0 %v3492
  %v3494 = vand.u32 %v53, 4294901760
  %v3495 = vsub.f32 %v53, %v3494
  %3496 = vmatpush.msra.mxu0 %v3495
  %v3497 = vand.u32 %v3369, 4294901760
  %v3498 = vsub.f32 %v3369, %v3497
  %3499 = vmatmul.f32.gmra.mxu0 %v3498
  %v3500 = vpop.f32.mrf.mxu0
  %v3501 = vadd.f32 %v3463, %v3500
  %3502 = vdwg.mxu0
  %3503 = vmatpush.msra.mxu0 0.0
  %3504 = vmatpush.msra.mxu0 0.0
  %3505 = vmatpush.msra.mxu0 0.0
  %3506 = vmatpush.msra.mxu0 0.0
  %3507 = vmatpush.msra.mxu0 0.0
  %3508 = vmatpush.msra.mxu0 0.0
  %3509 = vmatpush.msra.mxu0 0.0
  %3510 = vmatpush.msra.mxu0 0.0
  %v3511 = vand.u32 %v60, 4294901760
  %3512 = vmatpush.msra.mxu0 %v3511
  %v3513 = vand.u32 %v59, 4294901760
  %3514 = vmatpush.msra.mxu0 %v3513
  %v3515 = vand.u32 %v58, 4294901760
  %3516 = vmatpush.msra.mxu0 %v3515
  %v3517 = vand.u32 %v57, 4294901760
  %3518 = vmatpush.msra.mxu0 %v3517
  %v3519 = vand.u32 %v56, 4294901760
  %3520 = vmatpush.msra.mxu0 %v3519
  %v3521 = vand.u32 %v55, 4294901760
  %3522 = vmatpush.msra.mxu0 %v3521
  %v3523 = vand.u32 %v54, 4294901760
  %3524 = vmatpush.msra.mxu0 %v3523
  %v3525 = vand.u32 %v53, 4294901760
  %3526 = vmatpush.msra.mxu0 %v3525
  %v3527 = vand.u32 %v3369, 4294901760
  %v3528 = vsub.f32 %v3369, %v3527
  %v3529 = vand.u32 %v3528, 4294901760
  %3530 = vmatmul.f32.gmra.mxu0 %v3529
  %v3531 = vpop.f32.mrf.mxu0
  %v3532 = vadd.f32 %v3501, %v3531
  %3533 = vdwg.mxu0
  %3534 = vmatpush.msra.mxu0 0.0
  %3535 = vmatpush.msra.mxu0 0.0
  %3536 = vmatpush.msra.mxu0 0.0
  %3537 = vmatpush.msra.mxu0 0.0
  %3538 = vmatpush.msra.mxu0 0.0
  %3539 = vmatpush.msra.mxu0 0.0
  %3540 = vmatpush.msra.mxu0 0.0
  %3541 = vmatpush.msra.mxu0 0.0
  %v3542 = vand.u32 %v60, 4294901760
  %v3543 = vsub.f32 %v60, %v3542
  %v3544 = vand.u32 %v3543, 4294901760
  %3545 = vmatpush.msra.mxu0 %v3544
  %v3546 = vand.u32 %v59, 4294901760
  %v3547 = vsub.f32 %v59, %v3546
  %v3548 = vand.u32 %v3547, 4294901760
  %3549 = vmatpush.msra.mxu0 %v3548
  %v3550 = vand.u32 %v58, 4294901760
  %v3551 = vsub.f32 %v58, %v3550
  %v3552 = vand.u32 %v3551, 4294901760
  %3553 = vmatpush.msra.mxu0 %v3552
  %v3554 = vand.u32 %v57, 4294901760
  %v3555 = vsub.f32 %v57, %v3554
  %v3556 = vand.u32 %v3555, 4294901760
  %3557 = vmatpush.msra.mxu0 %v3556
  %v3558 = vand.u32 %v56, 4294901760
  %v3559 = vsub.f32 %v56, %v3558
  %v3560 = vand.u32 %v3559, 4294901760
  %3561 = vmatpush.msra.mxu0 %v3560
  %v3562 = vand.u32 %v55, 4294901760
  %v3563 = vsub.f32 %v55, %v3562
  %v3564 = vand.u32 %v3563, 4294901760
  %3565 = vmatpush.msra.mxu0 %v3564
  %v3566 = vand.u32 %v54, 4294901760
  %v3567 = vsub.f32 %v54, %v3566
  %v3568 = vand.u32 %v3567, 4294901760
  %3569 = vmatpush.msra.mxu0 %v3568
  %v3570 = vand.u32 %v53, 4294901760
  %v3571 = vsub.f32 %v53, %v3570
  %v3572 = vand.u32 %v3571, 4294901760
  %3573 = vmatpush.msra.mxu0 %v3572
  %v3574 = vand.u32 %v3369, 4294901760
  %3575 = vmatmul.f32.gmra.mxu0 %v3574
  %v3576 = vpop.f32.mrf.mxu0
  %v3577 = vadd.f32 %v3532, %v3576
  %3578 = vdwg.mxu0
  %3579 = vmatpush.msra.mxu0 0.0
  %3580 = vmatpush.msra.mxu0 0.0
  %3581 = vmatpush.msra.mxu0 0.0
  %3582 = vmatpush.msra.mxu0 0.0
  %3583 = vmatpush.msra.mxu0 0.0
  %3584 = vmatpush.msra.mxu0 0.0
  %3585 = vmatpush.msra.mxu0 0.0
  %3586 = vmatpush.msra.mxu0 0.0
  %v3587 = vand.u32 %v60, 4294901760
  %3588 = vmatpush.msra.mxu0 %v3587
  %v3589 = vand.u32 %v59, 4294901760
  %3590 = vmatpush.msra.mxu0 %v3589
  %v3591 = vand.u32 %v58, 4294901760
  %3592 = vmatpush.msra.mxu0 %v3591
  %v3593 = vand.u32 %v57, 4294901760
  %3594 = vmatpush.msra.mxu0 %v3593
  %v3595 = vand.u32 %v56, 4294901760
  %3596 = vmatpush.msra.mxu0 %v3595
  %v3597 = vand.u32 %v55, 4294901760
  %3598 = vmatpush.msra.mxu0 %v3597
  %v3599 = vand.u32 %v54, 4294901760
  %3600 = vmatpush.msra.mxu0 %v3599
  %v3601 = vand.u32 %v53, 4294901760
  %3602 = vmatpush.msra.mxu0 %v3601
  %v3603 = vand.u32 %v3369, 4294901760
  %3604 = vmatmul.f32.gmra.mxu0 %v3603
  %v3605 = vpop.f32.mrf.mxu0
  %v3606 = vadd.f32 %v3577, %v3605
  %3607 = vdwg.mxu0
  %v3608 = vadd.f32 %v3366, %v3606
  %v3610 = vsel %vm338, %v2665, 0
  %v3613 = vsel %vm338, %v2666, 0
  %3615 = vmatpush.msra.mxu0 0.0
  %3616 = vmatpush.msra.mxu0 0.0
  %3617 = vmatpush.msra.mxu0 0.0
  %3618 = vmatpush.msra.mxu0 0.0
  %3619 = vmatpush.msra.mxu0 0.0
  %3620 = vmatpush.msra.mxu0 0.0
  %3621 = vmatpush.msra.mxu0 0.0
  %3622 = vmatpush.msra.mxu0 0.0
  %v3623 = vand.u32 %v94, 4294901760
  %3624 = vmatpush.msra.mxu0 %v3623
  %v3625 = vand.u32 %v93, 4294901760
  %3626 = vmatpush.msra.mxu0 %v3625
  %v3627 = vand.u32 %v92, 4294901760
  %3628 = vmatpush.msra.mxu0 %v3627
  %v3629 = vand.u32 %v91, 4294901760
  %3630 = vmatpush.msra.mxu0 %v3629
  %v3631 = vand.u32 %v90, 4294901760
  %3632 = vmatpush.msra.mxu0 %v3631
  %v3633 = vand.u32 %v89, 4294901760
  %3634 = vmatpush.msra.mxu0 %v3633
  %v3635 = vand.u32 %v88, 4294901760
  %3636 = vmatpush.msra.mxu0 %v3635
  %v3637 = vand.u32 %v87, 4294901760
  %3638 = vmatpush.msra.mxu0 %v3637
  %v3639 = vand.u32 %v3610, 4294901760
  %v3640 = vsub.f32 %v3610, %v3639
  %v3641 = vand.u32 %v3640, 4294901760
  %v3642 = vsub.f32 %v3640, %v3641
  %v3643 = vand.u32 %v3642, 4294901760
  %3644 = vmatmul.f32.gmra.mxu0 %v3643
  %v3645 = vpop.f32.mrf.mxu0
  %v3646 = vadd.f32 %v1061, %v3645
  %v3647 = vand.u32 %v3613, 4294901760
  %v3648 = vsub.f32 %v3613, %v3647
  %v3649 = vand.u32 %v3648, 4294901760
  %v3650 = vsub.f32 %v3648, %v3649
  %v3651 = vand.u32 %v3650, 4294901760
  %3652 = vmatmul.f32.gmra.mxu0 %v3651
  %v3653 = vpop.f32.mrf.mxu0
  %v3654 = vadd.f32 %v1061, %v3653
  %3655 = vdwg.mxu0
  %3656 = vmatpush.msra.mxu0 0.0
  %3657 = vmatpush.msra.mxu0 0.0
  %3658 = vmatpush.msra.mxu0 0.0
  %3659 = vmatpush.msra.mxu0 0.0
  %3660 = vmatpush.msra.mxu0 0.0
  %3661 = vmatpush.msra.mxu0 0.0
  %3662 = vmatpush.msra.mxu0 0.0
  %3663 = vmatpush.msra.mxu0 0.0
  %v3664 = vand.u32 %v94, 4294901760
  %v3665 = vsub.f32 %v94, %v3664
  %v3666 = vand.u32 %v3665, 4294901760
  %v3667 = vsub.f32 %v3665, %v3666
  %v3668 = vand.u32 %v3667, 4294901760
  %3669 = vmatpush.msra.mxu0 %v3668
  %v3670 = vand.u32 %v93, 4294901760
  %v3671 = vsub.f32 %v93, %v3670
  %v3672 = vand.u32 %v3671, 4294901760
  %v3673 = vsub.f32 %v3671, %v3672
  %v3674 = vand.u32 %v3673, 4294901760
  %3675 = vmatpush.msra.mxu0 %v3674
  %v3676 = vand.u32 %v92, 4294901760
  %v3677 = vsub.f32 %v92, %v3676
  %v3678 = vand.u32 %v3677, 4294901760
  %v3679 = vsub.f32 %v3677, %v3678
  %v3680 = vand.u32 %v3679, 4294901760
  %3681 = vmatpush.msra.mxu0 %v3680
  %v3682 = vand.u32 %v91, 4294901760
  %v3683 = vsub.f32 %v91, %v3682
  %v3684 = vand.u32 %v3683, 4294901760
  %v3685 = vsub.f32 %v3683, %v3684
  %v3686 = vand.u32 %v3685, 4294901760
  %3687 = vmatpush.msra.mxu0 %v3686
  %v3688 = vand.u32 %v90, 4294901760
  %v3689 = vsub.f32 %v90, %v3688
  %v3690 = vand.u32 %v3689, 4294901760
  %v3691 = vsub.f32 %v3689, %v3690
  %v3692 = vand.u32 %v3691, 4294901760
  %3693 = vmatpush.msra.mxu0 %v3692
  %v3694 = vand.u32 %v89, 4294901760
  %v3695 = vsub.f32 %v89, %v3694
  %v3696 = vand.u32 %v3695, 4294901760
  %v3697 = vsub.f32 %v3695, %v3696
  %v3698 = vand.u32 %v3697, 4294901760
  %3699 = vmatpush.msra.mxu0 %v3698
  %v3700 = vand.u32 %v88, 4294901760
  %v3701 = vsub.f32 %v88, %v3700
  %v3702 = vand.u32 %v3701, 4294901760
  %v3703 = vsub.f32 %v3701, %v3702
  %v3704 = vand.u32 %v3703, 4294901760
  %3705 = vmatpush.msra.mxu0 %v3704
  %v3706 = vand.u32 %v87, 4294901760
  %v3707 = vsub.f32 %v87, %v3706
  %v3708 = vand.u32 %v3707, 4294901760
  %v3709 = vsub.f32 %v3707, %v3708
  %v3710 = vand.u32 %v3709, 4294901760
  %3711 = vmatpush.msra.mxu0 %v3710
  %v3712 = vand.u32 %v3610, 4294901760
  %3713 = vmatmul.f32.gmra.mxu0 %v3712
  %v3714 = vpop.f32.mrf.mxu0
  %v3715 = vadd.f32 %v3646, %v3714
  %v3716 = vand.u32 %v3613, 4294901760
  %3717 = vmatmul.f32.gmra.mxu0 %v3716
  %v3718 = vpop.f32.mrf.mxu0
  %v3719 = vadd.f32 %v3654, %v3718
  %3720 = vdwg.mxu0
  %3721 = vmatpush.msra.mxu0 0.0
  %3722 = vmatpush.msra.mxu0 0.0
  %3723 = vmatpush.msra.mxu0 0.0
  %3724 = vmatpush.msra.mxu0 0.0
  %3725 = vmatpush.msra.mxu0 0.0
  %3726 = vmatpush.msra.mxu0 0.0
  %3727 = vmatpush.msra.mxu0 0.0
  %3728 = vmatpush.msra.mxu0 0.0
  %v3729 = vand.u32 %v94, 4294901760
  %v3730 = vsub.f32 %v94, %v3729
  %3731 = vmatpush.msra.mxu0 %v3730
  %v3732 = vand.u32 %v93, 4294901760
  %v3733 = vsub.f32 %v93, %v3732
  %3734 = vmatpush.msra.mxu0 %v3733
  %v3735 = vand.u32 %v92, 4294901760
  %v3736 = vsub.f32 %v92, %v3735
  %3737 = vmatpush.msra.mxu0 %v3736
  %v3738 = vand.u32 %v91, 4294901760
  %v3739 = vsub.f32 %v91, %v3738
  %3740 = vmatpush.msra.mxu0 %v3739
  %v3741 = vand.u32 %v90, 4294901760
  %v3742 = vsub.f32 %v90, %v3741
  %3743 = vmatpush.msra.mxu0 %v3742
  %v3744 = vand.u32 %v89, 4294901760
  %v3745 = vsub.f32 %v89, %v3744
  %3746 = vmatpush.msra.mxu0 %v3745
  %v3747 = vand.u32 %v88, 4294901760
  %v3748 = vsub.f32 %v88, %v3747
  %3749 = vmatpush.msra.mxu0 %v3748
  %v3750 = vand.u32 %v87, 4294901760
  %v3751 = vsub.f32 %v87, %v3750
  %3752 = vmatpush.msra.mxu0 %v3751
  %v3753 = vand.u32 %v3610, 4294901760
  %v3754 = vsub.f32 %v3610, %v3753
  %3755 = vmatmul.f32.gmra.mxu0 %v3754
  %v3756 = vpop.f32.mrf.mxu0
  %v3757 = vadd.f32 %v3715, %v3756
  %v3758 = vand.u32 %v3613, 4294901760
  %v3759 = vsub.f32 %v3613, %v3758
  %3760 = vmatmul.f32.gmra.mxu0 %v3759
  %v3761 = vpop.f32.mrf.mxu0
  %v3762 = vadd.f32 %v3719, %v3761
  %3763 = vdwg.mxu0
  %3764 = vmatpush.msra.mxu0 0.0
  %3765 = vmatpush.msra.mxu0 0.0
  %3766 = vmatpush.msra.mxu0 0.0
  %3767 = vmatpush.msra.mxu0 0.0
  %3768 = vmatpush.msra.mxu0 0.0
  %3769 = vmatpush.msra.mxu0 0.0
  %3770 = vmatpush.msra.mxu0 0.0
  %3771 = vmatpush.msra.mxu0 0.0
  %v3772 = vand.u32 %v94, 4294901760
  %3773 = vmatpush.msra.mxu0 %v3772
  %v3774 = vand.u32 %v93, 4294901760
  %3775 = vmatpush.msra.mxu0 %v3774
  %v3776 = vand.u32 %v92, 4294901760
  %3777 = vmatpush.msra.mxu0 %v3776
  %v3778 = vand.u32 %v91, 4294901760
  %3779 = vmatpush.msra.mxu0 %v3778
  %v3780 = vand.u32 %v90, 4294901760
  %3781 = vmatpush.msra.mxu0 %v3780
  %v3782 = vand.u32 %v89, 4294901760
  %3783 = vmatpush.msra.mxu0 %v3782
  %v3784 = vand.u32 %v88, 4294901760
  %3785 = vmatpush.msra.mxu0 %v3784
  %v3786 = vand.u32 %v87, 4294901760
  %3787 = vmatpush.msra.mxu0 %v3786
  %v3788 = vand.u32 %v3610, 4294901760
  %v3789 = vsub.f32 %v3610, %v3788
  %v3790 = vand.u32 %v3789, 4294901760
  %3791 = vmatmul.f32.gmra.mxu0 %v3790
  %v3792 = vpop.f32.mrf.mxu0
  %v3793 = vadd.f32 %v3757, %v3792
  %v3794 = vand.u32 %v3613, 4294901760
  %v3795 = vsub.f32 %v3613, %v3794
  %v3796 = vand.u32 %v3795, 4294901760
  %3797 = vmatmul.f32.gmra.mxu0 %v3796
  %v3798 = vpop.f32.mrf.mxu0
  %v3799 = vadd.f32 %v3762, %v3798
  %3800 = vdwg.mxu0
  %3801 = vmatpush.msra.mxu0 0.0
  %3802 = vmatpush.msra.mxu0 0.0
  %3803 = vmatpush.msra.mxu0 0.0
  %3804 = vmatpush.msra.mxu0 0.0
  %3805 = vmatpush.msra.mxu0 0.0
  %3806 = vmatpush.msra.mxu0 0.0
  %3807 = vmatpush.msra.mxu0 0.0
  %3808 = vmatpush.msra.mxu0 0.0
  %v3809 = vand.u32 %v94, 4294901760
  %v3810 = vsub.f32 %v94, %v3809
  %v3811 = vand.u32 %v3810, 4294901760
  %3812 = vmatpush.msra.mxu0 %v3811
  %v3813 = vand.u32 %v93, 4294901760
  %v3814 = vsub.f32 %v93, %v3813
  %v3815 = vand.u32 %v3814, 4294901760
  %3816 = vmatpush.msra.mxu0 %v3815
  %v3817 = vand.u32 %v92, 4294901760
  %v3818 = vsub.f32 %v92, %v3817
  %v3819 = vand.u32 %v3818, 4294901760
  %3820 = vmatpush.msra.mxu0 %v3819
  %v3821 = vand.u32 %v91, 4294901760
  %v3822 = vsub.f32 %v91, %v3821
  %v3823 = vand.u32 %v3822, 4294901760
  %3824 = vmatpush.msra.mxu0 %v3823
  %v3825 = vand.u32 %v90, 4294901760
  %v3826 = vsub.f32 %v90, %v3825
  %v3827 = vand.u32 %v3826, 4294901760
  %3828 = vmatpush.msra.mxu0 %v3827
  %v3829 = vand.u32 %v89, 4294901760
  %v3830 = vsub.f32 %v89, %v3829
  %v3831 = vand.u32 %v3830, 4294901760
  %3832 = vmatpush.msra.mxu0 %v3831
  %v3833 = vand.u32 %v88, 4294901760
  %v3834 = vsub.f32 %v88, %v3833
  %v3835 = vand.u32 %v3834, 4294901760
  %3836 = vmatpush.msra.mxu0 %v3835
  %v3837 = vand.u32 %v87, 4294901760
  %v3838 = vsub.f32 %v87, %v3837
  %v3839 = vand.u32 %v3838, 4294901760
  %3840 = vmatpush.msra.mxu0 %v3839
  %v3841 = vand.u32 %v3610, 4294901760
  %3842 = vmatmul.f32.gmra.mxu0 %v3841
  %v3843 = vpop.f32.mrf.mxu0
  %v3844 = vadd.f32 %v3793, %v3843
  %v3845 = vand.u32 %v3613, 4294901760
  %3846 = vmatmul.f32.gmra.mxu0 %v3845
  %v3847 = vpop.f32.mrf.mxu0
  %v3848 = vadd.f32 %v3799, %v3847
  %3849 = vdwg.mxu0
  %3850 = vmatpush.msra.mxu0 0.0
  %3851 = vmatpush.msra.mxu0 0.0
  %3852 = vmatpush.msra.mxu0 0.0
  %3853 = vmatpush.msra.mxu0 0.0
  %3854 = vmatpush.msra.mxu0 0.0
  %3855 = vmatpush.msra.mxu0 0.0
  %3856 = vmatpush.msra.mxu0 0.0
  %3857 = vmatpush.msra.mxu0 0.0
  %v3858 = vand.u32 %v94, 4294901760
  %3859 = vmatpush.msra.mxu0 %v3858
  %v3860 = vand.u32 %v93, 4294901760
  %3861 = vmatpush.msra.mxu0 %v3860
  %v3862 = vand.u32 %v92, 4294901760
  %3863 = vmatpush.msra.mxu0 %v3862
  %v3864 = vand.u32 %v91, 4294901760
  %3865 = vmatpush.msra.mxu0 %v3864
  %v3866 = vand.u32 %v90, 4294901760
  %3867 = vmatpush.msra.mxu0 %v3866
  %v3868 = vand.u32 %v89, 4294901760
  %3869 = vmatpush.msra.mxu0 %v3868
  %v3870 = vand.u32 %v88, 4294901760
  %3871 = vmatpush.msra.mxu0 %v3870
  %v3872 = vand.u32 %v87, 4294901760
  %3873 = vmatpush.msra.mxu0 %v3872
  %v3874 = vand.u32 %v3610, 4294901760
  %3875 = vmatmul.f32.gmra.mxu0 %v3874
  %v3876 = vpop.f32.mrf.mxu0
  %v3877 = vadd.f32 %v3844, %v3876
  %v3878 = vand.u32 %v3613, 4294901760
  %3879 = vmatmul.f32.gmra.mxu0 %v3878
  %v3880 = vpop.f32.mrf.mxu0
  %v3881 = vadd.f32 %v3848, %v3880
  %3882 = vdwg.mxu0
  %v3883 = vmax.f32 %v3877, 0.0
  %v3884 = vmax.f32 %v3881, 0.0
  %3885 = vmatpush.msra.mxu0 0.0
  %3886 = vmatpush.msra.mxu0 0.0
  %3887 = vmatpush.msra.mxu0 0.0
  %3888 = vmatpush.msra.mxu0 0.0
  %3889 = vmatpush.msra.mxu0 0.0
  %3890 = vmatpush.msra.mxu0 0.0
  %3891 = vmatpush.msra.mxu0 0.0
  %3892 = vmatpush.msra.mxu0 0.0
  %3893 = vmatpush.msra.mxu0 0.0
  %3894 = vmatpush.msra.mxu0 0.0
  %3895 = vmatpush.msra.mxu0 0.0
  %3896 = vmatpush.msra.mxu0 0.0
  %3897 = vmatpush.msra.mxu0 0.0
  %3898 = vmatpush.msra.mxu0 0.0
  %v3899 = vand.u32 %v3884, 4294901760
  %3900 = vmatpush.msra.mxu0 %v3899
  %v3901 = vand.u32 %v3883, 4294901760
  %3902 = vmatpush.msra.mxu0 %v3901
  %v3903 = vand.u32 %v109, 4294901760
  %v3904 = vsub.f32 %v109, %v3903
  %v3905 = vand.u32 %v3904, 4294901760
  %v3906 = vsub.f32 %v3904, %v3905
  %v3907 = vand.u32 %v3906, 4294901760
  %3908 = vmatmul.f32.gmra.mxu0 %v3907
  %v3909 = vpop.f32.mrf.mxu0
  %v3910 = vadd.f32 0.0, %v3909
  %v3911 = vand.u32 %v112, 4294901760
  %v3912 = vsub.f32 %v112, %v3911
  %v3913 = vand.u32 %v3912, 4294901760
  %v3914 = vsub.f32 %v3912, %v3913
  %v3915 = vand.u32 %v3914, 4294901760
  %3916 = vmatmul.f32.gmra.mxu0 %v3915
  %v3917 = vpop.f32.mrf.mxu0
  %v3918 = vadd.f32 0.0, %v3917
  %v3919 = vand.u32 %v115, 4294901760
  %v3920 = vsub.f32 %v115, %v3919
  %v3921 = vand.u32 %v3920, 4294901760
  %v3922 = vsub.f32 %v3920, %v3921
  %v3923 = vand.u32 %v3922, 4294901760
  %3924 = vmatmul.f32.gmra.mxu0 %v3923
  %v3925 = vpop.f32.mrf.mxu0
  %v3926 = vadd.f32 0.0, %v3925
  %3927 = vdwg.mxu0
  %3928 = vmatpush.msra.mxu0 0.0
  %3929 = vmatpush.msra.mxu0 0.0
  %3930 = vmatpush.msra.mxu0 0.0
  %3931 = vmatpush.msra.mxu0 0.0
  %3932 = vmatpush.msra.mxu0 0.0
  %3933 = vmatpush.msra.mxu0 0.0
  %3934 = vmatpush.msra.mxu0 0.0
  %3935 = vmatpush.msra.mxu0 0.0
  %3936 = vmatpush.msra.mxu0 0.0
  %3937 = vmatpush.msra.mxu0 0.0
  %3938 = vmatpush.msra.mxu0 0.0
  %3939 = vmatpush.msra.mxu0 0.0
  %3940 = vmatpush.msra.mxu0 0.0
  %3941 = vmatpush.msra.mxu0 0.0
  %v3942 = vand.u32 %v3884, 4294901760
  %v3943 = vsub.f32 %v3884, %v3942
  %v3944 = vand.u32 %v3943, 4294901760
  %v3945 = vsub.f32 %v3943, %v3944
  %v3946 = vand.u32 %v3945, 4294901760
  %3947 = vmatpush.msra.mxu0 %v3946
  %v3948 = vand.u32 %v3883, 4294901760
  %v3949 = vsub.f32 %v3883, %v3948
  %v3950 = vand.u32 %v3949, 4294901760
  %v3951 = vsub.f32 %v3949, %v3950
  %v3952 = vand.u32 %v3951, 4294901760
  %3953 = vmatpush.msra.mxu0 %v3952
  %v3954 = vand.u32 %v109, 4294901760
  %3955 = vmatmul.f32.gmra.mxu0 %v3954
  %v3956 = vpop.f32.mrf.mxu0
  %v3957 = vadd.f32 %v3910, %v3956
  %v3958 = vand.u32 %v112, 4294901760
  %3959 = vmatmul.f32.gmra.mxu0 %v3958
  %v3960 = vpop.f32.mrf.mxu0
  %v3961 = vadd.f32 %v3918, %v3960
  %v3962 = vand.u32 %v115, 4294901760
  %3963 = vmatmul.f32.gmra.mxu0 %v3962
  %v3964 = vpop.f32.mrf.mxu0
  %v3965 = vadd.f32 %v3926, %v3964
  %3966 = vdwg.mxu0
  %3967 = vmatpush.msra.mxu0 0.0
  %3968 = vmatpush.msra.mxu0 0.0
  %3969 = vmatpush.msra.mxu0 0.0
  %3970 = vmatpush.msra.mxu0 0.0
  %3971 = vmatpush.msra.mxu0 0.0
  %3972 = vmatpush.msra.mxu0 0.0
  %3973 = vmatpush.msra.mxu0 0.0
  %3974 = vmatpush.msra.mxu0 0.0
  %3975 = vmatpush.msra.mxu0 0.0
  %3976 = vmatpush.msra.mxu0 0.0
  %3977 = vmatpush.msra.mxu0 0.0
  %3978 = vmatpush.msra.mxu0 0.0
  %3979 = vmatpush.msra.mxu0 0.0
  %3980 = vmatpush.msra.mxu0 0.0
  %v3981 = vand.u32 %v3884, 4294901760
  %v3982 = vsub.f32 %v3884, %v3981
  %3983 = vmatpush.msra.mxu0 %v3982
  %v3984 = vand.u32 %v3883, 4294901760
  %v3985 = vsub.f32 %v3883, %v3984
  %3986 = vmatpush.msra.mxu0 %v3985
  %v3987 = vand.u32 %v109, 4294901760
  %v3988 = vsub.f32 %v109, %v3987
  %3989 = vmatmul.f32.gmra.mxu0 %v3988
  %v3990 = vpop.f32.mrf.mxu0
  %v3991 = vadd.f32 %v3957, %v3990
  %v3992 = vand.u32 %v112, 4294901760
  %v3993 = vsub.f32 %v112, %v3992
  %3994 = vmatmul.f32.gmra.mxu0 %v3993
  %v3995 = vpop.f32.mrf.mxu0
  %v3996 = vadd.f32 %v3961, %v3995
  %v3997 = vand.u32 %v115, 4294901760
  %v3998 = vsub.f32 %v115, %v3997
  %3999 = vmatmul.f32.gmra.mxu0 %v3998
  %v4000 = vpop.f32.mrf.mxu0
  %v4001 = vadd.f32 %v3965, %v4000
  %4002 = vdwg.mxu0
  %4003 = vmatpush.msra.mxu0 0.0
  %4004 = vmatpush.msra.mxu0 0.0
  %4005 = vmatpush.msra.mxu0 0.0
  %4006 = vmatpush.msra.mxu0 0.0
  %4007 = vmatpush.msra.mxu0 0.0
  %4008 = vmatpush.msra.mxu0 0.0
  %4009 = vmatpush.msra.mxu0 0.0
  %4010 = vmatpush.msra.mxu0 0.0
  %4011 = vmatpush.msra.mxu0 0.0
  %4012 = vmatpush.msra.mxu0 0.0
  %4013 = vmatpush.msra.mxu0 0.0
  %4014 = vmatpush.msra.mxu0 0.0
  %4015 = vmatpush.msra.mxu0 0.0
  %4016 = vmatpush.msra.mxu0 0.0
  %v4017 = vand.u32 %v3884, 4294901760
  %4018 = vmatpush.msra.mxu0 %v4017
  %v4019 = vand.u32 %v3883, 4294901760
  %4020 = vmatpush.msra.mxu0 %v4019
  %v4021 = vand.u32 %v109, 4294901760
  %v4022 = vsub.f32 %v109, %v4021
  %v4023 = vand.u32 %v4022, 4294901760
  %4024 = vmatmul.f32.gmra.mxu0 %v4023
  %v4025 = vpop.f32.mrf.mxu0
  %v4026 = vadd.f32 %v3991, %v4025
  %v4027 = vand.u32 %v112, 4294901760
  %v4028 = vsub.f32 %v112, %v4027
  %v4029 = vand.u32 %v4028, 4294901760
  %4030 = vmatmul.f32.gmra.mxu0 %v4029
  %v4031 = vpop.f32.mrf.mxu0
  %v4032 = vadd.f32 %v3996, %v4031
  %v4033 = vand.u32 %v115, 4294901760
  %v4034 = vsub.f32 %v115, %v4033
  %v4035 = vand.u32 %v4034, 4294901760
  %4036 = vmatmul.f32.gmra.mxu0 %v4035
  %v4037 = vpop.f32.mrf.mxu0
  %v4038 = vadd.f32 %v4001, %v4037
  %4039 = vdwg.mxu0
  %4040 = vmatpush.msra.mxu0 0.0
  %4041 = vmatpush.msra.mxu0 0.0
  %4042 = vmatpush.msra.mxu0 0.0
  %4043 = vmatpush.msra.mxu0 0.0
  %4044 = vmatpush.msra.mxu0 0.0
  %4045 = vmatpush.msra.mxu0 0.0
  %4046 = vmatpush.msra.mxu0 0.0
  %4047 = vmatpush.msra.mxu0 0.0
  %4048 = vmatpush.msra.mxu0 0.0
  %4049 = vmatpush.msra.mxu0 0.0
  %4050 = vmatpush.msra.mxu0 0.0
  %4051 = vmatpush.msra.mxu0 0.0
  %4052 = vmatpush.msra.mxu0 0.0
  %4053 = vmatpush.msra.mxu0 0.0
  %v4054 = vand.u32 %v3884, 4294901760
  %v4055 = vsub.f32 %v3884, %v4054
  %v4056 = vand.u32 %v4055, 4294901760
  %4057 = vmatpush.msra.mxu0 %v4056
  %v4058 = vand.u32 %v3883, 4294901760
  %v4059 = vsub.f32 %v3883, %v4058
  %v4060 = vand.u32 %v4059, 4294901760
  %4061 = vmatpush.msra.mxu0 %v4060
  %v4062 = vand.u32 %v109, 4294901760
  %4063 = vmatmul.f32.gmra.mxu0 %v4062
  %v4064 = vpop.f32.mrf.mxu0
  %v4065 = vadd.f32 %v4026, %v4064
  %v4066 = vand.u32 %v112, 4294901760
  %4067 = vmatmul.f32.gmra.mxu0 %v4066
  %v4068 = vpop.f32.mrf.mxu0
  %v4069 = vadd.f32 %v4032, %v4068
  %v4070 = vand.u32 %v115, 4294901760
  %4071 = vmatmul.f32.gmra.mxu0 %v4070
  %v4072 = vpop.f32.mrf.mxu0
  %v4073 = vadd.f32 %v4038, %v4072
  %4074 = vdwg.mxu0
  %4075 = vmatpush.msra.mxu0 0.0
  %4076 = vmatpush.msra.mxu0 0.0
  %4077 = vmatpush.msra.mxu0 0.0
  %4078 = vmatpush.msra.mxu0 0.0
  %4079 = vmatpush.msra.mxu0 0.0
  %4080 = vmatpush.msra.mxu0 0.0
  %4081 = vmatpush.msra.mxu0 0.0
  %4082 = vmatpush.msra.mxu0 0.0
  %4083 = vmatpush.msra.mxu0 0.0
  %4084 = vmatpush.msra.mxu0 0.0
  %4085 = vmatpush.msra.mxu0 0.0
  %4086 = vmatpush.msra.mxu0 0.0
  %4087 = vmatpush.msra.mxu0 0.0
  %4088 = vmatpush.msra.mxu0 0.0
  %v4089 = vand.u32 %v3884, 4294901760
  %4090 = vmatpush.msra.mxu0 %v4089
  %v4091 = vand.u32 %v3883, 4294901760
  %4092 = vmatpush.msra.mxu0 %v4091
  %v4093 = vand.u32 %v109, 4294901760
  %4094 = vmatmul.f32.gmra.mxu0 %v4093
  %v4095 = vpop.f32.mrf.mxu0
  %v4096 = vadd.f32 %v4065, %v4095
  %v4097 = vand.u32 %v112, 4294901760
  %4098 = vmatmul.f32.gmra.mxu0 %v4097
  %v4099 = vpop.f32.mrf.mxu0
  %v4100 = vadd.f32 %v4069, %v4099
  %v4101 = vand.u32 %v115, 4294901760
  %4102 = vmatmul.f32.gmra.mxu0 %v4101
  %v4103 = vpop.f32.mrf.mxu0
  %v4104 = vadd.f32 %v4073, %v4103
  %4105 = vdwg.mxu0
  %v4107 = vsel %vm338, %v4100, 0
  %4109 = vmatpush.msra.mxu0 0.0
  %4110 = vmatpush.msra.mxu0 0.0
  %4111 = vmatpush.msra.mxu0 0.0
  %4112 = vmatpush.msra.mxu0 0.0
  %4113 = vmatpush.msra.mxu0 0.0
  %4114 = vmatpush.msra.mxu0 0.0
  %4115 = vmatpush.msra.mxu0 0.0
  %4116 = vmatpush.msra.mxu0 0.0
  %v4117 = vand.u32 %v77, 4294901760
  %4118 = vmatpush.msra.mxu0 %v4117
  %v4119 = vand.u32 %v76, 4294901760
  %4120 = vmatpush.msra.mxu0 %v4119
  %v4121 = vand.u32 %v75, 4294901760
  %4122 = vmatpush.msra.mxu0 %v4121
  %v4123 = vand.u32 %v74, 4294901760
  %4124 = vmatpush.msra.mxu0 %v4123
  %v4125 = vand.u32 %v73, 4294901760
  %4126 = vmatpush.msra.mxu0 %v4125
  %v4127 = vand.u32 %v72, 4294901760
  %4128 = vmatpush.msra.mxu0 %v4127
  %v4129 = vand.u32 %v71, 4294901760
  %4130 = vmatpush.msra.mxu0 %v4129
  %v4131 = vand.u32 %v70, 4294901760
  %4132 = vmatpush.msra.mxu0 %v4131
  %v4133 = vand.u32 %v4107, 4294901760
  %v4134 = vsub.f32 %v4107, %v4133
  %v4135 = vand.u32 %v4134, 4294901760
  %v4136 = vsub.f32 %v4134, %v4135
  %v4137 = vand.u32 %v4136, 4294901760
  %4138 = vmatmul.f32.gmra.mxu0 %v4137
  %v4139 = vpop.f32.mrf.mxu0
  %v4140 = vadd.f32 0.0, %v4139
  %4141 = vdwg.mxu0
  %4142 = vmatpush.msra.mxu0 0.0
  %4143 = vmatpush.msra.mxu0 0.0
  %4144 = vmatpush.msra.mxu0 0.0
  %4145 = vmatpush.msra.mxu0 0.0
  %4146 = vmatpush.msra.mxu0 0.0
  %4147 = vmatpush.msra.mxu0 0.0
  %4148 = vmatpush.msra.mxu0 0.0
  %4149 = vmatpush.msra.mxu0 0.0
  %v4150 = vand.u32 %v77, 4294901760
  %v4151 = vsub.f32 %v77, %v4150
  %v4152 = vand.u32 %v4151, 4294901760
  %v4153 = vsub.f32 %v4151, %v4152
  %v4154 = vand.u32 %v4153, 4294901760
  %4155 = vmatpush.msra.mxu0 %v4154
  %v4156 = vand.u32 %v76, 4294901760
  %v4157 = vsub.f32 %v76, %v4156
  %v4158 = vand.u32 %v4157, 4294901760
  %v4159 = vsub.f32 %v4157, %v4158
  %v4160 = vand.u32 %v4159, 4294901760
  %4161 = vmatpush.msra.mxu0 %v4160
  %v4162 = vand.u32 %v75, 4294901760
  %v4163 = vsub.f32 %v75, %v4162
  %v4164 = vand.u32 %v4163, 4294901760
  %v4165 = vsub.f32 %v4163, %v4164
  %v4166 = vand.u32 %v4165, 4294901760
  %4167 = vmatpush.msra.mxu0 %v4166
  %v4168 = vand.u32 %v74, 4294901760
  %v4169 = vsub.f32 %v74, %v4168
  %v4170 = vand.u32 %v4169, 4294901760
  %v4171 = vsub.f32 %v4169, %v4170
  %v4172 = vand.u32 %v4171, 4294901760
  %4173 = vmatpush.msra.mxu0 %v4172
  %v4174 = vand.u32 %v73, 4294901760
  %v4175 = vsub.f32 %v73, %v4174
  %v4176 = vand.u32 %v4175, 4294901760
  %v4177 = vsub.f32 %v4175, %v4176
  %v4178 = vand.u32 %v4177, 4294901760
  %4179 = vmatpush.msra.mxu0 %v4178
  %v4180 = vand.u32 %v72, 4294901760
  %v4181 = vsub.f32 %v72, %v4180
  %v4182 = vand.u32 %v4181, 4294901760
  %v4183 = vsub.f32 %v4181, %v4182
  %v4184 = vand.u32 %v4183, 4294901760
  %4185 = vmatpush.msra.mxu0 %v4184
  %v4186 = vand.u32 %v71, 4294901760
  %v4187 = vsub.f32 %v71, %v4186
  %v4188 = vand.u32 %v4187, 4294901760
  %v4189 = vsub.f32 %v4187, %v4188
  %v4190 = vand.u32 %v4189, 4294901760
  %4191 = vmatpush.msra.mxu0 %v4190
  %v4192 = vand.u32 %v70, 4294901760
  %v4193 = vsub.f32 %v70, %v4192
  %v4194 = vand.u32 %v4193, 4294901760
  %v4195 = vsub.f32 %v4193, %v4194
  %v4196 = vand.u32 %v4195, 4294901760
  %4197 = vmatpush.msra.mxu0 %v4196
  %v4198 = vand.u32 %v4107, 4294901760
  %4199 = vmatmul.f32.gmra.mxu0 %v4198
  %v4200 = vpop.f32.mrf.mxu0
  %v4201 = vadd.f32 %v4140, %v4200
  %4202 = vdwg.mxu0
  %4203 = vmatpush.msra.mxu0 0.0
  %4204 = vmatpush.msra.mxu0 0.0
  %4205 = vmatpush.msra.mxu0 0.0
  %4206 = vmatpush.msra.mxu0 0.0
  %4207 = vmatpush.msra.mxu0 0.0
  %4208 = vmatpush.msra.mxu0 0.0
  %4209 = vmatpush.msra.mxu0 0.0
  %4210 = vmatpush.msra.mxu0 0.0
  %v4211 = vand.u32 %v77, 4294901760
  %v4212 = vsub.f32 %v77, %v4211
  %4213 = vmatpush.msra.mxu0 %v4212
  %v4214 = vand.u32 %v76, 4294901760
  %v4215 = vsub.f32 %v76, %v4214
  %4216 = vmatpush.msra.mxu0 %v4215
  %v4217 = vand.u32 %v75, 4294901760
  %v4218 = vsub.f32 %v75, %v4217
  %4219 = vmatpush.msra.mxu0 %v4218
  %v4220 = vand.u32 %v74, 4294901760
  %v4221 = vsub.f32 %v74, %v4220
  %4222 = vmatpush.msra.mxu0 %v4221
  %v4223 = vand.u32 %v73, 4294901760
  %v4224 = vsub.f32 %v73, %v4223
  %4225 = vmatpush.msra.mxu0 %v4224
  %v4226 = vand.u32 %v72, 4294901760
  %v4227 = vsub.f32 %v72, %v4226
  %4228 = vmatpush.msra.mxu0 %v4227
  %v4229 = vand.u32 %v71, 4294901760
  %v4230 = vsub.f32 %v71, %v4229
  %4231 = vmatpush.msra.mxu0 %v4230
  %v4232 = vand.u32 %v70, 4294901760
  %v4233 = vsub.f32 %v70, %v4232
  %4234 = vmatpush.msra.mxu0 %v4233
  %v4235 = vand.u32 %v4107, 4294901760
  %v4236 = vsub.f32 %v4107, %v4235
  %4237 = vmatmul.f32.gmra.mxu0 %v4236
  %v4238 = vpop.f32.mrf.mxu0
  %v4239 = vadd.f32 %v4201, %v4238
  %4240 = vdwg.mxu0
  %4241 = vmatpush.msra.mxu0 0.0
  %4242 = vmatpush.msra.mxu0 0.0
  %4243 = vmatpush.msra.mxu0 0.0
  %4244 = vmatpush.msra.mxu0 0.0
  %4245 = vmatpush.msra.mxu0 0.0
  %4246 = vmatpush.msra.mxu0 0.0
  %4247 = vmatpush.msra.mxu0 0.0
  %4248 = vmatpush.msra.mxu0 0.0
  %v4249 = vand.u32 %v77, 4294901760
  %4250 = vmatpush.msra.mxu0 %v4249
  %v4251 = vand.u32 %v76, 4294901760
  %4252 = vmatpush.msra.mxu0 %v4251
  %v4253 = vand.u32 %v75, 4294901760
  %4254 = vmatpush.msra.mxu0 %v4253
  %v4255 = vand.u32 %v74, 4294901760
  %4256 = vmatpush.msra.mxu0 %v4255
  %v4257 = vand.u32 %v73, 4294901760
  %4258 = vmatpush.msra.mxu0 %v4257
  %v4259 = vand.u32 %v72, 4294901760
  %4260 = vmatpush.msra.mxu0 %v4259
  %v4261 = vand.u32 %v71, 4294901760
  %4262 = vmatpush.msra.mxu0 %v4261
  %v4263 = vand.u32 %v70, 4294901760
  %4264 = vmatpush.msra.mxu0 %v4263
  %v4265 = vand.u32 %v4107, 4294901760
  %v4266 = vsub.f32 %v4107, %v4265
  %v4267 = vand.u32 %v4266, 4294901760
  %4268 = vmatmul.f32.gmra.mxu0 %v4267
  %v4269 = vpop.f32.mrf.mxu0
  %v4270 = vadd.f32 %v4239, %v4269
  %4271 = vdwg.mxu0
  %4272 = vmatpush.msra.mxu0 0.0
  %4273 = vmatpush.msra.mxu0 0.0
  %4274 = vmatpush.msra.mxu0 0.0
  %4275 = vmatpush.msra.mxu0 0.0
  %4276 = vmatpush.msra.mxu0 0.0
  %4277 = vmatpush.msra.mxu0 0.0
  %4278 = vmatpush.msra.mxu0 0.0
  %4279 = vmatpush.msra.mxu0 0.0
  %v4280 = vand.u32 %v77, 4294901760
  %v4281 = vsub.f32 %v77, %v4280
  %v4282 = vand.u32 %v4281, 4294901760
  %4283 = vmatpush.msra.mxu0 %v4282
  %v4284 = vand.u32 %v76, 4294901760
  %v4285 = vsub.f32 %v76, %v4284
  %v4286 = vand.u32 %v4285, 4294901760
  %4287 = vmatpush.msra.mxu0 %v4286
  %v4288 = vand.u32 %v75, 4294901760
  %v4289 = vsub.f32 %v75, %v4288
  %v4290 = vand.u32 %v4289, 4294901760
  %4291 = vmatpush.msra.mxu0 %v4290
  %v4292 = vand.u32 %v74, 4294901760
  %v4293 = vsub.f32 %v74, %v4292
  %v4294 = vand.u32 %v4293, 4294901760
  %4295 = vmatpush.msra.mxu0 %v4294
  %v4296 = vand.u32 %v73, 4294901760
  %v4297 = vsub.f32 %v73, %v4296
  %v4298 = vand.u32 %v4297, 4294901760
  %4299 = vmatpush.msra.mxu0 %v4298
  %v4300 = vand.u32 %v72, 4294901760
  %v4301 = vsub.f32 %v72, %v4300
  %v4302 = vand.u32 %v4301, 4294901760
  %4303 = vmatpush.msra.mxu0 %v4302
  %v4304 = vand.u32 %v71, 4294901760
  %v4305 = vsub.f32 %v71, %v4304
  %v4306 = vand.u32 %v4305, 4294901760
  %4307 = vmatpush.msra.mxu0 %v4306
  %v4308 = vand.u32 %v70, 4294901760
  %v4309 = vsub.f32 %v70, %v4308
  %v4310 = vand.u32 %v4309, 4294901760
  %4311 = vmatpush.msra.mxu0 %v4310
  %v4312 = vand.u32 %v4107, 4294901760
  %4313 = vmatmul.f32.gmra.mxu0 %v4312
  %v4314 = vpop.f32.mrf.mxu0
  %v4315 = vadd.f32 %v4270, %v4314
  %4316 = vdwg.mxu0
  %4317 = vmatpush.msra.mxu0 0.0
  %4318 = vmatpush.msra.mxu0 0.0
  %4319 = vmatpush.msra.mxu0 0.0
  %4320 = vmatpush.msra.mxu0 0.0
  %4321 = vmatpush.msra.mxu0 0.0
  %4322 = vmatpush.msra.mxu0 0.0
  %4323 = vmatpush.msra.mxu0 0.0
  %4324 = vmatpush.msra.mxu0 0.0
  %v4325 = vand.u32 %v77, 4294901760
  %4326 = vmatpush.msra.mxu0 %v4325
  %v4327 = vand.u32 %v76, 4294901760
  %4328 = vmatpush.msra.mxu0 %v4327
  %v4329 = vand.u32 %v75, 4294901760
  %4330 = vmatpush.msra.mxu0 %v4329
  %v4331 = vand.u32 %v74, 4294901760
  %4332 = vmatpush.msra.mxu0 %v4331
  %v4333 = vand.u32 %v73, 4294901760
  %4334 = vmatpush.msra.mxu0 %v4333
  %v4335 = vand.u32 %v72, 4294901760
  %4336 = vmatpush.msra.mxu0 %v4335
  %v4337 = vand.u32 %v71, 4294901760
  %4338 = vmatpush.msra.mxu0 %v4337
  %v4339 = vand.u32 %v70, 4294901760
  %4340 = vmatpush.msra.mxu0 %v4339
  %v4341 = vand.u32 %v4107, 4294901760
  %4342 = vmatmul.f32.gmra.mxu0 %v4341
  %v4343 = vpop.f32.mrf.mxu0
  %v4344 = vadd.f32 %v4315, %v4343
  %4345 = vdwg.mxu0
  %v4347 = vsel %vm338, %v4096, 0
  %4349 = vmatpush.msra.mxu0 0.0
  %4350 = vmatpush.msra.mxu0 0.0
  %4351 = vmatpush.msra.mxu0 0.0
  %4352 = vmatpush.msra.mxu0 0.0
  %4353 = vmatpush.msra.mxu0 0.0
  %4354 = vmatpush.msra.mxu0 0.0
  %4355 = vmatpush.msra.mxu0 0.0
  %4356 = vmatpush.msra.mxu0 0.0
  %v4357 = vand.u32 %v68, 4294901760
  %4358 = vmatpush.msra.mxu0 %v4357
  %v4359 = vand.u32 %v67, 4294901760
  %4360 = vmatpush.msra.mxu0 %v4359
  %v4361 = vand.u32 %v66, 4294901760
  %4362 = vmatpush.msra.mxu0 %v4361
  %v4363 = vand.u32 %v65, 4294901760
  %4364 = vmatpush.msra.mxu0 %v4363
  %v4365 = vand.u32 %v64, 4294901760
  %4366 = vmatpush.msra.mxu0 %v4365
  %v4367 = vand.u32 %v63, 4294901760
  %4368 = vmatpush.msra.mxu0 %v4367
  %v4369 = vand.u32 %v62, 4294901760
  %4370 = vmatpush.msra.mxu0 %v4369
  %v4371 = vand.u32 %v61, 4294901760
  %4372 = vmatpush.msra.mxu0 %v4371
  %v4373 = vand.u32 %v4347, 4294901760
  %v4374 = vsub.f32 %v4347, %v4373
  %v4375 = vand.u32 %v4374, 4294901760
  %v4376 = vsub.f32 %v4374, %v4375
  %v4377 = vand.u32 %v4376, 4294901760
  %4378 = vmatmul.f32.gmra.mxu0 %v4377
  %v4379 = vpop.f32.mrf.mxu0
  %v4380 = vadd.f32 %v4344, %v4379
  %4381 = vdwg.mxu0
  %4382 = vmatpush.msra.mxu0 0.0
  %4383 = vmatpush.msra.mxu0 0.0
  %4384 = vmatpush.msra.mxu0 0.0
  %4385 = vmatpush.msra.mxu0 0.0
  %4386 = vmatpush.msra.mxu0 0.0
  %4387 = vmatpush.msra.mxu0 0.0
  %4388 = vmatpush.msra.mxu0 0.0
  %4389 = vmatpush.msra.mxu0 0.0
  %v4390 = vand.u32 %v68, 4294901760
  %v4391 = vsub.f32 %v68, %v4390
  %v4392 = vand.u32 %v4391, 4294901760
  %v4393 = vsub.f32 %v4391, %v4392
  %v4394 = vand.u32 %v4393, 4294901760
  %4395 = vmatpush.msra.mxu0 %v4394
  %v4396 = vand.u32 %v67, 4294901760
  %v4397 = vsub.f32 %v67, %v4396
  %v4398 = vand.u32 %v4397, 4294901760
  %v4399 = vsub.f32 %v4397, %v4398
  %v4400 = vand.u32 %v4399, 4294901760
  %4401 = vmatpush.msra.mxu0 %v4400
  %v4402 = vand.u32 %v66, 4294901760
  %v4403 = vsub.f32 %v66, %v4402
  %v4404 = vand.u32 %v4403, 4294901760
  %v4405 = vsub.f32 %v4403, %v4404
  %v4406 = vand.u32 %v4405, 4294901760
  %4407 = vmatpush.msra.mxu0 %v4406
  %v4408 = vand.u32 %v65, 4294901760
  %v4409 = vsub.f32 %v65, %v4408
  %v4410 = vand.u32 %v4409, 4294901760
  %v4411 = vsub.f32 %v4409, %v4410
  %v4412 = vand.u32 %v4411, 4294901760
  %4413 = vmatpush.msra.mxu0 %v4412
  %v4414 = vand.u32 %v64, 4294901760
  %v4415 = vsub.f32 %v64, %v4414
  %v4416 = vand.u32 %v4415, 4294901760
  %v4417 = vsub.f32 %v4415, %v4416
  %v4418 = vand.u32 %v4417, 4294901760
  %4419 = vmatpush.msra.mxu0 %v4418
  %v4420 = vand.u32 %v63, 4294901760
  %v4421 = vsub.f32 %v63, %v4420
  %v4422 = vand.u32 %v4421, 4294901760
  %v4423 = vsub.f32 %v4421, %v4422
  %v4424 = vand.u32 %v4423, 4294901760
  %4425 = vmatpush.msra.mxu0 %v4424
  %v4426 = vand.u32 %v62, 4294901760
  %v4427 = vsub.f32 %v62, %v4426
  %v4428 = vand.u32 %v4427, 4294901760
  %v4429 = vsub.f32 %v4427, %v4428
  %v4430 = vand.u32 %v4429, 4294901760
  %4431 = vmatpush.msra.mxu0 %v4430
  %v4432 = vand.u32 %v61, 4294901760
  %v4433 = vsub.f32 %v61, %v4432
  %v4434 = vand.u32 %v4433, 4294901760
  %v4435 = vsub.f32 %v4433, %v4434
  %v4436 = vand.u32 %v4435, 4294901760
  %4437 = vmatpush.msra.mxu0 %v4436
  %v4438 = vand.u32 %v4347, 4294901760
  %4439 = vmatmul.f32.gmra.mxu0 %v4438
  %v4440 = vpop.f32.mrf.mxu0
  %v4441 = vadd.f32 %v4380, %v4440
  %4442 = vdwg.mxu0
  %4443 = vmatpush.msra.mxu0 0.0
  %4444 = vmatpush.msra.mxu0 0.0
  %4445 = vmatpush.msra.mxu0 0.0
  %4446 = vmatpush.msra.mxu0 0.0
  %4447 = vmatpush.msra.mxu0 0.0
  %4448 = vmatpush.msra.mxu0 0.0
  %4449 = vmatpush.msra.mxu0 0.0
  %4450 = vmatpush.msra.mxu0 0.0
  %v4451 = vand.u32 %v68, 4294901760
  %v4452 = vsub.f32 %v68, %v4451
  %4453 = vmatpush.msra.mxu0 %v4452
  %v4454 = vand.u32 %v67, 4294901760
  %v4455 = vsub.f32 %v67, %v4454
  %4456 = vmatpush.msra.mxu0 %v4455
  %v4457 = vand.u32 %v66, 4294901760
  %v4458 = vsub.f32 %v66, %v4457
  %4459 = vmatpush.msra.mxu0 %v4458
  %v4460 = vand.u32 %v65, 4294901760
  %v4461 = vsub.f32 %v65, %v4460
  %4462 = vmatpush.msra.mxu0 %v4461
  %v4463 = vand.u32 %v64, 4294901760
  %v4464 = vsub.f32 %v64, %v4463
  %4465 = vmatpush.msra.mxu0 %v4464
  %v4466 = vand.u32 %v63, 4294901760
  %v4467 = vsub.f32 %v63, %v4466
  %4468 = vmatpush.msra.mxu0 %v4467
  %v4469 = vand.u32 %v62, 4294901760
  %v4470 = vsub.f32 %v62, %v4469
  %4471 = vmatpush.msra.mxu0 %v4470
  %v4472 = vand.u32 %v61, 4294901760
  %v4473 = vsub.f32 %v61, %v4472
  %4474 = vmatpush.msra.mxu0 %v4473
  %v4475 = vand.u32 %v4347, 4294901760
  %v4476 = vsub.f32 %v4347, %v4475
  %4477 = vmatmul.f32.gmra.mxu0 %v4476
  %v4478 = vpop.f32.mrf.mxu0
  %v4479 = vadd.f32 %v4441, %v4478
  %4480 = vdwg.mxu0
  %4481 = vmatpush.msra.mxu0 0.0
  %4482 = vmatpush.msra.mxu0 0.0
  %4483 = vmatpush.msra.mxu0 0.0
  %4484 = vmatpush.msra.mxu0 0.0
  %4485 = vmatpush.msra.mxu0 0.0
  %4486 = vmatpush.msra.mxu0 0.0
  %4487 = vmatpush.msra.mxu0 0.0
  %4488 = vmatpush.msra.mxu0 0.0
  %v4489 = vand.u32 %v68, 4294901760
  %4490 = vmatpush.msra.mxu0 %v4489
  %v4491 = vand.u32 %v67, 4294901760
  %4492 = vmatpush.msra.mxu0 %v4491
  %v4493 = vand.u32 %v66, 4294901760
  %4494 = vmatpush.msra.mxu0 %v4493
  %v4495 = vand.u32 %v65, 4294901760
  %4496 = vmatpush.msra.mxu0 %v4495
  %v4497 = vand.u32 %v64, 4294901760
  %4498 = vmatpush.msra.mxu0 %v4497
  %v4499 = vand.u32 %v63, 4294901760
  %4500 = vmatpush.msra.mxu0 %v4499
  %v4501 = vand.u32 %v62, 4294901760
  %4502 = vmatpush.msra.mxu0 %v4501
  %v4503 = vand.u32 %v61, 4294901760
  %4504 = vmatpush.msra.mxu0 %v4503
  %v4505 = vand.u32 %v4347, 4294901760
  %v4506 = vsub.f32 %v4347, %v4505
  %v4507 = vand.u32 %v4506, 4294901760
  %4508 = vmatmul.f32.gmra.mxu0 %v4507
  %v4509 = vpop.f32.mrf.mxu0
  %v4510 = vadd.f32 %v4479, %v4509
  %4511 = vdwg.mxu0
  %4512 = vmatpush.msra.mxu0 0.0
  %4513 = vmatpush.msra.mxu0 0.0
  %4514 = vmatpush.msra.mxu0 0.0
  %4515 = vmatpush.msra.mxu0 0.0
  %4516 = vmatpush.msra.mxu0 0.0
  %4517 = vmatpush.msra.mxu0 0.0
  %4518 = vmatpush.msra.mxu0 0.0
  %4519 = vmatpush.msra.mxu0 0.0
  %v4520 = vand.u32 %v68, 4294901760
  %v4521 = vsub.f32 %v68, %v4520
  %v4522 = vand.u32 %v4521, 4294901760
  %4523 = vmatpush.msra.mxu0 %v4522
  %v4524 = vand.u32 %v67, 4294901760
  %v4525 = vsub.f32 %v67, %v4524
  %v4526 = vand.u32 %v4525, 4294901760
  %4527 = vmatpush.msra.mxu0 %v4526
  %v4528 = vand.u32 %v66, 4294901760
  %v4529 = vsub.f32 %v66, %v4528
  %v4530 = vand.u32 %v4529, 4294901760
  %4531 = vmatpush.msra.mxu0 %v4530
  %v4532 = vand.u32 %v65, 4294901760
  %v4533 = vsub.f32 %v65, %v4532
  %v4534 = vand.u32 %v4533, 4294901760
  %4535 = vmatpush.msra.mxu0 %v4534
  %v4536 = vand.u32 %v64, 4294901760
  %v4537 = vsub.f32 %v64, %v4536
  %v4538 = vand.u32 %v4537, 4294901760
  %4539 = vmatpush.msra.mxu0 %v4538
  %v4540 = vand.u32 %v63, 4294901760
  %v4541 = vsub.f32 %v63, %v4540
  %v4542 = vand.u32 %v4541, 4294901760
  %4543 = vmatpush.msra.mxu0 %v4542
  %v4544 = vand.u32 %v62, 4294901760
  %v4545 = vsub.f32 %v62, %v4544
  %v4546 = vand.u32 %v4545, 4294901760
  %4547 = vmatpush.msra.mxu0 %v4546
  %v4548 = vand.u32 %v61, 4294901760
  %v4549 = vsub.f32 %v61, %v4548
  %v4550 = vand.u32 %v4549, 4294901760
  %4551 = vmatpush.msra.mxu0 %v4550
  %v4552 = vand.u32 %v4347, 4294901760
  %4553 = vmatmul.f32.gmra.mxu0 %v4552
  %v4554 = vpop.f32.mrf.mxu0
  %v4555 = vadd.f32 %v4510, %v4554
  %4556 = vdwg.mxu0
  %4557 = vmatpush.msra.mxu0 0.0
  %4558 = vmatpush.msra.mxu0 0.0
  %4559 = vmatpush.msra.mxu0 0.0
  %4560 = vmatpush.msra.mxu0 0.0
  %4561 = vmatpush.msra.mxu0 0.0
  %4562 = vmatpush.msra.mxu0 0.0
  %4563 = vmatpush.msra.mxu0 0.0
  %4564 = vmatpush.msra.mxu0 0.0
  %v4565 = vand.u32 %v68, 4294901760
  %4566 = vmatpush.msra.mxu0 %v4565
  %v4567 = vand.u32 %v67, 4294901760
  %4568 = vmatpush.msra.mxu0 %v4567
  %v4569 = vand.u32 %v66, 4294901760
  %4570 = vmatpush.msra.mxu0 %v4569
  %v4571 = vand.u32 %v65, 4294901760
  %4572 = vmatpush.msra.mxu0 %v4571
  %v4573 = vand.u32 %v64, 4294901760
  %4574 = vmatpush.msra.mxu0 %v4573
  %v4575 = vand.u32 %v63, 4294901760
  %4576 = vmatpush.msra.mxu0 %v4575
  %v4577 = vand.u32 %v62, 4294901760
  %4578 = vmatpush.msra.mxu0 %v4577
  %v4579 = vand.u32 %v61, 4294901760
  %4580 = vmatpush.msra.mxu0 %v4579
  %v4581 = vand.u32 %v4347, 4294901760
  %4582 = vmatmul.f32.gmra.mxu0 %v4581
  %v4583 = vpop.f32.mrf.mxu0
  %v4584 = vadd.f32 %v4555, %v4583
  %4585 = vdwg.mxu0
  %v4587 = vsel %vm338, %v4104, 0
  %4589 = vmatpush.msra.mxu0 0.0
  %4590 = vmatpush.msra.mxu0 0.0
  %4591 = vmatpush.msra.mxu0 0.0
  %4592 = vmatpush.msra.mxu0 0.0
  %4593 = vmatpush.msra.mxu0 0.0
  %4594 = vmatpush.msra.mxu0 0.0
  %4595 = vmatpush.msra.mxu0 0.0
  %4596 = vmatpush.msra.mxu0 0.0
  %v4597 = vand.u32 %v86, 4294901760
  %4598 = vmatpush.msra.mxu0 %v4597
  %v4599 = vand.u32 %v85, 4294901760
  %4600 = vmatpush.msra.mxu0 %v4599
  %v4601 = vand.u32 %v84, 4294901760
  %4602 = vmatpush.msra.mxu0 %v4601
  %v4603 = vand.u32 %v83, 4294901760
  %4604 = vmatpush.msra.mxu0 %v4603
  %v4605 = vand.u32 %v82, 4294901760
  %4606 = vmatpush.msra.mxu0 %v4605
  %v4607 = vand.u32 %v81, 4294901760
  %4608 = vmatpush.msra.mxu0 %v4607
  %v4609 = vand.u32 %v80, 4294901760
  %4610 = vmatpush.msra.mxu0 %v4609
  %v4611 = vand.u32 %v79, 4294901760
  %4612 = vmatpush.msra.mxu0 %v4611
  %v4613 = vand.u32 %v4587, 4294901760
  %v4614 = vsub.f32 %v4587, %v4613
  %v4615 = vand.u32 %v4614, 4294901760
  %v4616 = vsub.f32 %v4614, %v4615
  %v4617 = vand.u32 %v4616, 4294901760
  %4618 = vmatmul.f32.gmra.mxu0 %v4617
  %v4619 = vpop.f32.mrf.mxu0
  %v4620 = vadd.f32 0.0, %v4619
  %4621 = vdwg.mxu0
  %4622 = vmatpush.msra.mxu0 0.0
  %4623 = vmatpush.msra.mxu0 0.0
  %4624 = vmatpush.msra.mxu0 0.0
  %4625 = vmatpush.msra.mxu0 0.0
  %4626 = vmatpush.msra.mxu0 0.0
  %4627 = vmatpush.msra.mxu0 0.0
  %4628 = vmatpush.msra.mxu0 0.0
  %4629 = vmatpush.msra.mxu0 0.0
  %v4630 = vand.u32 %v86, 4294901760
  %v4631 = vsub.f32 %v86, %v4630
  %v4632 = vand.u32 %v4631, 4294901760
  %v4633 = vsub.f32 %v4631, %v4632
  %v4634 = vand.u32 %v4633, 4294901760
  %4635 = vmatpush.msra.mxu0 %v4634
  %v4636 = vand.u32 %v85, 4294901760
  %v4637 = vsub.f32 %v85, %v4636
  %v4638 = vand.u32 %v4637, 4294901760
  %v4639 = vsub.f32 %v4637, %v4638
  %v4640 = vand.u32 %v4639, 4294901760
  %4641 = vmatpush.msra.mxu0 %v4640
  %v4642 = vand.u32 %v84, 4294901760
  %v4643 = vsub.f32 %v84, %v4642
  %v4644 = vand.u32 %v4643, 4294901760
  %v4645 = vsub.f32 %v4643, %v4644
  %v4646 = vand.u32 %v4645, 4294901760
  %4647 = vmatpush.msra.mxu0 %v4646
  %v4648 = vand.u32 %v83, 4294901760
  %v4649 = vsub.f32 %v83, %v4648
  %v4650 = vand.u32 %v4649, 4294901760
  %v4651 = vsub.f32 %v4649, %v4650
  %v4652 = vand.u32 %v4651, 4294901760
  %4653 = vmatpush.msra.mxu0 %v4652
  %v4654 = vand.u32 %v82, 4294901760
  %v4655 = vsub.f32 %v82, %v4654
  %v4656 = vand.u32 %v4655, 4294901760
  %v4657 = vsub.f32 %v4655, %v4656
  %v4658 = vand.u32 %v4657, 4294901760
  %4659 = vmatpush.msra.mxu0 %v4658
  %v4660 = vand.u32 %v81, 4294901760
  %v4661 = vsub.f32 %v81, %v4660
  %v4662 = vand.u32 %v4661, 4294901760
  %v4663 = vsub.f32 %v4661, %v4662
  %v4664 = vand.u32 %v4663, 4294901760
  %4665 = vmatpush.msra.mxu0 %v4664
  %v4666 = vand.u32 %v80, 4294901760
  %v4667 = vsub.f32 %v80, %v4666
  %v4668 = vand.u32 %v4667, 4294901760
  %v4669 = vsub.f32 %v4667, %v4668
  %v4670 = vand.u32 %v4669, 4294901760
  %4671 = vmatpush.msra.mxu0 %v4670
  %v4672 = vand.u32 %v79, 4294901760
  %v4673 = vsub.f32 %v79, %v4672
  %v4674 = vand.u32 %v4673, 4294901760
  %v4675 = vsub.f32 %v4673, %v4674
  %v4676 = vand.u32 %v4675, 4294901760
  %4677 = vmatpush.msra.mxu0 %v4676
  %v4678 = vand.u32 %v4587, 4294901760
  %4679 = vmatmul.f32.gmra.mxu0 %v4678
  %v4680 = vpop.f32.mrf.mxu0
  %v4681 = vadd.f32 %v4620, %v4680
  %4682 = vdwg.mxu0
  %4683 = vmatpush.msra.mxu0 0.0
  %4684 = vmatpush.msra.mxu0 0.0
  %4685 = vmatpush.msra.mxu0 0.0
  %4686 = vmatpush.msra.mxu0 0.0
  %4687 = vmatpush.msra.mxu0 0.0
  %4688 = vmatpush.msra.mxu0 0.0
  %4689 = vmatpush.msra.mxu0 0.0
  %4690 = vmatpush.msra.mxu0 0.0
  %v4691 = vand.u32 %v86, 4294901760
  %v4692 = vsub.f32 %v86, %v4691
  %4693 = vmatpush.msra.mxu0 %v4692
  %v4694 = vand.u32 %v85, 4294901760
  %v4695 = vsub.f32 %v85, %v4694
  %4696 = vmatpush.msra.mxu0 %v4695
  %v4697 = vand.u32 %v84, 4294901760
  %v4698 = vsub.f32 %v84, %v4697
  %4699 = vmatpush.msra.mxu0 %v4698
  %v4700 = vand.u32 %v83, 4294901760
  %v4701 = vsub.f32 %v83, %v4700
  %4702 = vmatpush.msra.mxu0 %v4701
  %v4703 = vand.u32 %v82, 4294901760
  %v4704 = vsub.f32 %v82, %v4703
  %4705 = vmatpush.msra.mxu0 %v4704
  %v4706 = vand.u32 %v81, 4294901760
  %v4707 = vsub.f32 %v81, %v4706
  %4708 = vmatpush.msra.mxu0 %v4707
  %v4709 = vand.u32 %v80, 4294901760
  %v4710 = vsub.f32 %v80, %v4709
  %4711 = vmatpush.msra.mxu0 %v4710
  %v4712 = vand.u32 %v79, 4294901760
  %v4713 = vsub.f32 %v79, %v4712
  %4714 = vmatpush.msra.mxu0 %v4713
  %v4715 = vand.u32 %v4587, 4294901760
  %v4716 = vsub.f32 %v4587, %v4715
  %4717 = vmatmul.f32.gmra.mxu0 %v4716
  %v4718 = vpop.f32.mrf.mxu0
  %v4719 = vadd.f32 %v4681, %v4718
  %4720 = vdwg.mxu0
  %4721 = vmatpush.msra.mxu0 0.0
  %4722 = vmatpush.msra.mxu0 0.0
  %4723 = vmatpush.msra.mxu0 0.0
  %4724 = vmatpush.msra.mxu0 0.0
  %4725 = vmatpush.msra.mxu0 0.0
  %4726 = vmatpush.msra.mxu0 0.0
  %4727 = vmatpush.msra.mxu0 0.0
  %4728 = vmatpush.msra.mxu0 0.0
  %v4729 = vand.u32 %v86, 4294901760
  %4730 = vmatpush.msra.mxu0 %v4729
  %v4731 = vand.u32 %v85, 4294901760
  %4732 = vmatpush.msra.mxu0 %v4731
  %v4733 = vand.u32 %v84, 4294901760
  %4734 = vmatpush.msra.mxu0 %v4733
  %v4735 = vand.u32 %v83, 4294901760
  %4736 = vmatpush.msra.mxu0 %v4735
  %v4737 = vand.u32 %v82, 4294901760
  %4738 = vmatpush.msra.mxu0 %v4737
  %v4739 = vand.u32 %v81, 4294901760
  %4740 = vmatpush.msra.mxu0 %v4739
  %v4741 = vand.u32 %v80, 4294901760
  %4742 = vmatpush.msra.mxu0 %v4741
  %v4743 = vand.u32 %v79, 4294901760
  %4744 = vmatpush.msra.mxu0 %v4743
  %v4745 = vand.u32 %v4587, 4294901760
  %v4746 = vsub.f32 %v4587, %v4745
  %v4747 = vand.u32 %v4746, 4294901760
  %4748 = vmatmul.f32.gmra.mxu0 %v4747
  %v4749 = vpop.f32.mrf.mxu0
  %v4750 = vadd.f32 %v4719, %v4749
  %4751 = vdwg.mxu0
  %4752 = vmatpush.msra.mxu0 0.0
  %4753 = vmatpush.msra.mxu0 0.0
  %4754 = vmatpush.msra.mxu0 0.0
  %4755 = vmatpush.msra.mxu0 0.0
  %4756 = vmatpush.msra.mxu0 0.0
  %4757 = vmatpush.msra.mxu0 0.0
  %4758 = vmatpush.msra.mxu0 0.0
  %4759 = vmatpush.msra.mxu0 0.0
  %v4760 = vand.u32 %v86, 4294901760
  %v4761 = vsub.f32 %v86, %v4760
  %v4762 = vand.u32 %v4761, 4294901760
  %4763 = vmatpush.msra.mxu0 %v4762
  %v4764 = vand.u32 %v85, 4294901760
  %v4765 = vsub.f32 %v85, %v4764
  %v4766 = vand.u32 %v4765, 4294901760
  %4767 = vmatpush.msra.mxu0 %v4766
  %v4768 = vand.u32 %v84, 4294901760
  %v4769 = vsub.f32 %v84, %v4768
  %v4770 = vand.u32 %v4769, 4294901760
  %4771 = vmatpush.msra.mxu0 %v4770
  %v4772 = vand.u32 %v83, 4294901760
  %v4773 = vsub.f32 %v83, %v4772
  %v4774 = vand.u32 %v4773, 4294901760
  %4775 = vmatpush.msra.mxu0 %v4774
  %v4776 = vand.u32 %v82, 4294901760
  %v4777 = vsub.f32 %v82, %v4776
  %v4778 = vand.u32 %v4777, 4294901760
  %4779 = vmatpush.msra.mxu0 %v4778
  %v4780 = vand.u32 %v81, 4294901760
  %v4781 = vsub.f32 %v81, %v4780
  %v4782 = vand.u32 %v4781, 4294901760
  %4783 = vmatpush.msra.mxu0 %v4782
  %v4784 = vand.u32 %v80, 4294901760
  %v4785 = vsub.f32 %v80, %v4784
  %v4786 = vand.u32 %v4785, 4294901760
  %4787 = vmatpush.msra.mxu0 %v4786
  %v4788 = vand.u32 %v79, 4294901760
  %v4789 = vsub.f32 %v79, %v4788
  %v4790 = vand.u32 %v4789, 4294901760
  %4791 = vmatpush.msra.mxu0 %v4790
  %v4792 = vand.u32 %v4587, 4294901760
  %4793 = vmatmul.f32.gmra.mxu0 %v4792
  %v4794 = vpop.f32.mrf.mxu0
  %v4795 = vadd.f32 %v4750, %v4794
  %4796 = vdwg.mxu0
  %4797 = vmatpush.msra.mxu0 0.0
  %4798 = vmatpush.msra.mxu0 0.0
  %4799 = vmatpush.msra.mxu0 0.0
  %4800 = vmatpush.msra.mxu0 0.0
  %4801 = vmatpush.msra.mxu0 0.0
  %4802 = vmatpush.msra.mxu0 0.0
  %4803 = vmatpush.msra.mxu0 0.0
  %4804 = vmatpush.msra.mxu0 0.0
  %v4805 = vand.u32 %v86, 4294901760
  %4806 = vmatpush.msra.mxu0 %v4805
  %v4807 = vand.u32 %v85, 4294901760
  %4808 = vmatpush.msra.mxu0 %v4807
  %v4809 = vand.u32 %v84, 4294901760
  %4810 = vmatpush.msra.mxu0 %v4809
  %v4811 = vand.u32 %v83, 4294901760
  %4812 = vmatpush.msra.mxu0 %v4811
  %v4813 = vand.u32 %v82, 4294901760
  %4814 = vmatpush.msra.mxu0 %v4813
  %v4815 = vand.u32 %v81, 4294901760
  %4816 = vmatpush.msra.mxu0 %v4815
  %v4817 = vand.u32 %v80, 4294901760
  %4818 = vmatpush.msra.mxu0 %v4817
  %v4819 = vand.u32 %v79, 4294901760
  %4820 = vmatpush.msra.mxu0 %v4819
  %v4821 = vand.u32 %v4587, 4294901760
  %4822 = vmatmul.f32.gmra.mxu0 %v4821
  %v4823 = vpop.f32.mrf.mxu0
  %v4824 = vadd.f32 %v4795, %v4823
  %4825 = vdwg.mxu0
  %v4826 = vadd.f32 %v4584, %v4824
  %v4828 = vsel %vm2281, %v4826, 0
  %4830 = vmatpush.msra.mxu0 0.0
  %4831 = vmatpush.msra.mxu0 0.0
  %4832 = vmatpush.msra.mxu0 0.0
  %4833 = vmatpush.msra.mxu0 0.0
  %4834 = vmatpush.msra.mxu0 0.0
  %4835 = vmatpush.msra.mxu0 0.0
  %4836 = vmatpush.msra.mxu0 0.0
  %4837 = vmatpush.msra.mxu0 0.0
  %4838 = vmatpush.msra.mxu0 0.0
  %4839 = vmatpush.msra.mxu0 0.0
  %4840 = vmatpush.msra.mxu0 0.0
  %4841 = vmatpush.msra.mxu0 0.0
  %v4842 = vand.u32 %v103, 4294901760
  %4843 = vmatpush.msra.mxu0 %v4842
  %v4844 = vand.u32 %v102, 4294901760
  %4845 = vmatpush.msra.mxu0 %v4844
  %v4846 = vand.u32 %v101, 4294901760
  %4847 = vmatpush.msra.mxu0 %v4846
  %v4848 = vand.u32 %v100, 4294901760
  %4849 = vmatpush.msra.mxu0 %v4848
  %v4850 = vand.u32 %v4828, 4294901760
  %v4851 = vsub.f32 %v4828, %v4850
  %v4852 = vand.u32 %v4851, 4294901760
  %v4853 = vsub.f32 %v4851, %v4852
  %v4854 = vand.u32 %v4853, 4294901760
  %4855 = vmatmul.f32.gmra.mxu0 %v4854
  %v4856 = vpop.f32.mrf.mxu0
  %v4857 = vadd.f32 0.0, %v4856
  %4858 = vdwg.mxu0
  %4859 = vmatpush.msra.mxu0 0.0
  %4860 = vmatpush.msra.mxu0 0.0
  %4861 = vmatpush.msra.mxu0 0.0
  %4862 = vmatpush.msra.mxu0 0.0
  %4863 = vmatpush.msra.mxu0 0.0
  %4864 = vmatpush.msra.mxu0 0.0
  %4865 = vmatpush.msra.mxu0 0.0
  %4866 = vmatpush.msra.mxu0 0.0
  %4867 = vmatpush.msra.mxu0 0.0
  %4868 = vmatpush.msra.mxu0 0.0
  %4869 = vmatpush.msra.mxu0 0.0
  %4870 = vmatpush.msra.mxu0 0.0
  %v4871 = vand.u32 %v103, 4294901760
  %v4872 = vsub.f32 %v103, %v4871
  %v4873 = vand.u32 %v4872, 4294901760
  %v4874 = vsub.f32 %v4872, %v4873
  %v4875 = vand.u32 %v4874, 4294901760
  %4876 = vmatpush.msra.mxu0 %v4875
  %v4877 = vand.u32 %v102, 4294901760
  %v4878 = vsub.f32 %v102, %v4877
  %v4879 = vand.u32 %v4878, 4294901760
  %v4880 = vsub.f32 %v4878, %v4879
  %v4881 = vand.u32 %v4880, 4294901760
  %4882 = vmatpush.msra.mxu0 %v4881
  %v4883 = vand.u32 %v101, 4294901760
  %v4884 = vsub.f32 %v101, %v4883
  %v4885 = vand.u32 %v4884, 4294901760
  %v4886 = vsub.f32 %v4884, %v4885
  %v4887 = vand.u32 %v4886, 4294901760
  %4888 = vmatpush.msra.mxu0 %v4887
  %v4889 = vand.u32 %v100, 4294901760
  %v4890 = vsub.f32 %v100, %v4889
  %v4891 = vand.u32 %v4890, 4294901760
  %v4892 = vsub.f32 %v4890, %v4891
  %v4893 = vand.u32 %v4892, 4294901760
  %4894 = vmatpush.msra.mxu0 %v4893
  %v4895 = vand.u32 %v4828, 4294901760
  %4896 = vmatmul.f32.gmra.mxu0 %v4895
  %v4897 = vpop.f32.mrf.mxu0
  %v4898 = vadd.f32 %v4857, %v4897
  %4899 = vdwg.mxu0
  %4900 = vmatpush.msra.mxu0 0.0
  %4901 = vmatpush.msra.mxu0 0.0
  %4902 = vmatpush.msra.mxu0 0.0
  %4903 = vmatpush.msra.mxu0 0.0
  %4904 = vmatpush.msra.mxu0 0.0
  %4905 = vmatpush.msra.mxu0 0.0
  %4906 = vmatpush.msra.mxu0 0.0
  %4907 = vmatpush.msra.mxu0 0.0
  %4908 = vmatpush.msra.mxu0 0.0
  %4909 = vmatpush.msra.mxu0 0.0
  %4910 = vmatpush.msra.mxu0 0.0
  %4911 = vmatpush.msra.mxu0 0.0
  %v4912 = vand.u32 %v103, 4294901760
  %v4913 = vsub.f32 %v103, %v4912
  %4914 = vmatpush.msra.mxu0 %v4913
  %v4915 = vand.u32 %v102, 4294901760
  %v4916 = vsub.f32 %v102, %v4915
  %4917 = vmatpush.msra.mxu0 %v4916
  %v4918 = vand.u32 %v101, 4294901760
  %v4919 = vsub.f32 %v101, %v4918
  %4920 = vmatpush.msra.mxu0 %v4919
  %v4921 = vand.u32 %v100, 4294901760
  %v4922 = vsub.f32 %v100, %v4921
  %4923 = vmatpush.msra.mxu0 %v4922
  %v4924 = vand.u32 %v4828, 4294901760
  %v4925 = vsub.f32 %v4828, %v4924
  %4926 = vmatmul.f32.gmra.mxu0 %v4925
  %v4927 = vpop.f32.mrf.mxu0
  %v4928 = vadd.f32 %v4898, %v4927
  %4929 = vdwg.mxu0
  %4930 = vmatpush.msra.mxu0 0.0
  %4931 = vmatpush.msra.mxu0 0.0
  %4932 = vmatpush.msra.mxu0 0.0
  %4933 = vmatpush.msra.mxu0 0.0
  %4934 = vmatpush.msra.mxu0 0.0
  %4935 = vmatpush.msra.mxu0 0.0
  %4936 = vmatpush.msra.mxu0 0.0
  %4937 = vmatpush.msra.mxu0 0.0
  %4938 = vmatpush.msra.mxu0 0.0
  %4939 = vmatpush.msra.mxu0 0.0
  %4940 = vmatpush.msra.mxu0 0.0
  %4941 = vmatpush.msra.mxu0 0.0
  %v4942 = vand.u32 %v103, 4294901760
  %4943 = vmatpush.msra.mxu0 %v4942
  %v4944 = vand.u32 %v102, 4294901760
  %4945 = vmatpush.msra.mxu0 %v4944
  %v4946 = vand.u32 %v101, 4294901760
  %4947 = vmatpush.msra.mxu0 %v4946
  %v4948 = vand.u32 %v100, 4294901760
  %4949 = vmatpush.msra.mxu0 %v4948
  %v4950 = vand.u32 %v4828, 4294901760
  %v4951 = vsub.f32 %v4828, %v4950
  %v4952 = vand.u32 %v4951, 4294901760
  %4953 = vmatmul.f32.gmra.mxu0 %v4952
  %v4954 = vpop.f32.mrf.mxu0
  %v4955 = vadd.f32 %v4928, %v4954
  %4956 = vdwg.mxu0
  %4957 = vmatpush.msra.mxu0 0.0
  %4958 = vmatpush.msra.mxu0 0.0
  %4959 = vmatpush.msra.mxu0 0.0
  %4960 = vmatpush.msra.mxu0 0.0
  %4961 = vmatpush.msra.mxu0 0.0
  %4962 = vmatpush.msra.mxu0 0.0
  %4963 = vmatpush.msra.mxu0 0.0
  %4964 = vmatpush.msra.mxu0 0.0
  %4965 = vmatpush.msra.mxu0 0.0
  %4966 = vmatpush.msra.mxu0 0.0
  %4967 = vmatpush.msra.mxu0 0.0
  %4968 = vmatpush.msra.mxu0 0.0
  %v4969 = vand.u32 %v103, 4294901760
  %v4970 = vsub.f32 %v103, %v4969
  %v4971 = vand.u32 %v4970, 4294901760
  %4972 = vmatpush.msra.mxu0 %v4971
  %v4973 = vand.u32 %v102, 4294901760
  %v4974 = vsub.f32 %v102, %v4973
  %v4975 = vand.u32 %v4974, 4294901760
  %4976 = vmatpush.msra.mxu0 %v4975
  %v4977 = vand.u32 %v101, 4294901760
  %v4978 = vsub.f32 %v101, %v4977
  %v4979 = vand.u32 %v4978, 4294901760
  %4980 = vmatpush.msra.mxu0 %v4979
  %v4981 = vand.u32 %v100, 4294901760
  %v4982 = vsub.f32 %v100, %v4981
  %v4983 = vand.u32 %v4982, 4294901760
  %4984 = vmatpush.msra.mxu0 %v4983
  %v4985 = vand.u32 %v4828, 4294901760
  %4986 = vmatmul.f32.gmra.mxu0 %v4985
  %v4987 = vpop.f32.mrf.mxu0
  %v4988 = vadd.f32 %v4955, %v4987
  %4989 = vdwg.mxu0
  %4990 = vmatpush.msra.mxu0 0.0
  %4991 = vmatpush.msra.mxu0 0.0
  %4992 = vmatpush.msra.mxu0 0.0
  %4993 = vmatpush.msra.mxu0 0.0
  %4994 = vmatpush.msra.mxu0 0.0
  %4995 = vmatpush.msra.mxu0 0.0
  %4996 = vmatpush.msra.mxu0 0.0
  %4997 = vmatpush.msra.mxu0 0.0
  %4998 = vmatpush.msra.mxu0 0.0
  %4999 = vmatpush.msra.mxu0 0.0
  %5000 = vmatpush.msra.mxu0 0.0
  %5001 = vmatpush.msra.mxu0 0.0
  %v5002 = vand.u32 %v103, 4294901760
  %5003 = vmatpush.msra.mxu0 %v5002
  %v5004 = vand.u32 %v102, 4294901760
  %5005 = vmatpush.msra.mxu0 %v5004
  %v5006 = vand.u32 %v101, 4294901760
  %5007 = vmatpush.msra.mxu0 %v5006
  %v5008 = vand.u32 %v100, 4294901760
  %5009 = vmatpush.msra.mxu0 %v5008
  %v5010 = vand.u32 %v4828, 4294901760
  %5011 = vmatmul.f32.gmra.mxu0 %v5010
  %v5012 = vpop.f32.mrf.mxu0
  %v5013 = vadd.f32 %v4988, %v5012
  %5014 = vdwg.mxu0
  %v5016 = vsel %vm2281, %v3608, 0
  %5018 = vmatpush.msra.mxu0 0.0
  %5019 = vmatpush.msra.mxu0 0.0
  %5020 = vmatpush.msra.mxu0 0.0
  %5021 = vmatpush.msra.mxu0 0.0
  %5022 = vmatpush.msra.mxu0 0.0
  %5023 = vmatpush.msra.mxu0 0.0
  %5024 = vmatpush.msra.mxu0 0.0
  %5025 = vmatpush.msra.mxu0 0.0
  %5026 = vmatpush.msra.mxu0 0.0
  %5027 = vmatpush.msra.mxu0 0.0
  %5028 = vmatpush.msra.mxu0 0.0
  %5029 = vmatpush.msra.mxu0 0.0
  %v5030 = vand.u32 %v99, 4294901760
  %5031 = vmatpush.msra.mxu0 %v5030
  %v5032 = vand.u32 %v98, 4294901760
  %5033 = vmatpush.msra.mxu0 %v5032
  %v5034 = vand.u32 %v97, 4294901760
  %5035 = vmatpush.msra.mxu0 %v5034
  %v5036 = vand.u32 %v96, 4294901760
  %5037 = vmatpush.msra.mxu0 %v5036
  %v5038 = vand.u32 %v5016, 4294901760
  %v5039 = vsub.f32 %v5016, %v5038
  %v5040 = vand.u32 %v5039, 4294901760
  %v5041 = vsub.f32 %v5039, %v5040
  %v5042 = vand.u32 %v5041, 4294901760
  %5043 = vmatmul.f32.gmra.mxu0 %v5042
  %v5044 = vpop.f32.mrf.mxu0
  %v5045 = vadd.f32 %v5013, %v5044
  %5046 = vdwg.mxu0
  %5047 = vmatpush.msra.mxu0 0.0
  %5048 = vmatpush.msra.mxu0 0.0
  %5049 = vmatpush.msra.mxu0 0.0
  %5050 = vmatpush.msra.mxu0 0.0
  %5051 = vmatpush.msra.mxu0 0.0
  %5052 = vmatpush.msra.mxu0 0.0
  %5053 = vmatpush.msra.mxu0 0.0
  %5054 = vmatpush.msra.mxu0 0.0
  %5055 = vmatpush.msra.mxu0 0.0
  %5056 = vmatpush.msra.mxu0 0.0
  %5057 = vmatpush.msra.mxu0 0.0
  %5058 = vmatpush.msra.mxu0 0.0
  %v5059 = vand.u32 %v99, 4294901760
  %v5060 = vsub.f32 %v99, %v5059
  %v5061 = vand.u32 %v5060, 4294901760
  %v5062 = vsub.f32 %v5060, %v5061
  %v5063 = vand.u32 %v5062, 4294901760
  %5064 = vmatpush.msra.mxu0 %v5063
  %v5065 = vand.u32 %v98, 4294901760
  %v5066 = vsub.f32 %v98, %v5065
  %v5067 = vand.u32 %v5066, 4294901760
  %v5068 = vsub.f32 %v5066, %v5067
  %v5069 = vand.u32 %v5068, 4294901760
  %5070 = vmatpush.msra.mxu0 %v5069
  %v5071 = vand.u32 %v97, 4294901760
  %v5072 = vsub.f32 %v97, %v5071
  %v5073 = vand.u32 %v5072, 4294901760
  %v5074 = vsub.f32 %v5072, %v5073
  %v5075 = vand.u32 %v5074, 4294901760
  %5076 = vmatpush.msra.mxu0 %v5075
  %v5077 = vand.u32 %v96, 4294901760
  %v5078 = vsub.f32 %v96, %v5077
  %v5079 = vand.u32 %v5078, 4294901760
  %v5080 = vsub.f32 %v5078, %v5079
  %v5081 = vand.u32 %v5080, 4294901760
  %5082 = vmatpush.msra.mxu0 %v5081
  %v5083 = vand.u32 %v5016, 4294901760
  %5084 = vmatmul.f32.gmra.mxu0 %v5083
  %v5085 = vpop.f32.mrf.mxu0
  %v5086 = vadd.f32 %v5045, %v5085
  %5087 = vdwg.mxu0
  %5088 = vmatpush.msra.mxu0 0.0
  %5089 = vmatpush.msra.mxu0 0.0
  %5090 = vmatpush.msra.mxu0 0.0
  %5091 = vmatpush.msra.mxu0 0.0
  %5092 = vmatpush.msra.mxu0 0.0
  %5093 = vmatpush.msra.mxu0 0.0
  %5094 = vmatpush.msra.mxu0 0.0
  %5095 = vmatpush.msra.mxu0 0.0
  %5096 = vmatpush.msra.mxu0 0.0
  %5097 = vmatpush.msra.mxu0 0.0
  %5098 = vmatpush.msra.mxu0 0.0
  %5099 = vmatpush.msra.mxu0 0.0
  %v5100 = vand.u32 %v99, 4294901760
  %v5101 = vsub.f32 %v99, %v5100
  %5102 = vmatpush.msra.mxu0 %v5101
  %v5103 = vand.u32 %v98, 4294901760
  %v5104 = vsub.f32 %v98, %v5103
  %5105 = vmatpush.msra.mxu0 %v5104
  %v5106 = vand.u32 %v97, 4294901760
  %v5107 = vsub.f32 %v97, %v5106
  %5108 = vmatpush.msra.mxu0 %v5107
  %v5109 = vand.u32 %v96, 4294901760
  %v5110 = vsub.f32 %v96, %v5109
  %5111 = vmatpush.msra.mxu0 %v5110
  %v5112 = vand.u32 %v5016, 4294901760
  %v5113 = vsub.f32 %v5016, %v5112
  %5114 = vmatmul.f32.gmra.mxu0 %v5113
  %v5115 = vpop.f32.mrf.mxu0
  %v5116 = vadd.f32 %v5086, %v5115
  %5117 = vdwg.mxu0
  %5118 = vmatpush.msra.mxu0 0.0
  %5119 = vmatpush.msra.mxu0 0.0
  %5120 = vmatpush.msra.mxu0 0.0
  %5121 = vmatpush.msra.mxu0 0.0
  %5122 = vmatpush.msra.mxu0 0.0
  %5123 = vmatpush.msra.mxu0 0.0
  %5124 = vmatpush.msra.mxu0 0.0
  %5125 = vmatpush.msra.mxu0 0.0
  %5126 = vmatpush.msra.mxu0 0.0
  %5127 = vmatpush.msra.mxu0 0.0
  %5128 = vmatpush.msra.mxu0 0.0
  %5129 = vmatpush.msra.mxu0 0.0
  %v5130 = vand.u32 %v99, 4294901760
  %5131 = vmatpush.msra.mxu0 %v5130
  %v5132 = vand.u32 %v98, 4294901760
  %5133 = vmatpush.msra.mxu0 %v5132
  %v5134 = vand.u32 %v97, 4294901760
  %5135 = vmatpush.msra.mxu0 %v5134
  %v5136 = vand.u32 %v96, 4294901760
  %5137 = vmatpush.msra.mxu0 %v5136
  %v5138 = vand.u32 %v5016, 4294901760
  %v5139 = vsub.f32 %v5016, %v5138
  %v5140 = vand.u32 %v5139, 4294901760
  %5141 = vmatmul.f32.gmra.mxu0 %v5140
  %v5142 = vpop.f32.mrf.mxu0
  %v5143 = vadd.f32 %v5116, %v5142
  %5144 = vdwg.mxu0
  %5145 = vmatpush.msra.mxu0 0.0
  %5146 = vmatpush.msra.mxu0 0.0
  %5147 = vmatpush.msra.mxu0 0.0
  %5148 = vmatpush.msra.mxu0 0.0
  %5149 = vmatpush.msra.mxu0 0.0
  %5150 = vmatpush.msra.mxu0 0.0
  %5151 = vmatpush.msra.mxu0 0.0
  %5152 = vmatpush.msra.mxu0 0.0
  %5153 = vmatpush.msra.mxu0 0.0
  %5154 = vmatpush.msra.mxu0 0.0
  %5155 = vmatpush.msra.mxu0 0.0
  %5156 = vmatpush.msra.mxu0 0.0
  %v5157 = vand.u32 %v99, 4294901760
  %v5158 = vsub.f32 %v99, %v5157
  %v5159 = vand.u32 %v5158, 4294901760
  %5160 = vmatpush.msra.mxu0 %v5159
  %v5161 = vand.u32 %v98, 4294901760
  %v5162 = vsub.f32 %v98, %v5161
  %v5163 = vand.u32 %v5162, 4294901760
  %5164 = vmatpush.msra.mxu0 %v5163
  %v5165 = vand.u32 %v97, 4294901760
  %v5166 = vsub.f32 %v97, %v5165
  %v5167 = vand.u32 %v5166, 4294901760
  %5168 = vmatpush.msra.mxu0 %v5167
  %v5169 = vand.u32 %v96, 4294901760
  %v5170 = vsub.f32 %v96, %v5169
  %v5171 = vand.u32 %v5170, 4294901760
  %5172 = vmatpush.msra.mxu0 %v5171
  %v5173 = vand.u32 %v5016, 4294901760
  %5174 = vmatmul.f32.gmra.mxu0 %v5173
  %v5175 = vpop.f32.mrf.mxu0
  %v5176 = vadd.f32 %v5143, %v5175
  %5177 = vdwg.mxu0
  %5178 = vmatpush.msra.mxu0 0.0
  %5179 = vmatpush.msra.mxu0 0.0
  %5180 = vmatpush.msra.mxu0 0.0
  %5181 = vmatpush.msra.mxu0 0.0
  %5182 = vmatpush.msra.mxu0 0.0
  %5183 = vmatpush.msra.mxu0 0.0
  %5184 = vmatpush.msra.mxu0 0.0
  %5185 = vmatpush.msra.mxu0 0.0
  %5186 = vmatpush.msra.mxu0 0.0
  %5187 = vmatpush.msra.mxu0 0.0
  %5188 = vmatpush.msra.mxu0 0.0
  %5189 = vmatpush.msra.mxu0 0.0
  %v5190 = vand.u32 %v99, 4294901760
  %5191 = vmatpush.msra.mxu0 %v5190
  %v5192 = vand.u32 %v98, 4294901760
  %5193 = vmatpush.msra.mxu0 %v5192
  %v5194 = vand.u32 %v97, 4294901760
  %5195 = vmatpush.msra.mxu0 %v5194
  %v5196 = vand.u32 %v96, 4294901760
  %5197 = vmatpush.msra.mxu0 %v5196
  %v5198 = vand.u32 %v5016, 4294901760
  %5199 = vmatmul.f32.gmra.mxu0 %v5198
  %v5200 = vpop.f32.mrf.mxu0
  %v5201 = vadd.f32 %v5176, %v5200
  %5202 = vdwg.mxu0
  %v5203 = vadd.f32 %v5201, %v2659
  %v5204 = vmax.f32 %v5203, 0.0
  %s5205 = scalar_lea.vmem %s9, 8
  %5206 = vst.msk [vmem:[%s5205] sm:$0xff] %vm338, %v5204
  // Predicated region
  $region38: #{shuffle_unit_v2_s2.1} parent=0 // pred_check
    _
  $region39: #{shuffle_unit_v2_s2.1} parent=0 // pred_check_branch
    %5208 = sbr.rel (0) target = $region41
  $region40: #{shuffle_unit_v2_s2.1} parent=0 // pred_region
    _
  $region41: #{shuffle_unit_v2_s2.1} parent=0 // pred_fallthru
    _
  // Predicated region
  $region42: #{shuffle_unit_v2_s2.1} parent=0 // pred_check
    _
  $region43: #{shuffle_unit_v2_s2.1} parent=0 // pred_check_branch
    %5210 = sbr.rel (0) target = $region45
  $region44: #{shuffle_unit_v2_s2.1} parent=0 // pred_region
    _
  $region45: #{shuffle_unit_v2_s2.1} parent=0 // pred_fallthru
    _

</llo_original>
